<compile_context>
chip_gen: v6e
topology: v6e:2x2x1
jax: 0.10.0
libtpu: 0.0.40
codegen_flags: <defaults>
</compile_context>

<pallas_src>
import jax
import jax.numpy as jnp
from jax.experimental import pallas as pl
from jax.experimental.pallas import tpu as pltpu

# ---- problem sizes (small, consistent with a ray-bundle forward pass) -------
N_RAYS = 64          # rays in the bundle
N_PTS = 8            # samples per ray (sampler)
HID = 128            # MLP hidden width
L_XYZ = 6            # harmonic frequencies for points
L_DIR = 4            # harmonic frequencies for directions
D_XYZ = 3 * (2 * L_XYZ + 1)   # 39
D_DIR = 3 * (2 * L_DIR + 1)   # 27
NEAR, FAR = 1.0, 3.0
DELTA = (FAR - NEAR) / (N_PTS - 1)


def _default_tile_rays():
    """One big tile on v5e/v6e (grid=1); two parallel tiles on v7x (2 TCs)."""
    try:
        kind = jax.devices()[0].device_kind.lower()
    except Exception:
        return N_RAYS
    if "v7" in kind or "7x" in kind:
        return max(8, N_RAYS // 2)
    return N_RAYS


TILE_RAYS = _default_tile_rays()       # 64 (v5e/v6e) or 32 (v7x)
ROWS = TILE_RAYS * N_PTS               # rows per kernel invocation


# ----------------------------- glue: embedding --------------------------------
def harmonic_embedding(x, n_freqs):
    freqs = 2.0 ** jnp.arange(n_freqs, dtype=x.dtype)
    xf = (x[..., None, :] * freqs[:, None]).reshape(*x.shape[:-1], -1)
    return jnp.concatenate([jnp.sin(xf), jnp.cos(xf), x], axis=-1)


def _softplus(x):
    # overflow-safe softplus (guards exp for large trained params)
    return jnp.where(x > 20.0, x, jnp.log1p(jnp.exp(jnp.minimum(x, 20.0))))


def _sigmoid(x):
    return 1.0 / (1.0 + jnp.exp(-x))


# ------------------------------- Pallas kernel --------------------------------
def nerf_render_kernel(xe_ref, de_ref, w1_ref, b12_ref, w2_ref,
                       wbig_ref, bbig_ref, wc3_ref, bc3_ref, out_ref):
    f32 = jnp.float32
    bf16 = jnp.bfloat16

    xe = xe_ref[...]                      # (ROWS, D_XYZ)  point embeddings
    de = de_ref[...]                      # (ROWS, D_DIR)  direction embeddings
    b12 = b12_ref[...]                    # (2, HID) packed biases
    b1 = b12[0:1, :]
    b2 = b12[1:2, :]

    # ---- implicit MLP: bf16 multiplies on the MXU, f32 accumulate/elementwise ----
    h = jnp.dot(xe.astype(bf16), w1_ref[...], preferred_element_type=f32) + b1
    h = jnp.maximum(h, 0.0)
    h = jnp.dot(h.astype(bf16), w2_ref[...], preferred_element_type=f32) + b2
    h = jnp.maximum(h, 0.0)

    # fused heads matmul: [h ; de] @ [[wc1, ws], [wc2, 0]] -> (ROWS, HID+1)
    hd = jnp.concatenate([h, de], axis=-1).astype(bf16)                  # (ROWS, HID+D_DIR)
    heads = jnp.dot(hd, wbig_ref[...], preferred_element_type=f32) + bbig_ref[...]
    ch = jnp.maximum(heads[:, :HID], 0.0)                                # (ROWS, HID)
    sigma = _softplus(heads[:, HID:HID + 1])                             # (ROWS, 1)
    rgb = _sigmoid(jnp.dot(ch.astype(bf16), wc3_ref[...],
                           preferred_element_type=f32) + bc3_ref[...])   # (ROWS, 3)

    # ---- volume renderer: rows are sample-major (row = p*TILE_RAYS + ray) ----
    # exclusive transmittance + alpha compositing, unrolled over the 8 samples
    acc_c = jnp.zeros((TILE_RAYS, 3), f32)
    acc_d = jnp.zeros((TILE_RAYS, 1), f32)
    cum = jnp.zeros((TILE_RAYS, 1), f32)
    for p in range(N_PTS):
        lo = p * TILE_RAYS
        sd = sigma[lo:lo + TILE_RAYS, :] * DELTA                         # (TILE, 1)
        w = jnp.exp(-cum) * (1.0 - jnp.exp(-sd))                         # (TILE, 1)
        acc_c = acc_c + w * rgb[lo:lo + TILE_RAYS, :]
        acc_d = acc_d + w * (NEAR + p * DELTA)
        cum = cum + sd

    out_ref[...] = jnp.concatenate([acc_c, acc_d], axis=-1)              # (TILE, 4)


# ------------------------------- wrapper --------------------------------------
def _const_spec(arr):
    n = arr.ndim
    return pl.BlockSpec(arr.shape, lambda i, n=n: (0,) * n)


@jax.jit
def render(params, origins, directions):
    (w1, b1, w2, b2, ws, bs, wc1, wc2, bc, wc3, bc3) = params
    n_tiles = N_RAYS // TILE_RAYS

    # --- sampler: uniform samples along each ray (deterministic) ---
    # TODO(synk): stratified random jitter of the sampler omitted (deterministic bins).
    z = jnp.linspace(NEAR, FAR, N_PTS, dtype=jnp.float32)                     # (P,)
    pts = origins[None, :, :] + z[:, None, None] * directions[None, :, :]     # (P, N, 3)
    xe = harmonic_embedding(pts, L_XYZ)                                       # (P, N, Dx)
    d_unit = directions / jnp.linalg.norm(directions, axis=-1, keepdims=True)
    de = jnp.broadcast_to(harmonic_embedding(d_unit, L_DIR)[None],
                          (N_PTS, N_RAYS, D_DIR))                             # (P, N, Dd)

    # row layout: tile-major, sample-major inside the tile, ray-minor
    def to_rows(x):
        p_, _, d_ = x.shape
        return (x.reshape(p_, n_tiles, TILE_RAYS, d_)
                 .transpose(1, 0, 2, 3)
                 .reshape(n_tiles * p_ * TILE_RAYS, d_))

    xe_rows = to_rows(xe)                                                     # (N*P, Dx)
    de_rows = to_rows(de)                                                     # (N*P, Dd)

    # --- pack weights: fuse sigma + color heads, stack b1/b2, cast to bf16 ---
    bf16 = jnp.bfloat16
    b12 = jnp.concatenate([b1, b2], axis=0)                                   # (2, HID)
    wbig = jnp.zeros((HID + D_DIR, HID + 1), jnp.float32)
    wbig = wbig.at[:HID, :HID].set(wc1)
    wbig = wbig.at[:HID, HID:].set(ws)
    wbig = wbig.at[HID:, :HID].set(wc2)
    bbig = jnp.concatenate([bc, bs], axis=-1)                                 # (1, HID+1)
    w1b = w1.astype(bf16)
    w2b = w2.astype(bf16)
    wbigb = wbig.astype(bf16)
    wc3b = wc3.astype(bf16)

    in_specs = [
        pl.BlockSpec((ROWS, D_XYZ), lambda i: (i, 0)),   # xe rows (per tile)
        pl.BlockSpec((ROWS, D_DIR), lambda i: (i, 0)),   # de rows (per tile)
        _const_spec(w1b), _const_spec(b12), _const_spec(w2b),
        _const_spec(wbigb), _const_spec(bbig),
        _const_spec(wc3b), _const_spec(bc3),
    ]
    out_spec = pl.BlockSpec((TILE_RAYS, 4), lambda i: (i, 0))

    out = pl.pallas_call(
        nerf_render_kernel,
        out_shape=jax.ShapeDtypeStruct((N_RAYS, 4), jnp.float32),
        grid_spec=pltpu.PrefetchScalarGridSpec(
            num_scalar_prefetch=0,
            grid=(n_tiles,),
            in_specs=in_specs,
            out_specs=out_spec,
        ),
        compiler_params=pltpu.CompilerParams(
            dimension_semantics=("parallel",)),
    )(xe_rows, de_rows, w1b, b12, w2b, wbigb, bbig, wc3b, bc3)

    return out[:, :3], out[:, 3:4]


# --------------------------- pure-JAX reference --------------------------------
def reference(params, origins, directions):
    (w1, b1, w2, b2, ws, bs, wc1, wc2, bc, wc3, bc3) = params
    z = jnp.linspace(NEAR, FAR, N_PTS, dtype=jnp.float32)
    pts = origins[:, None, :] + z[None, :, None] * directions[:, None, :]
    xe = harmonic_embedding(pts, L_XYZ)                                        # (N,P,Dx)
    d_unit = directions / jnp.linalg.norm(directions, axis=-1, keepdims=True)
    de = jnp.broadcast_to(harmonic_embedding(d_unit, L_DIR)[:, None, :],
                          (N_RAYS, N_PTS, D_DIR))
    h = jnp.maximum(xe @ w1 + b1, 0.0)
    h = jnp.maximum(h @ w2 + b2, 0.0)
    sigma = _softplus(h @ ws + bs)[..., 0]                                     # (N,P)
    ch = jnp.maximum(h @ wc1 + de @ wc2 + bc, 0.0)
    rgb = _sigmoid(ch @ wc3 + bc3)                                             # (N,P,3)
    deltas = jnp.diff(z)
    deltas = jnp.concatenate([deltas, deltas[-1:]])
    sdelta = sigma * deltas
    cum = jnp.cumsum(sdelta, axis=-1) - sdelta                                 # exclusive
    w = jnp.exp(-cum) * (1.0 - jnp.exp(-sdelta))
    color = jnp.sum(w[..., None] * rgb, axis=1)
    depth = jnp.sum(w * z, axis=1, keepdims=True)
    return color, depth


# ------------------------------- params ----------------------------------------
def init_params(key):
    ks = jax.random.split(key, 6)
    s = 0.1
    w1 = s * jax.random.normal(ks[0], (D_XYZ, HID), jnp.float32)
    b1 = jnp.zeros((1, HID), jnp.float32)
    w2 = s * jax.random.normal(ks[1], (HID, HID), jnp.float32)
    b2 = jnp.zeros((1, HID), jnp.float32)
    ws = s * jax.random.normal(ks[2], (HID, 1), jnp.float32)
    bs = jnp.zeros((1, 1), jnp.float32)
    wc1 = s * jax.random.normal(ks[3], (HID, HID), jnp.float32)
    wc2 = s * jax.random.normal(ks[4], (D_DIR, HID), jnp.float32)
    bc = jnp.zeros((1, HID), jnp.float32)
    wc3 = s * jax.random.normal(ks[5], (HID, 3), jnp.float32)
    bc3 = jnp.zeros((1, 3), jnp.float32)
    return (w1, b1, w2, b2, ws, bs, wc1, wc2, bc, wc3, bc3)


if __name__ == "__main__":
    key = jax.random.PRNGKey(0)
    kp, ko, kd = jax.random.split(key, 3)
    params = init_params(kp)

    # ray bundle: origins + (roughly forward-facing) directions
    origins = 0.1 * jax.random.normal(ko, (N_RAYS, 3), jnp.float32)
    directions = jax.random.normal(kd, (N_RAYS, 3), jnp.float32)
    directions = directions.at[:, 2].set(jnp.abs(directions[:, 2]) + 1.0)
    directions = directions / jnp.linalg.norm(directions, axis=-1, keepdims=True)

    color, depth = render(params, origins, directions)
    jax.block_until_ready((color, depth))

    # reference is the pure-f32 spec (highest matmul precision); the kernel uses
    # bf16-multiply / f32-accumulate MXU math, hence the 2e-2 tolerance.
    with jax.default_matmul_precision("highest"):
        ref_color, ref_depth = reference(params, origins, directions)
    assert jnp.allclose(color, ref_color, atol=2e-2, rtol=2e-2), \
        float(jnp.max(jnp.abs(color - ref_color)))
    assert jnp.allclose(depth, ref_depth, atol=2e-2, rtol=2e-2), \
        float(jnp.max(jnp.abs(depth - ref_depth)))

    print("KERNEL_OK")
</pallas_src>

<mosaic_0001>
module attributes {stable_mosaic.version = 11 : i64} {
  func.func @nerf_render_kernel(%arg0: i32, %arg1: memref<512x39xf32, #tpu.memory_space<vmem>>, %arg2: memref<512x27xf32, #tpu.memory_space<vmem>>, %arg3: memref<39x128xbf16, #tpu.memory_space<vmem>>, %arg4: memref<2x128xf32, #tpu.memory_space<vmem>>, %arg5: memref<128x128xbf16, #tpu.memory_space<vmem>>, %arg6: memref<155x129xbf16, #tpu.memory_space<vmem>>, %arg7: memref<1x129xf32, #tpu.memory_space<vmem>>, %arg8: memref<128x3xbf16, #tpu.memory_space<vmem>>, %arg9: memref<1x3xf32, #tpu.memory_space<vmem>>, %arg10: memref<64x4xf32, #tpu.memory_space<vmem>>) attributes {dimension_semantics = [#tpu.dimension_semantics<parallel>], iteration_bounds = array<i64: 1>, scalar_prefetch = 0 : i64, scratch_operands = 0 : i64, tpu.core_type = #tpu.core_type<tc>, window_params = [{transform_indices = @transform_0, window_bounds = array<i64: 512, 39>}, {transform_indices = @transform_1, window_bounds = array<i64: 512, 27>}, {pipeline_mode = #tpu.pipeline_mode<synchronous>, transform_indices = @transform_2, window_bounds = array<i64: 39, 128>}, {pipeline_mode = #tpu.pipeline_mode<synchronous>, transform_indices = @transform_3, window_bounds = array<i64: 2, 128>}, {pipeline_mode = #tpu.pipeline_mode<synchronous>, transform_indices = @transform_4, window_bounds = array<i64: 128, 128>}, {pipeline_mode = #tpu.pipeline_mode<synchronous>, transform_indices = @transform_5, window_bounds = array<i64: 155, 129>}, {pipeline_mode = #tpu.pipeline_mode<synchronous>, transform_indices = @transform_6, window_bounds = array<i64: 1, 129>}, {pipeline_mode = #tpu.pipeline_mode<synchronous>, transform_indices = @transform_7, window_bounds = array<i64: 128, 3>}, {pipeline_mode = #tpu.pipeline_mode<synchronous>, transform_indices = @transform_8, window_bounds = array<i64: 1, 3>}, {transform_indices = @transform_9, window_bounds = array<i64: 64, 4>}]} {
    %c0 = arith.constant 0 : index
    %c0_0 = arith.constant 0 : index
    %0 = vector.load %arg1[%c0, %c0_0] : memref<512x39xf32, #tpu.memory_space<vmem>>, vector<512x39xf32>
    %c0_1 = arith.constant 0 : index
    %c0_2 = arith.constant 0 : index
    %1 = vector.load %arg2[%c0_1, %c0_2] : memref<512x27xf32, #tpu.memory_space<vmem>>, vector<512x27xf32>
    %c0_3 = arith.constant 0 : index
    %c0_4 = arith.constant 0 : index
    %2 = vector.load %arg4[%c0_3, %c0_4] : memref<2x128xf32, #tpu.memory_space<vmem>>, vector<2x128xf32>
    %3 = vector.extract_strided_slice %2 {offsets = [0, 0], sizes = [1, 128], strides = [1, 1]} : vector<2x128xf32> to vector<1x128xf32>
    %4 = vector.extract_strided_slice %2 {offsets = [1, 0], sizes = [1, 128], strides = [1, 1]} : vector<2x128xf32> to vector<1x128xf32>
    %5 = arith.truncf %0 : vector<512x39xf32> to vector<512x39xbf16>
    %c0_5 = arith.constant 0 : index
    %c0_6 = arith.constant 0 : index
    %6 = vector.load %arg3[%c0_5, %c0_6] : memref<39x128xbf16, #tpu.memory_space<vmem>>, vector<39x128xbf16>
    %cst = arith.constant dense<0.000000e+00> : vector<512x128xf32>
    %7 = tpu.matmul %5, %6, %cst {dimension_numbers = #tpu.dot_dimension_numbers<[1], [0], [0], [1], [0, 0, 1, 1], [], []>} : vector<512x39xbf16>, vector<39x128xbf16>, vector<512x128xf32> -> vector<512x128xf32>
    %8 = vector.broadcast %3 : vector<1x128xf32> to vector<512x128xf32>
    %9 = arith.addf %7, %8 : vector<512x128xf32>
    %cst_7 = arith.constant 0.000000e+00 : f32
    %10 = vector.broadcast %cst_7 : f32 to vector<512x128xf32>
    %11 = arith.maximumf %9, %10 : vector<512x128xf32>
    %12 = arith.truncf %11 : vector<512x128xf32> to vector<512x128xbf16>
    %c0_8 = arith.constant 0 : index
    %c0_9 = arith.constant 0 : index
    %13 = vector.load %arg5[%c0_8, %c0_9] : memref<128x128xbf16, #tpu.memory_space<vmem>>, vector<128x128xbf16>
    %cst_10 = arith.constant dense<0.000000e+00> : vector<512x128xf32>
    %14 = tpu.matmul %12, %13, %cst_10 {dimension_numbers = #tpu.dot_dimension_numbers<[1], [0], [0], [1], [0, 0, 1, 1], [], []>} : vector<512x128xbf16>, vector<128x128xbf16>, vector<512x128xf32> -> vector<512x128xf32>
    %15 = vector.broadcast %4 : vector<1x128xf32> to vector<512x128xf32>
    %16 = arith.addf %14, %15 : vector<512x128xf32>
    %cst_11 = arith.constant 0.000000e+00 : f32
    %17 = vector.broadcast %cst_11 : f32 to vector<512x128xf32>
    %18 = arith.maximumf %16, %17 : vector<512x128xf32>
    %19 = tpu.concatenate %18, %1 in 1 : vector<512x128xf32>, vector<512x27xf32> -> vector<512x155xf32>
    %20 = arith.truncf %19 : vector<512x155xf32> to vector<512x155xbf16>
    %c0_12 = arith.constant 0 : index
    %c0_13 = arith.constant 0 : index
    %21 = vector.load %arg6[%c0_12, %c0_13] : memref<155x129xbf16, #tpu.memory_space<vmem>>, vector<155x129xbf16>
    %cst_14 = arith.constant dense<0.000000e+00> : vector<512x129xf32>
    %22 = tpu.matmul %20, %21, %cst_14 {dimension_numbers = #tpu.dot_dimension_numbers<[1], [0], [0], [1], [0, 0, 1, 1], [], []>} : vector<512x155xbf16>, vector<155x129xbf16>, vector<512x129xf32> -> vector<512x129xf32>
    %c0_15 = arith.constant 0 : index
    %c0_16 = arith.constant 0 : index
    %23 = vector.load %arg7[%c0_15, %c0_16] : memref<1x129xf32, #tpu.memory_space<vmem>>, vector<1x129xf32>
    %24 = vector.broadcast %23 : vector<1x129xf32> to vector<512x129xf32>
    %25 = arith.addf %22, %24 : vector<512x129xf32>
    %26 = vector.extract_strided_slice %25 {offsets = [0, 0], sizes = [512, 128], strides = [1, 1]} : vector<512x129xf32> to vector<512x128xf32>
    %cst_17 = arith.constant 0.000000e+00 : f32
    %27 = vector.broadcast %cst_17 : f32 to vector<512x128xf32>
    %28 = arith.maximumf %26, %27 : vector<512x128xf32>
    %29 = vector.extract_strided_slice %25 {offsets = [0, 128], sizes = [512, 1], strides = [1, 1]} : vector<512x129xf32> to vector<512x1xf32>
    %cst_18 = arith.constant 2.000000e+01 : f32
    %30 = vector.broadcast %cst_18 : f32 to vector<512x1xf32>
    %31 = arith.cmpf ogt, %29, %30 : vector<512x1xf32>
    %cst_19 = arith.constant 2.000000e+01 : f32
    %32 = vector.broadcast %cst_19 : f32 to vector<512x1xf32>
    %33 = arith.minimumf %29, %32 : vector<512x1xf32>
    %34 = math.exp %33 : vector<512x1xf32>
    %35 = math.log1p %34 : vector<512x1xf32>
    %36 = arith.select %31, %29, %35 : vector<512x1xi1>, vector<512x1xf32>
    %37 = arith.truncf %28 : vector<512x128xf32> to vector<512x128xbf16>
    %c0_20 = arith.constant 0 : index
    %c0_21 = arith.constant 0 : index
    %38 = vector.load %arg8[%c0_20, %c0_21] : memref<128x3xbf16, #tpu.memory_space<vmem>>, vector<128x3xbf16>
    %cst_22 = arith.constant dense<0.000000e+00> : vector<512x3xf32>
    %39 = tpu.matmul %37, %38, %cst_22 {dimension_numbers = #tpu.dot_dimension_numbers<[1], [0], [0], [1], [0, 0, 1, 1], [], []>} : vector<512x128xbf16>, vector<128x3xbf16>, vector<512x3xf32> -> vector<512x3xf32>
    %c0_23 = arith.constant 0 : index
    %c0_24 = arith.constant 0 : index
    %40 = vector.load %arg9[%c0_23, %c0_24] : memref<1x3xf32, #tpu.memory_space<vmem>>, vector<1x3xf32>
    %41 = vector.broadcast %40 : vector<1x3xf32> to vector<512x3xf32>
    %42 = arith.addf %39, %41 : vector<512x3xf32>
    %cst_25 = arith.constant 0.000000e+00 : f32
    %43 = vector.broadcast %cst_25 : f32 to vector<512x3xf32>
    %44 = arith.subf %43, %42 : vector<512x3xf32>
    %45 = math.exp %44 : vector<512x3xf32>
    %cst_26 = arith.constant 1.000000e+00 : f32
    %46 = vector.broadcast %cst_26 : f32 to vector<512x3xf32>
    %47 = arith.addf %46, %45 : vector<512x3xf32>
    %cst_27 = arith.constant 1.000000e+00 : f32
    %48 = vector.broadcast %cst_27 : f32 to vector<512x3xf32>
    %49 = arith.divf %48, %47 : vector<512x3xf32>
    %cst_28 = arith.constant 0.000000e+00 : f32
    %50 = vector.broadcast %cst_28 : f32 to vector<64x3xf32>
    %cst_29 = arith.constant 0.000000e+00 : f32
    %51 = vector.broadcast %cst_29 : f32 to vector<64x1xf32>
    %cst_30 = arith.constant 0.000000e+00 : f32
    %52 = vector.broadcast %cst_30 : f32 to vector<64x1xf32>
    %53 = vector.extract_strided_slice %36 {offsets = [0, 0], sizes = [64, 1], strides = [1, 1]} : vector<512x1xf32> to vector<64x1xf32>
    %cst_31 = arith.constant 0.285714298 : f32
    %54 = vector.broadcast %cst_31 : f32 to vector<64x1xf32>
    %55 = arith.mulf %53, %54 : vector<64x1xf32>
    %cst_32 = arith.constant 0.000000e+00 : f32
    %56 = vector.broadcast %cst_32 : f32 to vector<64x1xf32>
    %57 = arith.subf %56, %52 : vector<64x1xf32>
    %58 = math.exp %57 : vector<64x1xf32>
    %cst_33 = arith.constant 0.000000e+00 : f32
    %59 = vector.broadcast %cst_33 : f32 to vector<64x1xf32>
    %60 = arith.subf %59, %55 : vector<64x1xf32>
    %61 = math.exp %60 : vector<64x1xf32>
    %cst_34 = arith.constant 1.000000e+00 : f32
    %62 = vector.broadcast %cst_34 : f32 to vector<64x1xf32>
    %63 = arith.subf %62, %61 : vector<64x1xf32>
    %64 = arith.mulf %58, %63 : vector<64x1xf32>
    %65 = vector.extract_strided_slice %49 {offsets = [0, 0], sizes = [64, 3], strides = [1, 1]} : vector<512x3xf32> to vector<64x3xf32>
    %66 = vector.broadcast %64 : vector<64x1xf32> to vector<64x3xf32>
    %67 = arith.mulf %66, %65 : vector<64x3xf32>
    %68 = arith.addf %50, %67 : vector<64x3xf32>
    %cst_35 = arith.constant 1.000000e+00 : f32
    %69 = vector.broadcast %cst_35 : f32 to vector<64x1xf32>
    %70 = arith.mulf %64, %69 : vector<64x1xf32>
    %71 = arith.addf %51, %70 : vector<64x1xf32>
    %72 = arith.addf %52, %55 : vector<64x1xf32>
    %73 = vector.extract_strided_slice %36 {offsets = [64, 0], sizes = [64, 1], strides = [1, 1]} : vector<512x1xf32> to vector<64x1xf32>
    %cst_36 = arith.constant 0.285714298 : f32
    %74 = vector.broadcast %cst_36 : f32 to vector<64x1xf32>
    %75 = arith.mulf %73, %74 : vector<64x1xf32>
    %cst_37 = arith.constant 0.000000e+00 : f32
    %76 = vector.broadcast %cst_37 : f32 to vector<64x1xf32>
    %77 = arith.subf %76, %72 : vector<64x1xf32>
    %78 = math.exp %77 : vector<64x1xf32>
    %cst_38 = arith.constant 0.000000e+00 : f32
    %79 = vector.broadcast %cst_38 : f32 to vector<64x1xf32>
    %80 = arith.subf %79, %75 : vector<64x1xf32>
    %81 = math.exp %80 : vector<64x1xf32>
    %cst_39 = arith.constant 1.000000e+00 : f32
    %82 = vector.broadcast %cst_39 : f32 to vector<64x1xf32>
    %83 = arith.subf %82, %81 : vector<64x1xf32>
    %84 = arith.mulf %78, %83 : vector<64x1xf32>
    %85 = vector.extract_strided_slice %49 {offsets = [64, 0], sizes = [64, 3], strides = [1, 1]} : vector<512x3xf32> to vector<64x3xf32>
    %86 = vector.broadcast %84 : vector<64x1xf32> to vector<64x3xf32>
    %87 = arith.mulf %86, %85 : vector<64x3xf32>
    %88 = arith.addf %68, %87 : vector<64x3xf32>
    %cst_40 = arith.constant 1.28571427 : f32
    %89 = vector.broadcast %cst_40 : f32 to vector<64x1xf32>
    %90 = arith.mulf %84, %89 : vector<64x1xf32>
    %91 = arith.addf %71, %90 : vector<64x1xf32>
    %92 = arith.addf %72, %75 : vector<64x1xf32>
    %93 = vector.extract_strided_slice %36 {offsets = [128, 0], sizes = [64, 1], strides = [1, 1]} : vector<512x1xf32> to vector<64x1xf32>
    %cst_41 = arith.constant 0.285714298 : f32
    %94 = vector.broadcast %cst_41 : f32 to vector<64x1xf32>
    %95 = arith.mulf %93, %94 : vector<64x1xf32>
    %cst_42 = arith.constant 0.000000e+00 : f32
    %96 = vector.broadcast %cst_42 : f32 to vector<64x1xf32>
    %97 = arith.subf %96, %92 : vector<64x1xf32>
    %98 = math.exp %97 : vector<64x1xf32>
    %cst_43 = arith.constant 0.000000e+00 : f32
    %99 = vector.broadcast %cst_43 : f32 to vector<64x1xf32>
    %100 = arith.subf %99, %95 : vector<64x1xf32>
    %101 = math.exp %100 : vector<64x1xf32>
    %cst_44 = arith.constant 1.000000e+00 : f32
    %102 = vector.broadcast %cst_44 : f32 to vector<64x1xf32>
    %103 = arith.subf %102, %101 : vector<64x1xf32>
    %104 = arith.mulf %98, %103 : vector<64x1xf32>
    %105 = vector.extract_strided_slice %49 {offsets = [128, 0], sizes = [64, 3], strides = [1, 1]} : vector<512x3xf32> to vector<64x3xf32>
    %106 = vector.broadcast %104 : vector<64x1xf32> to vector<64x3xf32>
    %107 = arith.mulf %106, %105 : vector<64x3xf32>
    %108 = arith.addf %88, %107 : vector<64x3xf32>
    %cst_45 = arith.constant 1.57142854 : f32
    %109 = vector.broadcast %cst_45 : f32 to vector<64x1xf32>
    %110 = arith.mulf %104, %109 : vector<64x1xf32>
    %111 = arith.addf %91, %110 : vector<64x1xf32>
    %112 = arith.addf %92, %95 : vector<64x1xf32>
    %113 = vector.extract_strided_slice %36 {offsets = [192, 0], sizes = [64, 1], strides = [1, 1]} : vector<512x1xf32> to vector<64x1xf32>
    %cst_46 = arith.constant 0.285714298 : f32
    %114 = vector.broadcast %cst_46 : f32 to vector<64x1xf32>
    %115 = arith.mulf %113, %114 : vector<64x1xf32>
    %cst_47 = arith.constant 0.000000e+00 : f32
    %116 = vector.broadcast %cst_47 : f32 to vector<64x1xf32>
    %117 = arith.subf %116, %112 : vector<64x1xf32>
    %118 = math.exp %117 : vector<64x1xf32>
    %cst_48 = arith.constant 0.000000e+00 : f32
    %119 = vector.broadcast %cst_48 : f32 to vector<64x1xf32>
    %120 = arith.subf %119, %115 : vector<64x1xf32>
    %121 = math.exp %120 : vector<64x1xf32>
    %cst_49 = arith.constant 1.000000e+00 : f32
    %122 = vector.broadcast %cst_49 : f32 to vector<64x1xf32>
    %123 = arith.subf %122, %121 : vector<64x1xf32>
    %124 = arith.mulf %118, %123 : vector<64x1xf32>
    %125 = vector.extract_strided_slice %49 {offsets = [192, 0], sizes = [64, 3], strides = [1, 1]} : vector<512x3xf32> to vector<64x3xf32>
    %126 = vector.broadcast %124 : vector<64x1xf32> to vector<64x3xf32>
    %127 = arith.mulf %126, %125 : vector<64x3xf32>
    %128 = arith.addf %108, %127 : vector<64x3xf32>
    %cst_50 = arith.constant 1.85714281 : f32
    %129 = vector.broadcast %cst_50 : f32 to vector<64x1xf32>
    %130 = arith.mulf %124, %129 : vector<64x1xf32>
    %131 = arith.addf %111, %130 : vector<64x1xf32>
    %132 = arith.addf %112, %115 : vector<64x1xf32>
    %133 = vector.extract_strided_slice %36 {offsets = [256, 0], sizes = [64, 1], strides = [1, 1]} : vector<512x1xf32> to vector<64x1xf32>
    %cst_51 = arith.constant 0.285714298 : f32
    %134 = vector.broadcast %cst_51 : f32 to vector<64x1xf32>
    %135 = arith.mulf %133, %134 : vector<64x1xf32>
    %cst_52 = arith.constant 0.000000e+00 : f32
    %136 = vector.broadcast %cst_52 : f32 to vector<64x1xf32>
    %137 = arith.subf %136, %132 : vector<64x1xf32>
    %138 = math.exp %137 : vector<64x1xf32>
    %cst_53 = arith.constant 0.000000e+00 : f32
    %139 = vector.broadcast %cst_53 : f32 to vector<64x1xf32>
    %140 = arith.subf %139, %135 : vector<64x1xf32>
    %141 = math.exp %140 : vector<64x1xf32>
    %cst_54 = arith.constant 1.000000e+00 : f32
    %142 = vector.broadcast %cst_54 : f32 to vector<64x1xf32>
    %143 = arith.subf %142, %141 : vector<64x1xf32>
    %144 = arith.mulf %138, %143 : vector<64x1xf32>
    %145 = vector.extract_strided_slice %49 {offsets = [256, 0], sizes = [64, 3], strides = [1, 1]} : vector<512x3xf32> to vector<64x3xf32>
    %146 = vector.broadcast %144 : vector<64x1xf32> to vector<64x3xf32>
    %147 = arith.mulf %146, %145 : vector<64x3xf32>
    %148 = arith.addf %128, %147 : vector<64x3xf32>
    %cst_55 = arith.constant 2.14285707 : f32
    %149 = vector.broadcast %cst_55 : f32 to vector<64x1xf32>
    %150 = arith.mulf %144, %149 : vector<64x1xf32>
    %151 = arith.addf %131, %150 : vector<64x1xf32>
    %152 = arith.addf %132, %135 : vector<64x1xf32>
    %153 = vector.extract_strided_slice %36 {offsets = [320, 0], sizes = [64, 1], strides = [1, 1]} : vector<512x1xf32> to vector<64x1xf32>
    %cst_56 = arith.constant 0.285714298 : f32
    %154 = vector.broadcast %cst_56 : f32 to vector<64x1xf32>
    %155 = arith.mulf %153, %154 : vector<64x1xf32>
    %cst_57 = arith.constant 0.000000e+00 : f32
    %156 = vector.broadcast %cst_57 : f32 to vector<64x1xf32>
    %157 = arith.subf %156, %152 : vector<64x1xf32>
    %158 = math.exp %157 : vector<64x1xf32>
    %cst_58 = arith.constant 0.000000e+00 : f32
    %159 = vector.broadcast %cst_58 : f32 to vector<64x1xf32>
    %160 = arith.subf %159, %155 : vector<64x1xf32>
    %161 = math.exp %160 : vector<64x1xf32>
    %cst_59 = arith.constant 1.000000e+00 : f32
    %162 = vector.broadcast %cst_59 : f32 to vector<64x1xf32>
    %163 = arith.subf %162, %161 : vector<64x1xf32>
    %164 = arith.mulf %158, %163 : vector<64x1xf32>
    %165 = vector.extract_strided_slice %49 {offsets = [320, 0], sizes = [64, 3], strides = [1, 1]} : vector<512x3xf32> to vector<64x3xf32>
    %166 = vector.broadcast %164 : vector<64x1xf32> to vector<64x3xf32>
    %167 = arith.mulf %166, %165 : vector<64x3xf32>
    %168 = arith.addf %148, %167 : vector<64x3xf32>
    %cst_60 = arith.constant 2.42857146 : f32
    %169 = vector.broadcast %cst_60 : f32 to vector<64x1xf32>
    %170 = arith.mulf %164, %169 : vector<64x1xf32>
    %171 = arith.addf %151, %170 : vector<64x1xf32>
    %172 = arith.addf %152, %155 : vector<64x1xf32>
    %173 = vector.extract_strided_slice %36 {offsets = [384, 0], sizes = [64, 1], strides = [1, 1]} : vector<512x1xf32> to vector<64x1xf32>
    %cst_61 = arith.constant 0.285714298 : f32
    %174 = vector.broadcast %cst_61 : f32 to vector<64x1xf32>
    %175 = arith.mulf %173, %174 : vector<64x1xf32>
    %cst_62 = arith.constant 0.000000e+00 : f32
    %176 = vector.broadcast %cst_62 : f32 to vector<64x1xf32>
    %177 = arith.subf %176, %172 : vector<64x1xf32>
    %178 = math.exp %177 : vector<64x1xf32>
    %cst_63 = arith.constant 0.000000e+00 : f32
    %179 = vector.broadcast %cst_63 : f32 to vector<64x1xf32>
    %180 = arith.subf %179, %175 : vector<64x1xf32>
    %181 = math.exp %180 : vector<64x1xf32>
    %cst_64 = arith.constant 1.000000e+00 : f32
    %182 = vector.broadcast %cst_64 : f32 to vector<64x1xf32>
    %183 = arith.subf %182, %181 : vector<64x1xf32>
    %184 = arith.mulf %178, %183 : vector<64x1xf32>
    %185 = vector.extract_strided_slice %49 {offsets = [384, 0], sizes = [64, 3], strides = [1, 1]} : vector<512x3xf32> to vector<64x3xf32>
    %186 = vector.broadcast %184 : vector<64x1xf32> to vector<64x3xf32>
    %187 = arith.mulf %186, %185 : vector<64x3xf32>
    %188 = arith.addf %168, %187 : vector<64x3xf32>
    %cst_65 = arith.constant 2.71428561 : f32
    %189 = vector.broadcast %cst_65 : f32 to vector<64x1xf32>
    %190 = arith.mulf %184, %189 : vector<64x1xf32>
    %191 = arith.addf %171, %190 : vector<64x1xf32>
    %192 = arith.addf %172, %175 : vector<64x1xf32>
    %193 = vector.extract_strided_slice %36 {offsets = [448, 0], sizes = [64, 1], strides = [1, 1]} : vector<512x1xf32> to vector<64x1xf32>
    %cst_66 = arith.constant 0.285714298 : f32
    %194 = vector.broadcast %cst_66 : f32 to vector<64x1xf32>
    %195 = arith.mulf %193, %194 : vector<64x1xf32>
    %cst_67 = arith.constant 0.000000e+00 : f32
    %196 = vector.broadcast %cst_67 : f32 to vector<64x1xf32>
    %197 = arith.subf %196, %192 : vector<64x1xf32>
    %198 = math.exp %197 : vector<64x1xf32>
    %cst_68 = arith.constant 0.000000e+00 : f32
    %199 = vector.broadcast %cst_68 : f32 to vector<64x1xf32>
    %200 = arith.subf %199, %195 : vector<64x1xf32>
    %201 = math.exp %200 : vector<64x1xf32>
    %cst_69 = arith.constant 1.000000e+00 : f32
    %202 = vector.broadcast %cst_69 : f32 to vector<64x1xf32>
    %203 = arith.subf %202, %201 : vector<64x1xf32>
    %204 = arith.mulf %198, %203 : vector<64x1xf32>
    %205 = vector.extract_strided_slice %49 {offsets = [448, 0], sizes = [64, 3], strides = [1, 1]} : vector<512x3xf32> to vector<64x3xf32>
    %206 = vector.broadcast %204 : vector<64x1xf32> to vector<64x3xf32>
    %207 = arith.mulf %206, %205 : vector<64x3xf32>
    %208 = arith.addf %188, %207 : vector<64x3xf32>
    %cst_70 = arith.constant 3.000000e+00 : f32
    %209 = vector.broadcast %cst_70 : f32 to vector<64x1xf32>
    %210 = arith.mulf %204, %209 : vector<64x1xf32>
    %211 = arith.addf %191, %210 : vector<64x1xf32>
    %212 = tpu.concatenate %208, %211 in 1 : vector<64x3xf32>, vector<64x1xf32> -> vector<64x4xf32>
    %c0_71 = arith.constant 0 : index
    %c0_72 = arith.constant 0 : index
    %213 = vector.load %arg10[%c0_71, %c0_72] : memref<64x4xf32, #tpu.memory_space<vmem>>, vector<64x4xf32>
    tpu.vector_store %arg10[%c0_71, %c0_72], %212 {strides = array<i32>} : memref<64x4xf32, #tpu.memory_space<vmem>>, vector<64x4xf32>,
    return
  }
  func.func @transform_0(%arg0: i32) -> (i32, i32) {
    %c0_i32 = arith.constant 0 : i32
    %c0_i32_0 = arith.constant 0 : i32
    return %arg0, %c0_i32 : i32, i32
  }
  func.func @transform_1(%arg0: i32) -> (i32, i32) {
    %c0_i32 = arith.constant 0 : i32
    %c0_i32_0 = arith.constant 0 : i32
    return %arg0, %c0_i32 : i32, i32
  }
  func.func @transform_2(%arg0: i32) -> (i32, i32) {
    %c0_i32 = arith.constant 0 : i32
    %c0_i32_0 = arith.constant 0 : i32
    %c0_i32_1 = arith.constant 0 : i32
    return %c0_i32, %c0_i32_0 : i32, i32
  }
  func.func @transform_3(%arg0: i32) -> (i32, i32) {
    %c0_i32 = arith.constant 0 : i32
    %c0_i32_0 = arith.constant 0 : i32
    %c0_i32_1 = arith.constant 0 : i32
    return %c0_i32, %c0_i32_0 : i32, i32
  }
  func.func @transform_4(%arg0: i32) -> (i32, i32) {
    %c0_i32 = arith.constant 0 : i32
    %c0_i32_0 = arith.constant 0 : i32
    %c0_i32_1 = arith.constant 0 : i32
    return %c0_i32, %c0_i32_0 : i32, i32
  }
  func.func @transform_5(%arg0: i32) -> (i32, i32) {
    %c0_i32 = arith.constant 0 : i32
    %c0_i32_0 = arith.constant 0 : i32
    %c0_i32_1 = arith.constant 0 : i32
    return %c0_i32, %c0_i32_0 : i32, i32
  }
  func.func @transform_6(%arg0: i32) -> (i32, i32) {
    %c0_i32 = arith.constant 0 : i32
    %c0_i32_0 = arith.constant 0 : i32
    %c0_i32_1 = arith.constant 0 : i32
    return %c0_i32, %c0_i32_0 : i32, i32
  }
  func.func @transform_7(%arg0: i32) -> (i32, i32) {
    %c0_i32 = arith.constant 0 : i32
    %c0_i32_0 = arith.constant 0 : i32
    %c0_i32_1 = arith.constant 0 : i32
    return %c0_i32, %c0_i32_0 : i32, i32
  }
  func.func @transform_8(%arg0: i32) -> (i32, i32) {
    %c0_i32 = arith.constant 0 : i32
    %c0_i32_0 = arith.constant 0 : i32
    %c0_i32_1 = arith.constant 0 : i32
    return %c0_i32, %c0_i32_0 : i32, i32
  }
  func.func @transform_9(%arg0: i32) -> (i32, i32) {
    %c0_i32 = arith.constant 0 : i32
    %c0_i32_0 = arith.constant 0 : i32
    return %arg0, %c0_i32 : i32, i32
  }
}

</mosaic_0001>

<llo_original>
// kernel: render.1
$region0: #{render.1}
  #allocation0 [shape = 'u32[]', space=smem, size = 0x4, offset = 0x4, fixed_abs, tag = 'smem constant byte address 0x4 - core index']
  #allocation1 [shape = 'u32[144,128]{1,0:T(1,128)}', space=vmem, size = 0x12000, scoped, tag = 'internal scratch']
  %s0 = inlined_call_operand.vmem [shape: f32[512,39], index: 0, kind: input, shape index: {}]
  %s1 = inlined_call_operand.vmem [shape: f32[512,27], index: 1, kind: input, shape index: {}]
  %s2 = inlined_call_operand.vmem [shape: bf16[39,128], index: 2, kind: input, shape index: {}]
  %s3 = inlined_call_operand.vmem [shape: f32[2,128], index: 3, kind: input, shape index: {}]
  %s4 = inlined_call_operand.vmem [shape: bf16[128,128], index: 4, kind: input, shape index: {}]
  %s5 = inlined_call_operand.vmem [shape: bf16[155,129], index: 5, kind: input, shape index: {}]
  %s6 = inlined_call_operand.vmem [shape: f32[1,129], index: 6, kind: input, shape index: {}]
  %s7 = inlined_call_operand.vmem [shape: bf16[128,3], index: 7, kind: input, shape index: {}]
  %s8 = inlined_call_operand.vmem [shape: f32[1,3], index: 8, kind: input, shape index: {}]
  %s9 = inlined_call_operand.vmem [shape: f32[64,4], index: 9, kind: output, shape index: {}]
  %s10 = sld [smem:[#allocation0]]
  $region46: #{render.1} parent=0
    _
  %s12 = ssub.s32 1, %s10
  %s13 = scalar_select 0, %s12, %s10
  // Predicated region
  $region2: #{render.1} parent=0 // pred_check
    _
  $region3: #{render.1} parent=0 // pred_check_branch
    %15 = sbr.rel (0) target = $region5
  $region4: #{render.1} parent=0 // pred_region
    _
  $region5: #{render.1} parent=0 // pred_fallthru
    _
  // Predicated region
  $region6: #{render.1} parent=0 // pred_check
    _
  $region7: #{render.1} parent=0 // pred_check_branch
    %17 = sbr.rel (0) target = $region9
  $region8: #{render.1} parent=0 // pred_region
    _
  $region9: #{render.1} parent=0 // pred_fallthru
    _
  // Predicated region
  $region10: #{render.1} parent=0 // pred_check
    _
  $region11: #{render.1} parent=0 // pred_check_branch
    %19 = sbr.rel (0) target = $region13
  $region12: #{render.1} parent=0 // pred_region
    _
  $region13: #{render.1} parent=0 // pred_fallthru
    _
  // Predicated region
  $region14: #{render.1} parent=0 // pred_check
    _
  $region15: #{render.1} parent=0 // pred_check_branch
    %21 = sbr.rel (0) target = $region17
  $region16: #{render.1} parent=0 // pred_region
    _
  $region17: #{render.1} parent=0 // pred_fallthru
    _
  // Predicated region
  $region18: #{render.1} parent=0 // pred_check
    _
  $region19: #{render.1} parent=0 // pred_check_branch
    %23 = sbr.rel (0) target = $region21
  $region20: #{render.1} parent=0 // pred_region
    _
  $region21: #{render.1} parent=0 // pred_fallthru
    _
  // Predicated region
  $region22: #{render.1} parent=0 // pred_check
    _
  $region23: #{render.1} parent=0 // pred_check_branch
    %25 = sbr.rel (0) target = $region25
  $region24: #{render.1} parent=0 // pred_region
    _
  $region25: #{render.1} parent=0 // pred_fallthru
    _
  // Predicated region
  $region26: #{render.1} parent=0 // pred_check
    _
  $region27: #{render.1} parent=0 // pred_check_branch
    %27 = sbr.rel (0) target = $region29
  $region28: #{render.1} parent=0 // pred_region
    _
  $region29: #{render.1} parent=0 // pred_fallthru
    _
  // Predicated region
  $region30: #{render.1} parent=0 // pred_check
    _
  $region31: #{render.1} parent=0 // pred_check_branch
    %29 = sbr.rel (0) target = $region33
  $region32: #{render.1} parent=0 // pred_region
    _
  $region33: #{render.1} parent=0 // pred_fallthru
    _
  // Predicated region
  $region34: #{render.1} parent=0 // pred_check
    _
  $region35: #{render.1} parent=0 // pred_check_branch
    %31 = sbr.rel (0) target = $region37
  $region36: #{render.1} parent=0 // pred_region
    _
  $region37: #{render.1} parent=0 // pred_fallthru
    _
  %v33 = vld [vmem:[%s0] sm:$0xff]
  %v34 = vld [vmem:[%s0 + $0x8] sm:$0xff]
  %v35 = vld [vmem:[%s0 + $0x10] sm:$0xff]
  %v36 = vld [vmem:[%s0 + $0x18] sm:$0xff]
  %v37 = vld [vmem:[%s0 + $0x20] sm:$0xff]
  %v38 = vld [vmem:[%s0 + $0x28] sm:$0xff]
  %v39 = vld [vmem:[%s0 + $0x30] sm:$0xff]
  %v40 = vld [vmem:[%s0 + $0x38] sm:$0xff]
  %v41 = vld [vmem:[%s0 + $0x40] sm:$0xff]
  %v42 = vld [vmem:[%s0 + $0x48] sm:$0xff]
  %v43 = vld [vmem:[%s0 + $0x50] sm:$0xff]
  %v44 = vld [vmem:[%s0 + $0x58] sm:$0xff]
  %v45 = vld [vmem:[%s0 + $0x60] sm:$0xff]
  %v46 = vld [vmem:[%s0 + $0x68] sm:$0xff]
  %v47 = vld [vmem:[%s0 + $0x70] sm:$0xff]
  %v48 = vld [vmem:[%s0 + $0x78] sm:$0xff]
  %v49 = vld [vmem:[%s0 + $0x80] sm:$0xff]
  %v50 = vld [vmem:[%s0 + $0x88] sm:$0xff]
  %v51 = vld [vmem:[%s0 + $0x90] sm:$0xff]
  %v52 = vld [vmem:[%s0 + $0x98] sm:$0xff]
  %v53 = vld [vmem:[%s0 + $0xa0] sm:$0xff]
  %v54 = vld [vmem:[%s0 + $0xa8] sm:$0xff]
  %v55 = vld [vmem:[%s0 + $0xb0] sm:$0xff]
  %v56 = vld [vmem:[%s0 + $0xb8] sm:$0xff]
  %v57 = vld [vmem:[%s0 + $0xc0] sm:$0xff]
  %v58 = vld [vmem:[%s0 + $0xc8] sm:$0xff]
  %v59 = vld [vmem:[%s0 + $0xd0] sm:$0xff]
  %v60 = vld [vmem:[%s0 + $0xd8] sm:$0xff]
  %v61 = vld [vmem:[%s0 + $0xe0] sm:$0xff]
  %v62 = vld [vmem:[%s0 + $0xe8] sm:$0xff]
  %v63 = vld [vmem:[%s0 + $0xf0] sm:$0xff]
  %v64 = vld [vmem:[%s0 + $0xf8] sm:$0xff]
  %v65 = vld [vmem:[%s0 + $0x100] sm:$0xff]
  %v66 = vld [vmem:[%s0 + $0x108] sm:$0xff]
  %v67 = vld [vmem:[%s0 + $0x110] sm:$0xff]
  %v68 = vld [vmem:[%s0 + $0x118] sm:$0xff]
  %v69 = vld [vmem:[%s0 + $0x120] sm:$0xff]
  %v70 = vld [vmem:[%s0 + $0x128] sm:$0xff]
  %v71 = vld [vmem:[%s0 + $0x130] sm:$0xff]
  %v72 = vld [vmem:[%s0 + $0x138] sm:$0xff]
  %v73 = vld [vmem:[%s0 + $0x140] sm:$0xff]
  %v74 = vld [vmem:[%s0 + $0x148] sm:$0xff]
  %v75 = vld [vmem:[%s0 + $0x150] sm:$0xff]
  %v76 = vld [vmem:[%s0 + $0x158] sm:$0xff]
  %v77 = vld [vmem:[%s0 + $0x160] sm:$0xff]
  %v78 = vld [vmem:[%s0 + $0x168] sm:$0xff]
  %v79 = vld [vmem:[%s0 + $0x170] sm:$0xff]
  %v80 = vld [vmem:[%s0 + $0x178] sm:$0xff]
  %v81 = vld [vmem:[%s0 + $0x180] sm:$0xff]
  %v82 = vld [vmem:[%s0 + $0x188] sm:$0xff]
  %v83 = vld [vmem:[%s0 + $0x190] sm:$0xff]
  %v84 = vld [vmem:[%s0 + $0x198] sm:$0xff]
  %v85 = vld [vmem:[%s0 + $0x1a0] sm:$0xff]
  %v86 = vld [vmem:[%s0 + $0x1a8] sm:$0xff]
  %v87 = vld [vmem:[%s0 + $0x1b0] sm:$0xff]
  %v88 = vld [vmem:[%s0 + $0x1b8] sm:$0xff]
  %v89 = vld [vmem:[%s0 + $0x1c0] sm:$0xff]
  %v90 = vld [vmem:[%s0 + $0x1c8] sm:$0xff]
  %v91 = vld [vmem:[%s0 + $0x1d0] sm:$0xff]
  %v92 = vld [vmem:[%s0 + $0x1d8] sm:$0xff]
  %v93 = vld [vmem:[%s0 + $0x1e0] sm:$0xff]
  %v94 = vld [vmem:[%s0 + $0x1e8] sm:$0xff]
  %v95 = vld [vmem:[%s0 + $0x1f0] sm:$0xff]
  %v96 = vld [vmem:[%s0 + $0x1f8] sm:$0xff]
  %v97 = vld [vmem:[%s1] sm:$0xff]
  %v98 = vld [vmem:[%s1 + $0x8] sm:$0xff]
  %v99 = vld [vmem:[%s1 + $0x10] sm:$0xff]
  %v100 = vld [vmem:[%s1 + $0x18] sm:$0xff]
  %v101 = vld [vmem:[%s1 + $0x20] sm:$0xff]
  %v102 = vld [vmem:[%s1 + $0x28] sm:$0xff]
  %v103 = vld [vmem:[%s1 + $0x30] sm:$0xff]
  %v104 = vld [vmem:[%s1 + $0x38] sm:$0xff]
  %v105 = vld [vmem:[%s1 + $0x40] sm:$0xff]
  %v106 = vld [vmem:[%s1 + $0x48] sm:$0xff]
  %v107 = vld [vmem:[%s1 + $0x50] sm:$0xff]
  %v108 = vld [vmem:[%s1 + $0x58] sm:$0xff]
  %v109 = vld [vmem:[%s1 + $0x60] sm:$0xff]
  %v110 = vld [vmem:[%s1 + $0x68] sm:$0xff]
  %v111 = vld [vmem:[%s1 + $0x70] sm:$0xff]
  %v112 = vld [vmem:[%s1 + $0x78] sm:$0xff]
  %v113 = vld [vmem:[%s1 + $0x80] sm:$0xff]
  %v114 = vld [vmem:[%s1 + $0x88] sm:$0xff]
  %v115 = vld [vmem:[%s1 + $0x90] sm:$0xff]
  %v116 = vld [vmem:[%s1 + $0x98] sm:$0xff]
  %v117 = vld [vmem:[%s1 + $0xa0] sm:$0xff]
  %v118 = vld [vmem:[%s1 + $0xa8] sm:$0xff]
  %v119 = vld [vmem:[%s1 + $0xb0] sm:$0xff]
  %v120 = vld [vmem:[%s1 + $0xb8] sm:$0xff]
  %v121 = vld [vmem:[%s1 + $0xc0] sm:$0xff]
  %v122 = vld [vmem:[%s1 + $0xc8] sm:$0xff]
  %v123 = vld [vmem:[%s1 + $0xd0] sm:$0xff]
  %v124 = vld [vmem:[%s1 + $0xd8] sm:$0xff]
  %v125 = vld [vmem:[%s1 + $0xe0] sm:$0xff]
  %v126 = vld [vmem:[%s1 + $0xe8] sm:$0xff]
  %v127 = vld [vmem:[%s1 + $0xf0] sm:$0xff]
  %v128 = vld [vmem:[%s1 + $0xf8] sm:$0xff]
  %v129 = vld [vmem:[%s1 + $0x100] sm:$0xff]
  %v130 = vld [vmem:[%s1 + $0x108] sm:$0xff]
  %v131 = vld [vmem:[%s1 + $0x110] sm:$0xff]
  %v132 = vld [vmem:[%s1 + $0x118] sm:$0xff]
  %v133 = vld [vmem:[%s1 + $0x120] sm:$0xff]
  %v134 = vld [vmem:[%s1 + $0x128] sm:$0xff]
  %v135 = vld [vmem:[%s1 + $0x130] sm:$0xff]
  %v136 = vld [vmem:[%s1 + $0x138] sm:$0xff]
  %v137 = vld [vmem:[%s1 + $0x140] sm:$0xff]
  %v138 = vld [vmem:[%s1 + $0x148] sm:$0xff]
  %v139 = vld [vmem:[%s1 + $0x150] sm:$0xff]
  %v140 = vld [vmem:[%s1 + $0x158] sm:$0xff]
  %v141 = vld [vmem:[%s1 + $0x160] sm:$0xff]
  %v142 = vld [vmem:[%s1 + $0x168] sm:$0xff]
  %v143 = vld [vmem:[%s1 + $0x170] sm:$0xff]
  %v144 = vld [vmem:[%s1 + $0x178] sm:$0xff]
  %v145 = vld [vmem:[%s1 + $0x180] sm:$0xff]
  %v146 = vld [vmem:[%s1 + $0x188] sm:$0xff]
  %v147 = vld [vmem:[%s1 + $0x190] sm:$0xff]
  %v148 = vld [vmem:[%s1 + $0x198] sm:$0xff]
  %v149 = vld [vmem:[%s1 + $0x1a0] sm:$0xff]
  %v150 = vld [vmem:[%s1 + $0x1a8] sm:$0xff]
  %v151 = vld [vmem:[%s1 + $0x1b0] sm:$0xff]
  %v152 = vld [vmem:[%s1 + $0x1b8] sm:$0xff]
  %v153 = vld [vmem:[%s1 + $0x1c0] sm:$0xff]
  %v154 = vld [vmem:[%s1 + $0x1c8] sm:$0xff]
  %v155 = vld [vmem:[%s1 + $0x1d0] sm:$0xff]
  %v156 = vld [vmem:[%s1 + $0x1d8] sm:$0xff]
  %v157 = vld [vmem:[%s1 + $0x1e0] sm:$0xff]
  %v158 = vld [vmem:[%s1 + $0x1e8] sm:$0xff]
  %v159 = vld [vmem:[%s1 + $0x1f0] sm:$0xff]
  %v160 = vld [vmem:[%s1 + $0x1f8] sm:$0xff]
  %v161 = vld [vmem:[%s3] sm:$0x3]
  %v162 = vpack.c.bf16 %v34, %v33
  %v163 = vpack.c.bf16 %v36, %v35
  %v164 = vpack.c.bf16 %v38, %v37
  %v165 = vpack.c.bf16 %v40, %v39
  %v166 = vpack.c.bf16 %v42, %v41
  %v167 = vpack.c.bf16 %v44, %v43
  %v168 = vpack.c.bf16 %v46, %v45
  %v169 = vpack.c.bf16 %v48, %v47
  %v170 = vpack.c.bf16 %v50, %v49
  %v171 = vpack.c.bf16 %v52, %v51
  %v172 = vpack.c.bf16 %v54, %v53
  %v173 = vpack.c.bf16 %v56, %v55
  %v174 = vpack.c.bf16 %v58, %v57
  %v175 = vpack.c.bf16 %v60, %v59
  %v176 = vpack.c.bf16 %v62, %v61
  %v177 = vpack.c.bf16 %v64, %v63
  %v178 = vpack.c.bf16 %v66, %v65
  %v179 = vpack.c.bf16 %v68, %v67
  %v180 = vpack.c.bf16 %v70, %v69
  %v181 = vpack.c.bf16 %v72, %v71
  %v182 = vpack.c.bf16 %v74, %v73
  %v183 = vpack.c.bf16 %v76, %v75
  %v184 = vpack.c.bf16 %v78, %v77
  %v185 = vpack.c.bf16 %v80, %v79
  %v186 = vpack.c.bf16 %v82, %v81
  %v187 = vpack.c.bf16 %v84, %v83
  %v188 = vpack.c.bf16 %v86, %v85
  %v189 = vpack.c.bf16 %v88, %v87
  %v190 = vpack.c.bf16 %v90, %v89
  %v191 = vpack.c.bf16 %v92, %v91
  %v192 = vpack.c.bf16 %v94, %v93
  %v193 = vpack.c.bf16 %v96, %v95
  %v194 = vld [vmem:[%s2] sm:$0xf]
  %v195 = vld [vmem:[%s2 + $0x4] sm:$0xf]
  %v196 = vld [vmem:[%s2 + $0x8] sm:$0xf]
  %v197 = vld [vmem:[%s2 + $0xc] sm:$0xf]
  %v198 = vld [vmem:[%s2 + $0x10] sm:$0xf]
  %v199 = vlaneseq
  %v200 = vshrl.u32 %v199, 7
  %v201 = vsub.s32 0, %v200
  %v202 = vrot.slane %v161, %v201
  %v208 = vunpack.c.l.b16 %v194
  %v209 = vunpack.c.l.b16 %v195
  %v210 = vunpack.c.l.b16 %v196
  %v211 = vunpack.c.l.b16 %v197
  %v212 = vunpack.c.l.b16 %v198
  %v213 = vpack.c.b16 %v209, %v208
  %v214 = vpack.c.b16 %v211, %v210
  %v215 = vpack.c.b16 %v212, %v212
  %vm218 = vcmask 318464
  %v220 = vsel %vm218, %v162, 0
  %v223 = vsel %vm218, %v163, 0
  %v226 = vsel %vm218, %v164, 0
  %v229 = vsel %vm218, %v165, 0
  %v232 = vsel %vm218, %v166, 0
  %v235 = vsel %vm218, %v167, 0
  %v238 = vsel %vm218, %v168, 0
  %v241 = vsel %vm218, %v169, 0
  %v244 = vsel %vm218, %v170, 0
  %v247 = vsel %vm218, %v171, 0
  %v250 = vsel %vm218, %v172, 0
  %v253 = vsel %vm218, %v173, 0
  %v256 = vsel %vm218, %v174, 0
  %v259 = vsel %vm218, %v175, 0
  %v262 = vsel %vm218, %v176, 0
  %v265 = vsel %vm218, %v177, 0
  %v268 = vsel %vm218, %v178, 0
  %v271 = vsel %vm218, %v179, 0
  %v274 = vsel %vm218, %v180, 0
  %v277 = vsel %vm218, %v181, 0
  %v280 = vsel %vm218, %v182, 0
  %v283 = vsel %vm218, %v183, 0
  %v286 = vsel %vm218, %v184, 0
  %v289 = vsel %vm218, %v185, 0
  %v292 = vsel %vm218, %v186, 0
  %v295 = vsel %vm218, %v187, 0
  %v298 = vsel %vm218, %v188, 0
  %v301 = vsel %vm218, %v189, 0
  %v304 = vsel %vm218, %v190, 0
  %v307 = vsel %vm218, %v191, 0
  %v310 = vsel %vm218, %v192, 0
  %v313 = vsel %vm218, %v193, 0
  %vm315 = vcmask 1042432
  %vm316 = vcmask 1043456
  %v317 = vsel %vm315, 4294967295, 65535
  %v318 = vsel %vm316, %v317, 0
  %v320 = vand.u32 %v215, %v318
  %322 = vmatprep.subr.bf16.mxu0 0
  %323 = vmatpush1.bf16.msra.mxu0 0
  %324 = vmatprep.subr.bf16.mxu0 0
  %325 = vmatpush1.bf16.msra.mxu0 0
  %326 = vmatprep.subr.bf16.mxu0 0
  %327 = vmatpush1.bf16.msra.mxu0 0
  %328 = vmatprep.subr.bf16.mxu0 0
  %329 = vmatpush1.bf16.msra.mxu0 0
  %330 = vmatprep.subr.bf16.mxu0 0
  %331 = vmatpush1.bf16.msra.mxu0 0
  %332 = vmatprep.subr.bf16.mxu0 0
  %333 = vmatpush1.bf16.msra.mxu0 %v320
  %334 = vmatprep.subr.bf16.mxu0 0
  %335 = vmatpush1.bf16.msra.mxu0 %v214
  %336 = vmatprep.subr.bf16.mxu0 0
  %337 = vmatpush1.bf16.msra.mxu0 %v213
  %338 = vmatprep.subr.bf16.mxu0 0
  %339 = vmatpush2.bf16.msra.mxu0 0
  %340 = vmatprep.subr.bf16.mxu0 0
  %341 = vmatpush2.bf16.msra.mxu0 0
  %342 = vmatprep.subr.bf16.mxu0 0
  %343 = vmatpush2.bf16.msra.mxu0 0
  %344 = vmatprep.subr.bf16.mxu0 0
  %345 = vmatpush2.bf16.msra.mxu0 0
  %346 = vmatprep.subr.bf16.mxu0 0
  %347 = vmatpush2.bf16.msra.mxu0 0
  %348 = vmatprep.subr.bf16.mxu0 0
  %349 = vmatpush2.bf16.msra.mxu0 0
  %350 = vmatprep.subr.bf16.mxu0 0
  %351 = vmatpush2.bf16.msra.mxu0 0
  %352 = vmatprep.subr.bf16.mxu0 0
  %353 = vmatpush2.bf16.msra.mxu0 0
  %354 = vmatprep.mubr.bf16.mxu0 0
  %355 = vmatmul.mubr.bf16.gmra.mxu0 %v220
  %v356 = vpop.f32.mrf.mxu0
  %v357 = vadd.f32 %v202, %v356
  %v358 = vpop.f32.mrf.mxu0
  %v359 = vpop.f32.mrf.mxu0
  %v360 = vadd.f32 %v202, %v359
  %v361 = vpop.f32.mrf.mxu0
  %362 = vmatprep.mubr.bf16.mxu0 0
  %363 = vmatmul.mubr.bf16.gmra.mxu0 %v223
  %v364 = vpop.f32.mrf.mxu0
  %v365 = vadd.f32 %v202, %v364
  %v366 = vpop.f32.mrf.mxu0
  %v367 = vpop.f32.mrf.mxu0
  %v368 = vadd.f32 %v202, %v367
  %v369 = vpop.f32.mrf.mxu0
  %370 = vmatprep.mubr.bf16.mxu0 0
  %371 = vmatmul.mubr.bf16.gmra.mxu0 %v226
  %v372 = vpop.f32.mrf.mxu0
  %v373 = vadd.f32 %v202, %v372
  %v374 = vpop.f32.mrf.mxu0
  %v375 = vpop.f32.mrf.mxu0
  %v376 = vadd.f32 %v202, %v375
  %v377 = vpop.f32.mrf.mxu0
  %378 = vmatprep.mubr.bf16.mxu0 0
  %379 = vmatmul.mubr.bf16.gmra.mxu0 %v229
  %v380 = vpop.f32.mrf.mxu0
  %v381 = vadd.f32 %v202, %v380
  %v382 = vpop.f32.mrf.mxu0
  %v383 = vpop.f32.mrf.mxu0
  %v384 = vadd.f32 %v202, %v383
  %v385 = vpop.f32.mrf.mxu0
  %386 = vmatprep.mubr.bf16.mxu0 0
  %387 = vmatmul.mubr.bf16.gmra.mxu0 %v232
  %v388 = vpop.f32.mrf.mxu0
  %v389 = vadd.f32 %v202, %v388
  %v390 = vpop.f32.mrf.mxu0
  %v391 = vpop.f32.mrf.mxu0
  %v392 = vadd.f32 %v202, %v391
  %v393 = vpop.f32.mrf.mxu0
  %394 = vmatprep.mubr.bf16.mxu0 0
  %395 = vmatmul.mubr.bf16.gmra.mxu0 %v235
  %v396 = vpop.f32.mrf.mxu0
  %v397 = vadd.f32 %v202, %v396
  %v398 = vpop.f32.mrf.mxu0
  %v399 = vpop.f32.mrf.mxu0
  %v400 = vadd.f32 %v202, %v399
  %v401 = vpop.f32.mrf.mxu0
  %402 = vmatprep.mubr.bf16.mxu0 0
  %403 = vmatmul.mubr.bf16.gmra.mxu0 %v238
  %v404 = vpop.f32.mrf.mxu0
  %v405 = vadd.f32 %v202, %v404
  %v406 = vpop.f32.mrf.mxu0
  %v407 = vpop.f32.mrf.mxu0
  %v408 = vadd.f32 %v202, %v407
  %v409 = vpop.f32.mrf.mxu0
  %410 = vmatprep.mubr.bf16.mxu0 0
  %411 = vmatmul.mubr.bf16.gmra.mxu0 %v241
  %v412 = vpop.f32.mrf.mxu0
  %v413 = vadd.f32 %v202, %v412
  %v414 = vpop.f32.mrf.mxu0
  %v415 = vpop.f32.mrf.mxu0
  %v416 = vadd.f32 %v202, %v415
  %v417 = vpop.f32.mrf.mxu0
  %418 = vmatprep.mubr.bf16.mxu0 0
  %419 = vmatmul.mubr.bf16.gmra.mxu0 %v244
  %v420 = vpop.f32.mrf.mxu0
  %v421 = vadd.f32 %v202, %v420
  %v422 = vpop.f32.mrf.mxu0
  %v423 = vpop.f32.mrf.mxu0
  %v424 = vadd.f32 %v202, %v423
  %v425 = vpop.f32.mrf.mxu0
  %426 = vmatprep.mubr.bf16.mxu0 0
  %427 = vmatmul.mubr.bf16.gmra.mxu0 %v247
  %v428 = vpop.f32.mrf.mxu0
  %v429 = vadd.f32 %v202, %v428
  %v430 = vpop.f32.mrf.mxu0
  %v431 = vpop.f32.mrf.mxu0
  %v432 = vadd.f32 %v202, %v431
  %v433 = vpop.f32.mrf.mxu0
  %434 = vmatprep.mubr.bf16.mxu0 0
  %435 = vmatmul.mubr.bf16.gmra.mxu0 %v250
  %v436 = vpop.f32.mrf.mxu0
  %v437 = vadd.f32 %v202, %v436
  %v438 = vpop.f32.mrf.mxu0
  %v439 = vpop.f32.mrf.mxu0
  %v440 = vadd.f32 %v202, %v439
  %v441 = vpop.f32.mrf.mxu0
  %442 = vmatprep.mubr.bf16.mxu0 0
  %443 = vmatmul.mubr.bf16.gmra.mxu0 %v253
  %v444 = vpop.f32.mrf.mxu0
  %v445 = vadd.f32 %v202, %v444
  %v446 = vpop.f32.mrf.mxu0
  %v447 = vpop.f32.mrf.mxu0
  %v448 = vadd.f32 %v202, %v447
  %v449 = vpop.f32.mrf.mxu0
  %450 = vmatprep.mubr.bf16.mxu0 0
  %451 = vmatmul.mubr.bf16.gmra.mxu0 %v256
  %v452 = vpop.f32.mrf.mxu0
  %v453 = vadd.f32 %v202, %v452
  %v454 = vpop.f32.mrf.mxu0
  %v455 = vpop.f32.mrf.mxu0
  %v456 = vadd.f32 %v202, %v455
  %v457 = vpop.f32.mrf.mxu0
  %458 = vmatprep.mubr.bf16.mxu0 0
  %459 = vmatmul.mubr.bf16.gmra.mxu0 %v259
  %v460 = vpop.f32.mrf.mxu0
  %v461 = vadd.f32 %v202, %v460
  %v462 = vpop.f32.mrf.mxu0
  %v463 = vpop.f32.mrf.mxu0
  %v464 = vadd.f32 %v202, %v463
  %v465 = vpop.f32.mrf.mxu0
  %466 = vmatprep.mubr.bf16.mxu0 0
  %467 = vmatmul.mubr.bf16.gmra.mxu0 %v262
  %v468 = vpop.f32.mrf.mxu0
  %v469 = vadd.f32 %v202, %v468
  %v470 = vpop.f32.mrf.mxu0
  %v471 = vpop.f32.mrf.mxu0
  %v472 = vadd.f32 %v202, %v471
  %v473 = vpop.f32.mrf.mxu0
  %474 = vmatprep.mubr.bf16.mxu0 0
  %475 = vmatmul.mubr.bf16.gmra.mxu0 %v265
  %v476 = vpop.f32.mrf.mxu0
  %v477 = vadd.f32 %v202, %v476
  %v478 = vpop.f32.mrf.mxu0
  %v479 = vpop.f32.mrf.mxu0
  %v480 = vadd.f32 %v202, %v479
  %v481 = vpop.f32.mrf.mxu0
  %482 = vmatprep.mubr.bf16.mxu0 0
  %483 = vmatmul.mubr.bf16.gmra.mxu0 %v268
  %v484 = vpop.f32.mrf.mxu0
  %v485 = vadd.f32 %v202, %v484
  %v486 = vpop.f32.mrf.mxu0
  %v487 = vpop.f32.mrf.mxu0
  %v488 = vadd.f32 %v202, %v487
  %v489 = vpop.f32.mrf.mxu0
  %490 = vmatprep.mubr.bf16.mxu0 0
  %491 = vmatmul.mubr.bf16.gmra.mxu0 %v271
  %v492 = vpop.f32.mrf.mxu0
  %v493 = vadd.f32 %v202, %v492
  %v494 = vpop.f32.mrf.mxu0
  %v495 = vpop.f32.mrf.mxu0
  %v496 = vadd.f32 %v202, %v495
  %v497 = vpop.f32.mrf.mxu0
  %498 = vmatprep.mubr.bf16.mxu0 0
  %499 = vmatmul.mubr.bf16.gmra.mxu0 %v274
  %v500 = vpop.f32.mrf.mxu0
  %v501 = vadd.f32 %v202, %v500
  %v502 = vpop.f32.mrf.mxu0
  %v503 = vpop.f32.mrf.mxu0
  %v504 = vadd.f32 %v202, %v503
  %v505 = vpop.f32.mrf.mxu0
  %506 = vmatprep.mubr.bf16.mxu0 0
  %507 = vmatmul.mubr.bf16.gmra.mxu0 %v277
  %v508 = vpop.f32.mrf.mxu0
  %v509 = vadd.f32 %v202, %v508
  %v510 = vpop.f32.mrf.mxu0
  %v511 = vpop.f32.mrf.mxu0
  %v512 = vadd.f32 %v202, %v511
  %v513 = vpop.f32.mrf.mxu0
  %514 = vmatprep.mubr.bf16.mxu0 0
  %515 = vmatmul.mubr.bf16.gmra.mxu0 %v280
  %v516 = vpop.f32.mrf.mxu0
  %v517 = vadd.f32 %v202, %v516
  %v518 = vpop.f32.mrf.mxu0
  %v519 = vpop.f32.mrf.mxu0
  %v520 = vadd.f32 %v202, %v519
  %v521 = vpop.f32.mrf.mxu0
  %522 = vmatprep.mubr.bf16.mxu0 0
  %523 = vmatmul.mubr.bf16.gmra.mxu0 %v283
  %v524 = vpop.f32.mrf.mxu0
  %v525 = vadd.f32 %v202, %v524
  %v526 = vpop.f32.mrf.mxu0
  %v527 = vpop.f32.mrf.mxu0
  %v528 = vadd.f32 %v202, %v527
  %v529 = vpop.f32.mrf.mxu0
  %530 = vmatprep.mubr.bf16.mxu0 0
  %531 = vmatmul.mubr.bf16.gmra.mxu0 %v286
  %v532 = vpop.f32.mrf.mxu0
  %v533 = vadd.f32 %v202, %v532
  %v534 = vpop.f32.mrf.mxu0
  %v535 = vpop.f32.mrf.mxu0
  %v536 = vadd.f32 %v202, %v535
  %v537 = vpop.f32.mrf.mxu0
  %538 = vmatprep.mubr.bf16.mxu0 0
  %539 = vmatmul.mubr.bf16.gmra.mxu0 %v289
  %v540 = vpop.f32.mrf.mxu0
  %v541 = vadd.f32 %v202, %v540
  %v542 = vpop.f32.mrf.mxu0
  %v543 = vpop.f32.mrf.mxu0
  %v544 = vadd.f32 %v202, %v543
  %v545 = vpop.f32.mrf.mxu0
  %546 = vmatprep.mubr.bf16.mxu0 0
  %547 = vmatmul.mubr.bf16.gmra.mxu0 %v292
  %v548 = vpop.f32.mrf.mxu0
  %v549 = vadd.f32 %v202, %v548
  %v550 = vpop.f32.mrf.mxu0
  %v551 = vpop.f32.mrf.mxu0
  %v552 = vadd.f32 %v202, %v551
  %v553 = vpop.f32.mrf.mxu0
  %554 = vmatprep.mubr.bf16.mxu0 0
  %555 = vmatmul.mubr.bf16.gmra.mxu0 %v295
  %v556 = vpop.f32.mrf.mxu0
  %v557 = vadd.f32 %v202, %v556
  %v558 = vpop.f32.mrf.mxu0
  %v559 = vpop.f32.mrf.mxu0
  %v560 = vadd.f32 %v202, %v559
  %v561 = vpop.f32.mrf.mxu0
  %562 = vmatprep.mubr.bf16.mxu0 0
  %563 = vmatmul.mubr.bf16.gmra.mxu0 %v298
  %v564 = vpop.f32.mrf.mxu0
  %v565 = vadd.f32 %v202, %v564
  %v566 = vpop.f32.mrf.mxu0
  %v567 = vpop.f32.mrf.mxu0
  %v568 = vadd.f32 %v202, %v567
  %v569 = vpop.f32.mrf.mxu0
  %570 = vmatprep.mubr.bf16.mxu0 0
  %571 = vmatmul.mubr.bf16.gmra.mxu0 %v301
  %v572 = vpop.f32.mrf.mxu0
  %v573 = vadd.f32 %v202, %v572
  %v574 = vpop.f32.mrf.mxu0
  %v575 = vpop.f32.mrf.mxu0
  %v576 = vadd.f32 %v202, %v575
  %v577 = vpop.f32.mrf.mxu0
  %578 = vmatprep.mubr.bf16.mxu0 0
  %579 = vmatmul.mubr.bf16.gmra.mxu0 %v304
  %v580 = vpop.f32.mrf.mxu0
  %v581 = vadd.f32 %v202, %v580
  %v582 = vpop.f32.mrf.mxu0
  %v583 = vpop.f32.mrf.mxu0
  %v584 = vadd.f32 %v202, %v583
  %v585 = vpop.f32.mrf.mxu0
  %586 = vmatprep.mubr.bf16.mxu0 0
  %587 = vmatmul.mubr.bf16.gmra.mxu0 %v307
  %v588 = vpop.f32.mrf.mxu0
  %v589 = vadd.f32 %v202, %v588
  %v590 = vpop.f32.mrf.mxu0
  %v591 = vpop.f32.mrf.mxu0
  %v592 = vadd.f32 %v202, %v591
  %v593 = vpop.f32.mrf.mxu0
  %594 = vmatprep.mubr.bf16.mxu0 0
  %595 = vmatmul.mubr.bf16.gmra.mxu0 %v310
  %v596 = vpop.f32.mrf.mxu0
  %v597 = vadd.f32 %v202, %v596
  %v598 = vpop.f32.mrf.mxu0
  %v599 = vpop.f32.mrf.mxu0
  %v600 = vadd.f32 %v202, %v599
  %v601 = vpop.f32.mrf.mxu0
  %602 = vmatprep.mubr.bf16.mxu0 0
  %603 = vmatmul.mubr.bf16.gmra.mxu0 %v313
  %v604 = vpop.f32.mrf.mxu0
  %v605 = vadd.f32 %v202, %v604
  %v606 = vpop.f32.mrf.mxu0
  %v607 = vpop.f32.mrf.mxu0
  %v608 = vadd.f32 %v202, %v607
  %v609 = vpop.f32.mrf.mxu0
  %610 = vdwg.mxu0
  %v611 = vmax.f32 %v357, 0.0
  %v612 = vmax.f32 %v360, 0.0
  %v613 = vmax.f32 %v365, 0.0
  %v614 = vmax.f32 %v368, 0.0
  %v615 = vmax.f32 %v373, 0.0
  %v616 = vmax.f32 %v376, 0.0
  %v617 = vmax.f32 %v381, 0.0
  %v618 = vmax.f32 %v384, 0.0
  %v619 = vmax.f32 %v389, 0.0
  %v620 = vmax.f32 %v392, 0.0
  %v621 = vmax.f32 %v397, 0.0
  %v622 = vmax.f32 %v400, 0.0
  %v623 = vmax.f32 %v405, 0.0
  %v624 = vmax.f32 %v408, 0.0
  %v625 = vmax.f32 %v413, 0.0
  %v626 = vmax.f32 %v416, 0.0
  %v627 = vmax.f32 %v421, 0.0
  %v628 = vmax.f32 %v424, 0.0
  %v629 = vmax.f32 %v429, 0.0
  %v630 = vmax.f32 %v432, 0.0
  %v631 = vmax.f32 %v437, 0.0
  %v632 = vmax.f32 %v440, 0.0
  %v633 = vmax.f32 %v445, 0.0
  %v634 = vmax.f32 %v448, 0.0
  %v635 = vmax.f32 %v453, 0.0
  %v636 = vmax.f32 %v456, 0.0
  %v637 = vmax.f32 %v461, 0.0
  %v638 = vmax.f32 %v464, 0.0
  %v639 = vmax.f32 %v469, 0.0
  %v640 = vmax.f32 %v472, 0.0
  %v641 = vmax.f32 %v477, 0.0
  %v642 = vmax.f32 %v480, 0.0
  %v643 = vmax.f32 %v485, 0.0
  %v644 = vmax.f32 %v488, 0.0
  %v645 = vmax.f32 %v493, 0.0
  %v646 = vmax.f32 %v496, 0.0
  %v647 = vmax.f32 %v501, 0.0
  %v648 = vmax.f32 %v504, 0.0
  %v649 = vmax.f32 %v509, 0.0
  %v650 = vmax.f32 %v512, 0.0
  %v651 = vmax.f32 %v517, 0.0
  %v652 = vmax.f32 %v520, 0.0
  %v653 = vmax.f32 %v525, 0.0
  %v654 = vmax.f32 %v528, 0.0
  %v655 = vmax.f32 %v533, 0.0
  %v656 = vmax.f32 %v536, 0.0
  %v657 = vmax.f32 %v541, 0.0
  %v658 = vmax.f32 %v544, 0.0
  %v659 = vmax.f32 %v549, 0.0
  %v660 = vmax.f32 %v552, 0.0
  %v661 = vmax.f32 %v557, 0.0
  %v662 = vmax.f32 %v560, 0.0
  %v663 = vmax.f32 %v565, 0.0
  %v664 = vmax.f32 %v568, 0.0
  %v665 = vmax.f32 %v573, 0.0
  %v666 = vmax.f32 %v576, 0.0
  %v667 = vmax.f32 %v581, 0.0
  %v668 = vmax.f32 %v584, 0.0
  %v669 = vmax.f32 %v589, 0.0
  %v670 = vmax.f32 %v592, 0.0
  %v671 = vmax.f32 %v597, 0.0
  %v672 = vmax.f32 %v600, 0.0
  %v673 = vmax.f32 %v605, 0.0
  %v674 = vmax.f32 %v608, 0.0
  %v675 = vpack.c.bf16 %v612, %v611
  %v676 = vpack.c.bf16 %v614, %v613
  %v677 = vpack.c.bf16 %v616, %v615
  %v678 = vpack.c.bf16 %v618, %v617
  %v679 = vpack.c.bf16 %v620, %v619
  %v680 = vpack.c.bf16 %v622, %v621
  %v681 = vpack.c.bf16 %v624, %v623
  %v682 = vpack.c.bf16 %v626, %v625
  %v683 = vpack.c.bf16 %v628, %v627
  %v684 = vpack.c.bf16 %v630, %v629
  %v685 = vpack.c.bf16 %v632, %v631
  %v686 = vpack.c.bf16 %v634, %v633
  %v687 = vpack.c.bf16 %v636, %v635
  %v688 = vpack.c.bf16 %v638, %v637
  %v689 = vpack.c.bf16 %v640, %v639
  %v690 = vpack.c.bf16 %v642, %v641
  %v691 = vpack.c.bf16 %v644, %v643
  %v692 = vpack.c.bf16 %v646, %v645
  %v693 = vpack.c.bf16 %v648, %v647
  %v694 = vpack.c.bf16 %v650, %v649
  %v695 = vpack.c.bf16 %v652, %v651
  %v696 = vpack.c.bf16 %v654, %v653
  %v697 = vpack.c.bf16 %v656, %v655
  %v698 = vpack.c.bf16 %v658, %v657
  %v699 = vpack.c.bf16 %v660, %v659
  %v700 = vpack.c.bf16 %v662, %v661
  %v701 = vpack.c.bf16 %v664, %v663
  %v702 = vpack.c.bf16 %v666, %v665
  %v703 = vpack.c.bf16 %v668, %v667
  %v704 = vpack.c.bf16 %v670, %v669
  %v705 = vpack.c.bf16 %v672, %v671
  %v706 = vpack.c.bf16 %v674, %v673
  %v707 = vld [vmem:[%s4] sm:$0xf]
  %v708 = vld [vmem:[%s4 + $0x4] sm:$0xf]
  %v709 = vld [vmem:[%s4 + $0x8] sm:$0xf]
  %v710 = vld [vmem:[%s4 + $0xc] sm:$0xf]
  %v711 = vld [vmem:[%s4 + $0x10] sm:$0xf]
  %v712 = vld [vmem:[%s4 + $0x14] sm:$0xf]
  %v713 = vld [vmem:[%s4 + $0x18] sm:$0xf]
  %v714 = vld [vmem:[%s4 + $0x1c] sm:$0xf]
  %v715 = vld [vmem:[%s4 + $0x20] sm:$0xf]
  %v716 = vld [vmem:[%s4 + $0x24] sm:$0xf]
  %v717 = vld [vmem:[%s4 + $0x28] sm:$0xf]
  %v718 = vld [vmem:[%s4 + $0x2c] sm:$0xf]
  %v719 = vld [vmem:[%s4 + $0x30] sm:$0xf]
  %v720 = vld [vmem:[%s4 + $0x34] sm:$0xf]
  %v721 = vld [vmem:[%s4 + $0x38] sm:$0xf]
  %v722 = vld [vmem:[%s4 + $0x3c] sm:$0xf]
  %v723 = vlaneseq
  %v724 = vshrl.u32 %v723, 7
  %v725 = vsub.s32 1, %v724
  %v726 = vrot.slane %v161, %v725
  %v743 = vunpack.c.l.b16 %v707
  %v744 = vunpack.c.l.b16 %v708
  %v745 = vunpack.c.l.b16 %v709
  %v746 = vunpack.c.l.b16 %v710
  %v747 = vunpack.c.l.b16 %v711
  %v748 = vunpack.c.l.b16 %v712
  %v749 = vunpack.c.l.b16 %v713
  %v750 = vunpack.c.l.b16 %v714
  %v751 = vunpack.c.l.b16 %v715
  %v752 = vunpack.c.l.b16 %v716
  %v753 = vunpack.c.l.b16 %v717
  %v754 = vunpack.c.l.b16 %v718
  %v755 = vunpack.c.l.b16 %v719
  %v756 = vunpack.c.l.b16 %v720
  %v757 = vunpack.c.l.b16 %v721
  %v758 = vunpack.c.l.b16 %v722
  %v759 = vpack.c.b16 %v744, %v743
  %v760 = vpack.c.b16 %v746, %v745
  %v761 = vpack.c.b16 %v748, %v747
  %v762 = vpack.c.b16 %v750, %v749
  %v763 = vpack.c.b16 %v752, %v751
  %v764 = vpack.c.b16 %v754, %v753
  %v765 = vpack.c.b16 %v756, %v755
  %v766 = vpack.c.b16 %v758, %v757
  %775 = vmatprep.subr.bf16.mxu0 0
  %776 = vmatpush1.bf16.msra.mxu0 %v766
  %777 = vmatprep.subr.bf16.mxu0 0
  %778 = vmatpush1.bf16.msra.mxu0 %v765
  %779 = vmatprep.subr.bf16.mxu0 0
  %780 = vmatpush1.bf16.msra.mxu0 %v764
  %781 = vmatprep.subr.bf16.mxu0 0
  %782 = vmatpush1.bf16.msra.mxu0 %v763
  %783 = vmatprep.subr.bf16.mxu0 0
  %784 = vmatpush1.bf16.msra.mxu0 %v762
  %785 = vmatprep.subr.bf16.mxu0 0
  %786 = vmatpush1.bf16.msra.mxu0 %v761
  %787 = vmatprep.subr.bf16.mxu0 0
  %788 = vmatpush1.bf16.msra.mxu0 %v760
  %789 = vmatprep.subr.bf16.mxu0 0
  %790 = vmatpush1.bf16.msra.mxu0 %v759
  %791 = vmatprep.subr.bf16.mxu0 0
  %792 = vmatpush2.bf16.msra.mxu0 0
  %793 = vmatprep.subr.bf16.mxu0 0
  %794 = vmatpush2.bf16.msra.mxu0 0
  %795 = vmatprep.subr.bf16.mxu0 0
  %796 = vmatpush2.bf16.msra.mxu0 0
  %797 = vmatprep.subr.bf16.mxu0 0
  %798 = vmatpush2.bf16.msra.mxu0 0
  %799 = vmatprep.subr.bf16.mxu0 0
  %800 = vmatpush2.bf16.msra.mxu0 0
  %801 = vmatprep.subr.bf16.mxu0 0
  %802 = vmatpush2.bf16.msra.mxu0 0
  %803 = vmatprep.subr.bf16.mxu0 0
  %804 = vmatpush2.bf16.msra.mxu0 0
  %805 = vmatprep.subr.bf16.mxu0 0
  %806 = vmatpush2.bf16.msra.mxu0 0
  %807 = vmatprep.mubr.bf16.mxu0 0
  %808 = vmatmul.mubr.bf16.gmra.mxu0 %v675
  %v809 = vpop.f32.mrf.mxu0
  %v810 = vadd.f32 %v726, %v809
  %v811 = vpop.f32.mrf.mxu0
  %v812 = vpop.f32.mrf.mxu0
  %v813 = vadd.f32 %v726, %v812
  %v814 = vpop.f32.mrf.mxu0
  %815 = vmatprep.mubr.bf16.mxu0 0
  %816 = vmatmul.mubr.bf16.gmra.mxu0 %v676
  %v817 = vpop.f32.mrf.mxu0
  %v818 = vadd.f32 %v726, %v817
  %v819 = vpop.f32.mrf.mxu0
  %v820 = vpop.f32.mrf.mxu0
  %v821 = vadd.f32 %v726, %v820
  %v822 = vpop.f32.mrf.mxu0
  %823 = vmatprep.mubr.bf16.mxu0 0
  %824 = vmatmul.mubr.bf16.gmra.mxu0 %v677
  %v825 = vpop.f32.mrf.mxu0
  %v826 = vadd.f32 %v726, %v825
  %v827 = vpop.f32.mrf.mxu0
  %v828 = vpop.f32.mrf.mxu0
  %v829 = vadd.f32 %v726, %v828
  %v830 = vpop.f32.mrf.mxu0
  %831 = vmatprep.mubr.bf16.mxu0 0
  %832 = vmatmul.mubr.bf16.gmra.mxu0 %v678
  %v833 = vpop.f32.mrf.mxu0
  %v834 = vadd.f32 %v726, %v833
  %v835 = vpop.f32.mrf.mxu0
  %v836 = vpop.f32.mrf.mxu0
  %v837 = vadd.f32 %v726, %v836
  %v838 = vpop.f32.mrf.mxu0
  %839 = vmatprep.mubr.bf16.mxu0 0
  %840 = vmatmul.mubr.bf16.gmra.mxu0 %v679
  %v841 = vpop.f32.mrf.mxu0
  %v842 = vadd.f32 %v726, %v841
  %v843 = vpop.f32.mrf.mxu0
  %v844 = vpop.f32.mrf.mxu0
  %v845 = vadd.f32 %v726, %v844
  %v846 = vpop.f32.mrf.mxu0
  %847 = vmatprep.mubr.bf16.mxu0 0
  %848 = vmatmul.mubr.bf16.gmra.mxu0 %v680
  %v849 = vpop.f32.mrf.mxu0
  %v850 = vadd.f32 %v726, %v849
  %v851 = vpop.f32.mrf.mxu0
  %v852 = vpop.f32.mrf.mxu0
  %v853 = vadd.f32 %v726, %v852
  %v854 = vpop.f32.mrf.mxu0
  %855 = vmatprep.mubr.bf16.mxu0 0
  %856 = vmatmul.mubr.bf16.gmra.mxu0 %v681
  %v857 = vpop.f32.mrf.mxu0
  %v858 = vadd.f32 %v726, %v857
  %v859 = vpop.f32.mrf.mxu0
  %v860 = vpop.f32.mrf.mxu0
  %v861 = vadd.f32 %v726, %v860
  %v862 = vpop.f32.mrf.mxu0
  %863 = vmatprep.mubr.bf16.mxu0 0
  %864 = vmatmul.mubr.bf16.gmra.mxu0 %v682
  %v865 = vpop.f32.mrf.mxu0
  %v866 = vadd.f32 %v726, %v865
  %v867 = vpop.f32.mrf.mxu0
  %v868 = vpop.f32.mrf.mxu0
  %v869 = vadd.f32 %v726, %v868
  %v870 = vpop.f32.mrf.mxu0
  %871 = vmatprep.mubr.bf16.mxu0 0
  %872 = vmatmul.mubr.bf16.gmra.mxu0 %v683
  %v873 = vpop.f32.mrf.mxu0
  %v874 = vadd.f32 %v726, %v873
  %v875 = vpop.f32.mrf.mxu0
  %v876 = vpop.f32.mrf.mxu0
  %v877 = vadd.f32 %v726, %v876
  %v878 = vpop.f32.mrf.mxu0
  %879 = vmatprep.mubr.bf16.mxu0 0
  %880 = vmatmul.mubr.bf16.gmra.mxu0 %v684
  %v881 = vpop.f32.mrf.mxu0
  %v882 = vadd.f32 %v726, %v881
  %v883 = vpop.f32.mrf.mxu0
  %v884 = vpop.f32.mrf.mxu0
  %v885 = vadd.f32 %v726, %v884
  %v886 = vpop.f32.mrf.mxu0
  %887 = vmatprep.mubr.bf16.mxu0 0
  %888 = vmatmul.mubr.bf16.gmra.mxu0 %v685
  %v889 = vpop.f32.mrf.mxu0
  %v890 = vadd.f32 %v726, %v889
  %v891 = vpop.f32.mrf.mxu0
  %v892 = vpop.f32.mrf.mxu0
  %v893 = vadd.f32 %v726, %v892
  %v894 = vpop.f32.mrf.mxu0
  %895 = vmatprep.mubr.bf16.mxu0 0
  %896 = vmatmul.mubr.bf16.gmra.mxu0 %v686
  %v897 = vpop.f32.mrf.mxu0
  %v898 = vadd.f32 %v726, %v897
  %v899 = vpop.f32.mrf.mxu0
  %v900 = vpop.f32.mrf.mxu0
  %v901 = vadd.f32 %v726, %v900
  %v902 = vpop.f32.mrf.mxu0
  %903 = vmatprep.mubr.bf16.mxu0 0
  %904 = vmatmul.mubr.bf16.gmra.mxu0 %v687
  %v905 = vpop.f32.mrf.mxu0
  %v906 = vadd.f32 %v726, %v905
  %v907 = vpop.f32.mrf.mxu0
  %v908 = vpop.f32.mrf.mxu0
  %v909 = vadd.f32 %v726, %v908
  %v910 = vpop.f32.mrf.mxu0
  %911 = vmatprep.mubr.bf16.mxu0 0
  %912 = vmatmul.mubr.bf16.gmra.mxu0 %v688
  %v913 = vpop.f32.mrf.mxu0
  %v914 = vadd.f32 %v726, %v913
  %v915 = vpop.f32.mrf.mxu0
  %v916 = vpop.f32.mrf.mxu0
  %v917 = vadd.f32 %v726, %v916
  %v918 = vpop.f32.mrf.mxu0
  %919 = vmatprep.mubr.bf16.mxu0 0
  %920 = vmatmul.mubr.bf16.gmra.mxu0 %v689
  %v921 = vpop.f32.mrf.mxu0
  %v922 = vadd.f32 %v726, %v921
  %v923 = vpop.f32.mrf.mxu0
  %v924 = vpop.f32.mrf.mxu0
  %v925 = vadd.f32 %v726, %v924
  %v926 = vpop.f32.mrf.mxu0
  %927 = vmatprep.mubr.bf16.mxu0 0
  %928 = vmatmul.mubr.bf16.gmra.mxu0 %v690
  %v929 = vpop.f32.mrf.mxu0
  %v930 = vadd.f32 %v726, %v929
  %v931 = vpop.f32.mrf.mxu0
  %v932 = vpop.f32.mrf.mxu0
  %v933 = vadd.f32 %v726, %v932
  %v934 = vpop.f32.mrf.mxu0
  %935 = vmatprep.mubr.bf16.mxu0 0
  %936 = vmatmul.mubr.bf16.gmra.mxu0 %v691
  %v937 = vpop.f32.mrf.mxu0
  %v938 = vadd.f32 %v726, %v937
  %v939 = vpop.f32.mrf.mxu0
  %v940 = vpop.f32.mrf.mxu0
  %v941 = vadd.f32 %v726, %v940
  %v942 = vpop.f32.mrf.mxu0
  %943 = vmatprep.mubr.bf16.mxu0 0
  %944 = vmatmul.mubr.bf16.gmra.mxu0 %v692
  %v945 = vpop.f32.mrf.mxu0
  %v946 = vadd.f32 %v726, %v945
  %v947 = vpop.f32.mrf.mxu0
  %v948 = vpop.f32.mrf.mxu0
  %v949 = vadd.f32 %v726, %v948
  %v950 = vpop.f32.mrf.mxu0
  %951 = vmatprep.mubr.bf16.mxu0 0
  %952 = vmatmul.mubr.bf16.gmra.mxu0 %v693
  %v953 = vpop.f32.mrf.mxu0
  %v954 = vadd.f32 %v726, %v953
  %v955 = vpop.f32.mrf.mxu0
  %v956 = vpop.f32.mrf.mxu0
  %v957 = vadd.f32 %v726, %v956
  %v958 = vpop.f32.mrf.mxu0
  %959 = vmatprep.mubr.bf16.mxu0 0
  %960 = vmatmul.mubr.bf16.gmra.mxu0 %v694
  %v961 = vpop.f32.mrf.mxu0
  %v962 = vadd.f32 %v726, %v961
  %v963 = vpop.f32.mrf.mxu0
  %v964 = vpop.f32.mrf.mxu0
  %v965 = vadd.f32 %v726, %v964
  %v966 = vpop.f32.mrf.mxu0
  %967 = vmatprep.mubr.bf16.mxu0 0
  %968 = vmatmul.mubr.bf16.gmra.mxu0 %v695
  %v969 = vpop.f32.mrf.mxu0
  %v970 = vadd.f32 %v726, %v969
  %v971 = vpop.f32.mrf.mxu0
  %v972 = vpop.f32.mrf.mxu0
  %v973 = vadd.f32 %v726, %v972
  %v974 = vpop.f32.mrf.mxu0
  %975 = vmatprep.mubr.bf16.mxu0 0
  %976 = vmatmul.mubr.bf16.gmra.mxu0 %v696
  %v977 = vpop.f32.mrf.mxu0
  %v978 = vadd.f32 %v726, %v977
  %v979 = vpop.f32.mrf.mxu0
  %v980 = vpop.f32.mrf.mxu0
  %v981 = vadd.f32 %v726, %v980
  %v982 = vpop.f32.mrf.mxu0
  %983 = vmatprep.mubr.bf16.mxu0 0
  %984 = vmatmul.mubr.bf16.gmra.mxu0 %v697
  %v985 = vpop.f32.mrf.mxu0
  %v986 = vadd.f32 %v726, %v985
  %v987 = vpop.f32.mrf.mxu0
  %v988 = vpop.f32.mrf.mxu0
  %v989 = vadd.f32 %v726, %v988
  %v990 = vpop.f32.mrf.mxu0
  %991 = vmatprep.mubr.bf16.mxu0 0
  %992 = vmatmul.mubr.bf16.gmra.mxu0 %v698
  %v993 = vpop.f32.mrf.mxu0
  %v994 = vadd.f32 %v726, %v993
  %v995 = vpop.f32.mrf.mxu0
  %v996 = vpop.f32.mrf.mxu0
  %v997 = vadd.f32 %v726, %v996
  %v998 = vpop.f32.mrf.mxu0
  %999 = vmatprep.mubr.bf16.mxu0 0
  %1000 = vmatmul.mubr.bf16.gmra.mxu0 %v699
  %v1001 = vpop.f32.mrf.mxu0
  %v1002 = vadd.f32 %v726, %v1001
  %v1003 = vpop.f32.mrf.mxu0
  %v1004 = vpop.f32.mrf.mxu0
  %v1005 = vadd.f32 %v726, %v1004
  %v1006 = vpop.f32.mrf.mxu0
  %1007 = vmatprep.mubr.bf16.mxu0 0
  %1008 = vmatmul.mubr.bf16.gmra.mxu0 %v700
  %v1009 = vpop.f32.mrf.mxu0
  %v1010 = vadd.f32 %v726, %v1009
  %v1011 = vpop.f32.mrf.mxu0
  %v1012 = vpop.f32.mrf.mxu0
  %v1013 = vadd.f32 %v726, %v1012
  %v1014 = vpop.f32.mrf.mxu0
  %1015 = vmatprep.mubr.bf16.mxu0 0
  %1016 = vmatmul.mubr.bf16.gmra.mxu0 %v701
  %v1017 = vpop.f32.mrf.mxu0
  %v1018 = vadd.f32 %v726, %v1017
  %v1019 = vpop.f32.mrf.mxu0
  %v1020 = vpop.f32.mrf.mxu0
  %v1021 = vadd.f32 %v726, %v1020
  %v1022 = vpop.f32.mrf.mxu0
  %1023 = vmatprep.mubr.bf16.mxu0 0
  %1024 = vmatmul.mubr.bf16.gmra.mxu0 %v702
  %v1025 = vpop.f32.mrf.mxu0
  %v1026 = vadd.f32 %v726, %v1025
  %v1027 = vpop.f32.mrf.mxu0
  %v1028 = vpop.f32.mrf.mxu0
  %v1029 = vadd.f32 %v726, %v1028
  %v1030 = vpop.f32.mrf.mxu0
  %1031 = vmatprep.mubr.bf16.mxu0 0
  %1032 = vmatmul.mubr.bf16.gmra.mxu0 %v703
  %v1033 = vpop.f32.mrf.mxu0
  %v1034 = vadd.f32 %v726, %v1033
  %v1035 = vpop.f32.mrf.mxu0
  %v1036 = vpop.f32.mrf.mxu0
  %v1037 = vadd.f32 %v726, %v1036
  %v1038 = vpop.f32.mrf.mxu0
  %1039 = vmatprep.mubr.bf16.mxu0 0
  %1040 = vmatmul.mubr.bf16.gmra.mxu0 %v704
  %v1041 = vpop.f32.mrf.mxu0
  %v1042 = vadd.f32 %v726, %v1041
  %v1043 = vpop.f32.mrf.mxu0
  %v1044 = vpop.f32.mrf.mxu0
  %v1045 = vadd.f32 %v726, %v1044
  %v1046 = vpop.f32.mrf.mxu0
  %1047 = vmatprep.mubr.bf16.mxu0 0
  %1048 = vmatmul.mubr.bf16.gmra.mxu0 %v705
  %v1049 = vpop.f32.mrf.mxu0
  %v1050 = vadd.f32 %v726, %v1049
  %v1051 = vpop.f32.mrf.mxu0
  %v1052 = vpop.f32.mrf.mxu0
  %v1053 = vadd.f32 %v726, %v1052
  %v1054 = vpop.f32.mrf.mxu0
  %1055 = vmatprep.mubr.bf16.mxu0 0
  %1056 = vmatmul.mubr.bf16.gmra.mxu0 %v706
  %v1057 = vpop.f32.mrf.mxu0
  %v1058 = vadd.f32 %v726, %v1057
  %v1059 = vpop.f32.mrf.mxu0
  %v1060 = vpop.f32.mrf.mxu0
  %v1061 = vadd.f32 %v726, %v1060
  %v1062 = vpop.f32.mrf.mxu0
  %1063 = vdwg.mxu0
  %v1064 = vmax.f32 %v810, 0.0
  %v1065 = vmax.f32 %v813, 0.0
  %v1066 = vmax.f32 %v818, 0.0
  %v1067 = vmax.f32 %v821, 0.0
  %v1068 = vmax.f32 %v826, 0.0
  %v1069 = vmax.f32 %v829, 0.0
  %v1070 = vmax.f32 %v834, 0.0
  %v1071 = vmax.f32 %v837, 0.0
  %v1072 = vmax.f32 %v842, 0.0
  %v1073 = vmax.f32 %v845, 0.0
  %v1074 = vmax.f32 %v850, 0.0
  %v1075 = vmax.f32 %v853, 0.0
  %v1076 = vmax.f32 %v858, 0.0
  %v1077 = vmax.f32 %v861, 0.0
  %v1078 = vmax.f32 %v866, 0.0
  %v1079 = vmax.f32 %v869, 0.0
  %v1080 = vmax.f32 %v874, 0.0
  %v1081 = vmax.f32 %v877, 0.0
  %v1082 = vmax.f32 %v882, 0.0
  %v1083 = vmax.f32 %v885, 0.0
  %v1084 = vmax.f32 %v890, 0.0
  %v1085 = vmax.f32 %v893, 0.0
  %v1086 = vmax.f32 %v898, 0.0
  %v1087 = vmax.f32 %v901, 0.0
  %v1088 = vmax.f32 %v906, 0.0
  %v1089 = vmax.f32 %v909, 0.0
  %v1090 = vmax.f32 %v914, 0.0
  %v1091 = vmax.f32 %v917, 0.0
  %v1092 = vmax.f32 %v922, 0.0
  %v1093 = vmax.f32 %v925, 0.0
  %v1094 = vmax.f32 %v930, 0.0
  %v1095 = vmax.f32 %v933, 0.0
  %v1096 = vmax.f32 %v938, 0.0
  %v1097 = vmax.f32 %v941, 0.0
  %v1098 = vmax.f32 %v946, 0.0
  %v1099 = vmax.f32 %v949, 0.0
  %v1100 = vmax.f32 %v954, 0.0
  %v1101 = vmax.f32 %v957, 0.0
  %v1102 = vmax.f32 %v962, 0.0
  %v1103 = vmax.f32 %v965, 0.0
  %v1104 = vmax.f32 %v970, 0.0
  %v1105 = vmax.f32 %v973, 0.0
  %v1106 = vmax.f32 %v978, 0.0
  %v1107 = vmax.f32 %v981, 0.0
  %v1108 = vmax.f32 %v986, 0.0
  %v1109 = vmax.f32 %v989, 0.0
  %v1110 = vmax.f32 %v994, 0.0
  %v1111 = vmax.f32 %v997, 0.0
  %v1112 = vmax.f32 %v1002, 0.0
  %v1113 = vmax.f32 %v1005, 0.0
  %v1114 = vmax.f32 %v1010, 0.0
  %v1115 = vmax.f32 %v1013, 0.0
  %v1116 = vmax.f32 %v1018, 0.0
  %v1117 = vmax.f32 %v1021, 0.0
  %v1118 = vmax.f32 %v1026, 0.0
  %v1119 = vmax.f32 %v1029, 0.0
  %v1120 = vmax.f32 %v1034, 0.0
  %v1121 = vmax.f32 %v1037, 0.0
  %v1122 = vmax.f32 %v1042, 0.0
  %v1123 = vmax.f32 %v1045, 0.0
  %v1124 = vmax.f32 %v1050, 0.0
  %v1125 = vmax.f32 %v1053, 0.0
  %v1126 = vmax.f32 %v1058, 0.0
  %v1127 = vmax.f32 %v1061, 0.0
  %v1128 = vpack.c.bf16 %v1065, %v1064
  %v1129 = vpack.c.bf16 %v98, %v97
  %v1130 = vpack.c.bf16 %v1067, %v1066
  %v1131 = vpack.c.bf16 %v100, %v99
  %v1132 = vpack.c.bf16 %v1069, %v1068
  %v1133 = vpack.c.bf16 %v102, %v101
  %v1134 = vpack.c.bf16 %v1071, %v1070
  %v1135 = vpack.c.bf16 %v104, %v103
  %v1136 = vpack.c.bf16 %v1073, %v1072
  %v1137 = vpack.c.bf16 %v106, %v105
  %v1138 = vpack.c.bf16 %v1075, %v1074
  %v1139 = vpack.c.bf16 %v108, %v107
  %v1140 = vpack.c.bf16 %v1077, %v1076
  %v1141 = vpack.c.bf16 %v110, %v109
  %v1142 = vpack.c.bf16 %v1079, %v1078
  %v1143 = vpack.c.bf16 %v112, %v111
  %v1144 = vpack.c.bf16 %v1081, %v1080
  %v1145 = vpack.c.bf16 %v114, %v113
  %v1146 = vpack.c.bf16 %v1083, %v1082
  %v1147 = vpack.c.bf16 %v116, %v115
  %v1148 = vpack.c.bf16 %v1085, %v1084
  %v1149 = vpack.c.bf16 %v118, %v117
  %v1150 = vpack.c.bf16 %v1087, %v1086
  %v1151 = vpack.c.bf16 %v120, %v119
  %v1152 = vpack.c.bf16 %v1089, %v1088
  %v1153 = vpack.c.bf16 %v122, %v121
  %v1154 = vpack.c.bf16 %v1091, %v1090
  %v1155 = vpack.c.bf16 %v124, %v123
  %v1156 = vpack.c.bf16 %v1093, %v1092
  %v1157 = vpack.c.bf16 %v126, %v125
  %v1158 = vpack.c.bf16 %v1095, %v1094
  %v1159 = vpack.c.bf16 %v128, %v127
  %v1160 = vpack.c.bf16 %v1097, %v1096
  %v1161 = vpack.c.bf16 %v130, %v129
  %v1162 = vpack.c.bf16 %v1099, %v1098
  %v1163 = vpack.c.bf16 %v132, %v131
  %v1164 = vpack.c.bf16 %v1101, %v1100
  %v1165 = vpack.c.bf16 %v134, %v133
  %v1166 = vpack.c.bf16 %v1103, %v1102
  %v1167 = vpack.c.bf16 %v136, %v135
  %v1168 = vpack.c.bf16 %v1105, %v1104
  %v1169 = vpack.c.bf16 %v138, %v137
  %v1170 = vpack.c.bf16 %v1107, %v1106
  %v1171 = vpack.c.bf16 %v140, %v139
  %v1172 = vpack.c.bf16 %v1109, %v1108
  %v1173 = vpack.c.bf16 %v142, %v141
  %v1174 = vpack.c.bf16 %v1111, %v1110
  %v1175 = vpack.c.bf16 %v144, %v143
  %v1176 = vpack.c.bf16 %v1113, %v1112
  %v1177 = vpack.c.bf16 %v146, %v145
  %v1178 = vpack.c.bf16 %v1115, %v1114
  %v1179 = vpack.c.bf16 %v148, %v147
  %v1180 = vpack.c.bf16 %v1117, %v1116
  %v1181 = vpack.c.bf16 %v150, %v149
  %v1182 = vpack.c.bf16 %v1119, %v1118
  %v1183 = vpack.c.bf16 %v152, %v151
  %v1184 = vpack.c.bf16 %v1121, %v1120
  %v1185 = vpack.c.bf16 %v154, %v153
  %v1186 = vpack.c.bf16 %v1123, %v1122
  %v1187 = vpack.c.bf16 %v156, %v155
  %v1188 = vpack.c.bf16 %v1125, %v1124
  %v1189 = vpack.c.bf16 %v158, %v157
  %v1190 = vpack.c.bf16 %v1127, %v1126
  %v1191 = vpack.c.bf16 %v160, %v159
  %v1192 = vld [vmem:[%s5] sm:$0xff]
  %v1193 = vld [vmem:[%s5 + $0x8] sm:$0xff]
  %v1194 = vld [vmem:[%s5 + $0x10] sm:$0xff]
  %v1195 = vld [vmem:[%s5 + $0x18] sm:$0xff]
  %v1196 = vld [vmem:[%s5 + $0x20] sm:$0xff]
  %v1197 = vld [vmem:[%s5 + $0x28] sm:$0xff]
  %v1198 = vld [vmem:[%s5 + $0x30] sm:$0xff]
  %v1199 = vld [vmem:[%s5 + $0x38] sm:$0xff]
  %v1200 = vld [vmem:[%s5 + $0x40] sm:$0xff]
  %v1201 = vld [vmem:[%s5 + $0x48] sm:$0xff]
  %v1202 = vld [vmem:[%s5 + $0x50] sm:$0xff]
  %v1203 = vld [vmem:[%s5 + $0x58] sm:$0xff]
  %v1204 = vld [vmem:[%s5 + $0x60] sm:$0xff]
  %v1205 = vld [vmem:[%s5 + $0x68] sm:$0xff]
  %v1206 = vld [vmem:[%s5 + $0x70] sm:$0xff]
  %v1207 = vld [vmem:[%s5 + $0x78] sm:$0xff]
  %v1208 = vld [vmem:[%s5 + $0x80] sm:$0xff]
  %v1209 = vld [vmem:[%s5 + $0x88] sm:$0xff]
  %v1210 = vld [vmem:[%s5 + $0x90] sm:$0xff]
  %v1211 = vld [vmem:[%s5 + $0x98] sm:$0x33]
  %v1212 = vld [vmem:[%s6] sm:$0x3]
  %v1214 = vlaneseq
  %v1215 = vshrl.u32 %v1214, 7
  %v1216 = vsub.s32 0, %v1215
  %v1217 = vrot.slane %v1212, %v1216
  %v1218 = vlaneseq
  %v1219 = vshrl.u32 %v1218, 7
  %v1220 = vsub.s32 1, %v1219
  %v1221 = vrot.slane %v1212, %v1220
  %v1244 = vunpack.c.l.b16 %v1192
  %v1245 = vunpack.c.h.b16 %v1192
  %v1246 = vunpack.c.l.b16 %v1193
  %v1247 = vunpack.c.h.b16 %v1193
  %v1248 = vunpack.c.l.b16 %v1194
  %v1249 = vunpack.c.h.b16 %v1194
  %v1250 = vunpack.c.l.b16 %v1195
  %v1251 = vunpack.c.h.b16 %v1195
  %v1252 = vunpack.c.l.b16 %v1196
  %v1253 = vunpack.c.h.b16 %v1196
  %v1254 = vunpack.c.l.b16 %v1197
  %v1255 = vunpack.c.h.b16 %v1197
  %v1256 = vunpack.c.l.b16 %v1198
  %v1257 = vunpack.c.h.b16 %v1198
  %v1258 = vunpack.c.l.b16 %v1199
  %v1259 = vunpack.c.h.b16 %v1199
  %v1260 = vunpack.c.l.b16 %v1200
  %v1261 = vunpack.c.h.b16 %v1200
  %v1262 = vunpack.c.l.b16 %v1201
  %v1263 = vunpack.c.h.b16 %v1201
  %v1264 = vunpack.c.l.b16 %v1202
  %v1265 = vunpack.c.h.b16 %v1202
  %v1266 = vunpack.c.l.b16 %v1203
  %v1267 = vunpack.c.h.b16 %v1203
  %v1268 = vunpack.c.l.b16 %v1204
  %v1269 = vunpack.c.h.b16 %v1204
  %v1270 = vunpack.c.l.b16 %v1205
  %v1271 = vunpack.c.h.b16 %v1205
  %v1272 = vunpack.c.l.b16 %v1206
  %v1273 = vunpack.c.h.b16 %v1206
  %v1274 = vunpack.c.l.b16 %v1207
  %v1275 = vunpack.c.h.b16 %v1207
  %v1276 = vunpack.c.l.b16 %v1208
  %v1277 = vunpack.c.h.b16 %v1208
  %v1278 = vunpack.c.l.b16 %v1209
  %v1279 = vunpack.c.h.b16 %v1209
  %v1280 = vunpack.c.l.b16 %v1210
  %v1281 = vunpack.c.h.b16 %v1210
  %v1282 = vunpack.c.l.b16 %v1211
  %v1283 = vunpack.c.h.b16 %v1211
  %v1284 = vpack.c.b16 %v1246, %v1244
  %v1285 = vpack.c.b16 %v1247, %v1245
  %v1286 = vpack.c.b16 %v1250, %v1248
  %v1287 = vpack.c.b16 %v1251, %v1249
  %v1288 = vpack.c.b16 %v1254, %v1252
  %v1289 = vpack.c.b16 %v1255, %v1253
  %v1290 = vpack.c.b16 %v1258, %v1256
  %v1291 = vpack.c.b16 %v1259, %v1257
  %v1292 = vpack.c.b16 %v1262, %v1260
  %v1293 = vpack.c.b16 %v1263, %v1261
  %v1294 = vpack.c.b16 %v1266, %v1264
  %v1295 = vpack.c.b16 %v1267, %v1265
  %v1296 = vpack.c.b16 %v1270, %v1268
  %v1297 = vpack.c.b16 %v1271, %v1269
  %v1298 = vpack.c.b16 %v1274, %v1272
  %v1299 = vpack.c.b16 %v1275, %v1273
  %v1300 = vpack.c.b16 %v1278, %v1276
  %v1301 = vpack.c.b16 %v1279, %v1277
  %v1302 = vpack.c.b16 %v1282, %v1280
  %v1303 = vpack.c.b16 %v1283, %v1281
  %vm1322 = vcmask 220160
  %v1324 = vsel %vm1322, %v1129, 0
  %v1327 = vsel %vm1322, %v1131, 0
  %v1330 = vsel %vm1322, %v1133, 0
  %v1333 = vsel %vm1322, %v1135, 0
  %v1336 = vsel %vm1322, %v1137, 0
  %v1339 = vsel %vm1322, %v1139, 0
  %v1342 = vsel %vm1322, %v1141, 0
  %v1345 = vsel %vm1322, %v1143, 0
  %v1348 = vsel %vm1322, %v1145, 0
  %v1351 = vsel %vm1322, %v1147, 0
  %v1354 = vsel %vm1322, %v1149, 0
  %v1357 = vsel %vm1322, %v1151, 0
  %v1360 = vsel %vm1322, %v1153, 0
  %v1363 = vsel %vm1322, %v1155, 0
  %v1366 = vsel %vm1322, %v1157, 0
  %v1369 = vsel %vm1322, %v1159, 0
  %v1372 = vsel %vm1322, %v1161, 0
  %v1375 = vsel %vm1322, %v1163, 0
  %v1378 = vsel %vm1322, %v1165, 0
  %v1381 = vsel %vm1322, %v1167, 0
  %v1384 = vsel %vm1322, %v1169, 0
  %v1387 = vsel %vm1322, %v1171, 0
  %v1390 = vsel %vm1322, %v1173, 0
  %v1393 = vsel %vm1322, %v1175, 0
  %v1396 = vsel %vm1322, %v1177, 0
  %v1399 = vsel %vm1322, %v1179, 0
  %v1402 = vsel %vm1322, %v1181, 0
  %v1405 = vsel %vm1322, %v1183, 0
  %v1408 = vsel %vm1322, %v1185, 0
  %v1411 = vsel %vm1322, %v1187, 0
  %v1414 = vsel %vm1322, %v1189, 0
  %v1417 = vsel %vm1322, %v1191, 0
  %vm1419 = vcmask 1044480
  %vm1420 = vcmask 1045504
  %v1421 = vsel %vm1419, 4294967295, 65535
  %v1422 = vsel %vm1420, %v1421, 0
  %v1424 = vand.u32 %v1302, %v1422
  %v1427 = vand.u32 %v1303, %v1422
  %1429 = vmatprep.subr.bf16.mxu0 %v1299
  %1430 = vmatpush1.bf16.msra.mxu0 %v1298
  %1431 = vmatprep.subr.bf16.mxu0 %v1297
  %1432 = vmatpush1.bf16.msra.mxu0 %v1296
  %1433 = vmatprep.subr.bf16.mxu0 %v1295
  %1434 = vmatpush1.bf16.msra.mxu0 %v1294
  %1435 = vmatprep.subr.bf16.mxu0 %v1293
  %1436 = vmatpush1.bf16.msra.mxu0 %v1292
  %1437 = vmatprep.subr.bf16.mxu0 %v1291
  %1438 = vmatpush1.bf16.msra.mxu0 %v1290
  %1439 = vmatprep.subr.bf16.mxu0 %v1289
  %1440 = vmatpush1.bf16.msra.mxu0 %v1288
  %1441 = vmatprep.subr.bf16.mxu0 %v1287
  %1442 = vmatpush1.bf16.msra.mxu0 %v1286
  %1443 = vmatprep.subr.bf16.mxu0 %v1285
  %1444 = vmatpush1.bf16.msra.mxu0 %v1284
  %1445 = vmatprep.subr.bf16.mxu0 0
  %1446 = vmatpush2.bf16.msra.mxu0 0
  %1447 = vmatprep.subr.bf16.mxu0 0
  %1448 = vmatpush2.bf16.msra.mxu0 0
  %1449 = vmatprep.subr.bf16.mxu0 0
  %1450 = vmatpush2.bf16.msra.mxu0 0
  %1451 = vmatprep.subr.bf16.mxu0 0
  %1452 = vmatpush2.bf16.msra.mxu0 0
  %1453 = vmatprep.subr.bf16.mxu0 0
  %1454 = vmatpush2.bf16.msra.mxu0 0
  %1455 = vmatprep.subr.bf16.mxu0 0
  %1456 = vmatpush2.bf16.msra.mxu0 0
  %1457 = vmatprep.subr.bf16.mxu0 %v1427
  %1458 = vmatpush2.bf16.msra.mxu0 %v1424
  %1459 = vmatprep.subr.bf16.mxu0 %v1301
  %1460 = vmatpush2.bf16.msra.mxu0 %v1300
  %1461 = vmatprep.mubr.bf16.mxu0 %v1324
  %1462 = vmatmul.mubr.bf16.gmra.mxu0 %v1128
  %v1463 = vpop.f32.mrf.mxu0
  %v1464 = vadd.f32 %v1217, %v1463
  %v1465 = vpop.f32.mrf.mxu0
  %v1466 = vadd.f32 %v1221, %v1465
  %v1467 = vpop.f32.mrf.mxu0
  %v1468 = vadd.f32 %v1217, %v1467
  %v1469 = vpop.f32.mrf.mxu0
  %v1470 = vadd.f32 %v1221, %v1469
  %1471 = vmatprep.mubr.bf16.mxu0 %v1327
  %1472 = vmatmul.mubr.bf16.gmra.mxu0 %v1130
  %v1473 = vpop.f32.mrf.mxu0
  %v1474 = vadd.f32 %v1217, %v1473
  %v1475 = vpop.f32.mrf.mxu0
  %v1476 = vadd.f32 %v1221, %v1475
  %v1477 = vpop.f32.mrf.mxu0
  %v1478 = vadd.f32 %v1217, %v1477
  %v1479 = vpop.f32.mrf.mxu0
  %v1480 = vadd.f32 %v1221, %v1479
  %1481 = vmatprep.mubr.bf16.mxu0 %v1330
  %1482 = vmatmul.mubr.bf16.gmra.mxu0 %v1132
  %v1483 = vpop.f32.mrf.mxu0
  %v1484 = vadd.f32 %v1217, %v1483
  %v1485 = vpop.f32.mrf.mxu0
  %v1486 = vadd.f32 %v1221, %v1485
  %v1487 = vpop.f32.mrf.mxu0
  %v1488 = vadd.f32 %v1217, %v1487
  %v1489 = vpop.f32.mrf.mxu0
  %v1490 = vadd.f32 %v1221, %v1489
  %1491 = vmatprep.mubr.bf16.mxu0 %v1333
  %1492 = vmatmul.mubr.bf16.gmra.mxu0 %v1134
  %v1493 = vpop.f32.mrf.mxu0
  %v1494 = vadd.f32 %v1217, %v1493
  %v1495 = vpop.f32.mrf.mxu0
  %v1496 = vadd.f32 %v1221, %v1495
  %v1497 = vpop.f32.mrf.mxu0
  %v1498 = vadd.f32 %v1217, %v1497
  %v1499 = vpop.f32.mrf.mxu0
  %v1500 = vadd.f32 %v1221, %v1499
  %1501 = vmatprep.mubr.bf16.mxu0 %v1336
  %1502 = vmatmul.mubr.bf16.gmra.mxu0 %v1136
  %v1503 = vpop.f32.mrf.mxu0
  %v1504 = vadd.f32 %v1217, %v1503
  %v1505 = vpop.f32.mrf.mxu0
  %v1506 = vadd.f32 %v1221, %v1505
  %v1507 = vpop.f32.mrf.mxu0
  %v1508 = vadd.f32 %v1217, %v1507
  %v1509 = vpop.f32.mrf.mxu0
  %v1510 = vadd.f32 %v1221, %v1509
  %1511 = vmatprep.mubr.bf16.mxu0 %v1339
  %1512 = vmatmul.mubr.bf16.gmra.mxu0 %v1138
  %v1513 = vpop.f32.mrf.mxu0
  %v1514 = vadd.f32 %v1217, %v1513
  %v1515 = vpop.f32.mrf.mxu0
  %v1516 = vadd.f32 %v1221, %v1515
  %v1517 = vpop.f32.mrf.mxu0
  %v1518 = vadd.f32 %v1217, %v1517
  %v1519 = vpop.f32.mrf.mxu0
  %v1520 = vadd.f32 %v1221, %v1519
  %1521 = vmatprep.mubr.bf16.mxu0 %v1342
  %1522 = vmatmul.mubr.bf16.gmra.mxu0 %v1140
  %v1523 = vpop.f32.mrf.mxu0
  %v1524 = vadd.f32 %v1217, %v1523
  %v1525 = vpop.f32.mrf.mxu0
  %v1526 = vadd.f32 %v1221, %v1525
  %v1527 = vpop.f32.mrf.mxu0
  %v1528 = vadd.f32 %v1217, %v1527
  %v1529 = vpop.f32.mrf.mxu0
  %v1530 = vadd.f32 %v1221, %v1529
  %1531 = vmatprep.mubr.bf16.mxu0 %v1345
  %1532 = vmatmul.mubr.bf16.gmra.mxu0 %v1142
  %v1533 = vpop.f32.mrf.mxu0
  %v1534 = vadd.f32 %v1217, %v1533
  %v1535 = vpop.f32.mrf.mxu0
  %v1536 = vadd.f32 %v1221, %v1535
  %v1537 = vpop.f32.mrf.mxu0
  %v1538 = vadd.f32 %v1217, %v1537
  %v1539 = vpop.f32.mrf.mxu0
  %v1540 = vadd.f32 %v1221, %v1539
  %1541 = vmatprep.mubr.bf16.mxu0 %v1348
  %1542 = vmatmul.mubr.bf16.gmra.mxu0 %v1144
  %v1543 = vpop.f32.mrf.mxu0
  %v1544 = vadd.f32 %v1217, %v1543
  %v1545 = vpop.f32.mrf.mxu0
  %v1546 = vadd.f32 %v1221, %v1545
  %v1547 = vpop.f32.mrf.mxu0
  %v1548 = vadd.f32 %v1217, %v1547
  %v1549 = vpop.f32.mrf.mxu0
  %v1550 = vadd.f32 %v1221, %v1549
  %1551 = vmatprep.mubr.bf16.mxu0 %v1351
  %1552 = vmatmul.mubr.bf16.gmra.mxu0 %v1146
  %v1553 = vpop.f32.mrf.mxu0
  %v1554 = vadd.f32 %v1217, %v1553
  %v1555 = vpop.f32.mrf.mxu0
  %v1556 = vadd.f32 %v1221, %v1555
  %v1557 = vpop.f32.mrf.mxu0
  %v1558 = vadd.f32 %v1217, %v1557
  %v1559 = vpop.f32.mrf.mxu0
  %v1560 = vadd.f32 %v1221, %v1559
  %1561 = vmatprep.mubr.bf16.mxu0 %v1354
  %1562 = vmatmul.mubr.bf16.gmra.mxu0 %v1148
  %v1563 = vpop.f32.mrf.mxu0
  %v1564 = vadd.f32 %v1217, %v1563
  %v1565 = vpop.f32.mrf.mxu0
  %v1566 = vadd.f32 %v1221, %v1565
  %v1567 = vpop.f32.mrf.mxu0
  %v1568 = vadd.f32 %v1217, %v1567
  %v1569 = vpop.f32.mrf.mxu0
  %v1570 = vadd.f32 %v1221, %v1569
  %1571 = vmatprep.mubr.bf16.mxu0 %v1357
  %1572 = vmatmul.mubr.bf16.gmra.mxu0 %v1150
  %v1573 = vpop.f32.mrf.mxu0
  %v1574 = vadd.f32 %v1217, %v1573
  %v1575 = vpop.f32.mrf.mxu0
  %v1576 = vadd.f32 %v1221, %v1575
  %v1577 = vpop.f32.mrf.mxu0
  %v1578 = vadd.f32 %v1217, %v1577
  %v1579 = vpop.f32.mrf.mxu0
  %v1580 = vadd.f32 %v1221, %v1579
  %1581 = vmatprep.mubr.bf16.mxu0 %v1360
  %1582 = vmatmul.mubr.bf16.gmra.mxu0 %v1152
  %v1583 = vpop.f32.mrf.mxu0
  %v1584 = vadd.f32 %v1217, %v1583
  %v1585 = vpop.f32.mrf.mxu0
  %v1586 = vadd.f32 %v1221, %v1585
  %v1587 = vpop.f32.mrf.mxu0
  %v1588 = vadd.f32 %v1217, %v1587
  %v1589 = vpop.f32.mrf.mxu0
  %v1590 = vadd.f32 %v1221, %v1589
  %1591 = vmatprep.mubr.bf16.mxu0 %v1363
  %1592 = vmatmul.mubr.bf16.gmra.mxu0 %v1154
  %v1593 = vpop.f32.mrf.mxu0
  %v1594 = vadd.f32 %v1217, %v1593
  %v1595 = vpop.f32.mrf.mxu0
  %v1596 = vadd.f32 %v1221, %v1595
  %v1597 = vpop.f32.mrf.mxu0
  %v1598 = vadd.f32 %v1217, %v1597
  %v1599 = vpop.f32.mrf.mxu0
  %v1600 = vadd.f32 %v1221, %v1599
  %1601 = vmatprep.mubr.bf16.mxu0 %v1366
  %1602 = vmatmul.mubr.bf16.gmra.mxu0 %v1156
  %v1603 = vpop.f32.mrf.mxu0
  %v1604 = vadd.f32 %v1217, %v1603
  %v1605 = vpop.f32.mrf.mxu0
  %v1606 = vadd.f32 %v1221, %v1605
  %v1607 = vpop.f32.mrf.mxu0
  %v1608 = vadd.f32 %v1217, %v1607
  %v1609 = vpop.f32.mrf.mxu0
  %v1610 = vadd.f32 %v1221, %v1609
  %1611 = vmatprep.mubr.bf16.mxu0 %v1369
  %1612 = vmatmul.mubr.bf16.gmra.mxu0 %v1158
  %v1613 = vpop.f32.mrf.mxu0
  %v1614 = vadd.f32 %v1217, %v1613
  %v1615 = vpop.f32.mrf.mxu0
  %v1616 = vadd.f32 %v1221, %v1615
  %v1617 = vpop.f32.mrf.mxu0
  %v1618 = vadd.f32 %v1217, %v1617
  %v1619 = vpop.f32.mrf.mxu0
  %v1620 = vadd.f32 %v1221, %v1619
  %1621 = vmatprep.mubr.bf16.mxu0 %v1372
  %1622 = vmatmul.mubr.bf16.gmra.mxu0 %v1160
  %v1623 = vpop.f32.mrf.mxu0
  %v1624 = vadd.f32 %v1217, %v1623
  %v1625 = vpop.f32.mrf.mxu0
  %v1626 = vadd.f32 %v1221, %v1625
  %v1627 = vpop.f32.mrf.mxu0
  %v1628 = vadd.f32 %v1217, %v1627
  %v1629 = vpop.f32.mrf.mxu0
  %v1630 = vadd.f32 %v1221, %v1629
  %1631 = vmatprep.mubr.bf16.mxu0 %v1375
  %1632 = vmatmul.mubr.bf16.gmra.mxu0 %v1162
  %v1633 = vpop.f32.mrf.mxu0
  %v1634 = vadd.f32 %v1217, %v1633
  %v1635 = vpop.f32.mrf.mxu0
  %v1636 = vadd.f32 %v1221, %v1635
  %v1637 = vpop.f32.mrf.mxu0
  %v1638 = vadd.f32 %v1217, %v1637
  %v1639 = vpop.f32.mrf.mxu0
  %v1640 = vadd.f32 %v1221, %v1639
  %1641 = vmatprep.mubr.bf16.mxu0 %v1378
  %1642 = vmatmul.mubr.bf16.gmra.mxu0 %v1164
  %v1643 = vpop.f32.mrf.mxu0
  %v1644 = vadd.f32 %v1217, %v1643
  %v1645 = vpop.f32.mrf.mxu0
  %v1646 = vadd.f32 %v1221, %v1645
  %v1647 = vpop.f32.mrf.mxu0
  %v1648 = vadd.f32 %v1217, %v1647
  %v1649 = vpop.f32.mrf.mxu0
  %v1650 = vadd.f32 %v1221, %v1649
  %1651 = vmatprep.mubr.bf16.mxu0 %v1381
  %1652 = vmatmul.mubr.bf16.gmra.mxu0 %v1166
  %v1653 = vpop.f32.mrf.mxu0
  %v1654 = vadd.f32 %v1217, %v1653
  %v1655 = vpop.f32.mrf.mxu0
  %v1656 = vadd.f32 %v1221, %v1655
  %v1657 = vpop.f32.mrf.mxu0
  %v1658 = vadd.f32 %v1217, %v1657
  %v1659 = vpop.f32.mrf.mxu0
  %v1660 = vadd.f32 %v1221, %v1659
  %1661 = vmatprep.mubr.bf16.mxu0 %v1384
  %1662 = vmatmul.mubr.bf16.gmra.mxu0 %v1168
  %v1663 = vpop.f32.mrf.mxu0
  %v1664 = vadd.f32 %v1217, %v1663
  %v1665 = vpop.f32.mrf.mxu0
  %v1666 = vadd.f32 %v1221, %v1665
  %v1667 = vpop.f32.mrf.mxu0
  %v1668 = vadd.f32 %v1217, %v1667
  %v1669 = vpop.f32.mrf.mxu0
  %v1670 = vadd.f32 %v1221, %v1669
  %1671 = vmatprep.mubr.bf16.mxu0 %v1387
  %1672 = vmatmul.mubr.bf16.gmra.mxu0 %v1170
  %v1673 = vpop.f32.mrf.mxu0
  %v1674 = vadd.f32 %v1217, %v1673
  %v1675 = vpop.f32.mrf.mxu0
  %v1676 = vadd.f32 %v1221, %v1675
  %v1677 = vpop.f32.mrf.mxu0
  %v1678 = vadd.f32 %v1217, %v1677
  %v1679 = vpop.f32.mrf.mxu0
  %v1680 = vadd.f32 %v1221, %v1679
  %1681 = vmatprep.mubr.bf16.mxu0 %v1390
  %1682 = vmatmul.mubr.bf16.gmra.mxu0 %v1172
  %v1683 = vpop.f32.mrf.mxu0
  %v1684 = vadd.f32 %v1217, %v1683
  %v1685 = vpop.f32.mrf.mxu0
  %v1686 = vadd.f32 %v1221, %v1685
  %v1687 = vpop.f32.mrf.mxu0
  %v1688 = vadd.f32 %v1217, %v1687
  %v1689 = vpop.f32.mrf.mxu0
  %v1690 = vadd.f32 %v1221, %v1689
  %1691 = vmatprep.mubr.bf16.mxu0 %v1393
  %1692 = vmatmul.mubr.bf16.gmra.mxu0 %v1174
  %v1693 = vpop.f32.mrf.mxu0
  %v1694 = vadd.f32 %v1217, %v1693
  %v1695 = vpop.f32.mrf.mxu0
  %v1696 = vadd.f32 %v1221, %v1695
  %v1697 = vpop.f32.mrf.mxu0
  %v1698 = vadd.f32 %v1217, %v1697
  %v1699 = vpop.f32.mrf.mxu0
  %v1700 = vadd.f32 %v1221, %v1699
  %1701 = vmatprep.mubr.bf16.mxu0 %v1396
  %1702 = vmatmul.mubr.bf16.gmra.mxu0 %v1176
  %v1703 = vpop.f32.mrf.mxu0
  %v1704 = vadd.f32 %v1217, %v1703
  %v1705 = vpop.f32.mrf.mxu0
  %v1706 = vadd.f32 %v1221, %v1705
  %v1707 = vpop.f32.mrf.mxu0
  %v1708 = vadd.f32 %v1217, %v1707
  %v1709 = vpop.f32.mrf.mxu0
  %v1710 = vadd.f32 %v1221, %v1709
  %1711 = vmatprep.mubr.bf16.mxu0 %v1399
  %1712 = vmatmul.mubr.bf16.gmra.mxu0 %v1178
  %v1713 = vpop.f32.mrf.mxu0
  %v1714 = vadd.f32 %v1217, %v1713
  %v1715 = vpop.f32.mrf.mxu0
  %v1716 = vadd.f32 %v1221, %v1715
  %v1717 = vpop.f32.mrf.mxu0
  %v1718 = vadd.f32 %v1217, %v1717
  %v1719 = vpop.f32.mrf.mxu0
  %v1720 = vadd.f32 %v1221, %v1719
  %1721 = vmatprep.mubr.bf16.mxu0 %v1402
  %1722 = vmatmul.mubr.bf16.gmra.mxu0 %v1180
  %v1723 = vpop.f32.mrf.mxu0
  %v1724 = vadd.f32 %v1217, %v1723
  %v1725 = vpop.f32.mrf.mxu0
  %v1726 = vadd.f32 %v1221, %v1725
  %v1727 = vpop.f32.mrf.mxu0
  %v1728 = vadd.f32 %v1217, %v1727
  %v1729 = vpop.f32.mrf.mxu0
  %v1730 = vadd.f32 %v1221, %v1729
  %1731 = vmatprep.mubr.bf16.mxu0 %v1405
  %1732 = vmatmul.mubr.bf16.gmra.mxu0 %v1182
  %v1733 = vpop.f32.mrf.mxu0
  %v1734 = vadd.f32 %v1217, %v1733
  %v1735 = vpop.f32.mrf.mxu0
  %v1736 = vadd.f32 %v1221, %v1735
  %v1737 = vpop.f32.mrf.mxu0
  %v1738 = vadd.f32 %v1217, %v1737
  %v1739 = vpop.f32.mrf.mxu0
  %v1740 = vadd.f32 %v1221, %v1739
  %1741 = vmatprep.mubr.bf16.mxu0 %v1408
  %1742 = vmatmul.mubr.bf16.gmra.mxu0 %v1184
  %v1743 = vpop.f32.mrf.mxu0
  %v1744 = vadd.f32 %v1217, %v1743
  %v1745 = vpop.f32.mrf.mxu0
  %v1746 = vadd.f32 %v1221, %v1745
  %v1747 = vpop.f32.mrf.mxu0
  %v1748 = vadd.f32 %v1217, %v1747
  %v1749 = vpop.f32.mrf.mxu0
  %v1750 = vadd.f32 %v1221, %v1749
  %1751 = vmatprep.mubr.bf16.mxu0 %v1411
  %1752 = vmatmul.mubr.bf16.gmra.mxu0 %v1186
  %v1753 = vpop.f32.mrf.mxu0
  %v1754 = vadd.f32 %v1217, %v1753
  %v1755 = vpop.f32.mrf.mxu0
  %v1756 = vadd.f32 %v1221, %v1755
  %v1757 = vpop.f32.mrf.mxu0
  %v1758 = vadd.f32 %v1217, %v1757
  %v1759 = vpop.f32.mrf.mxu0
  %v1760 = vadd.f32 %v1221, %v1759
  %1761 = vmatprep.mubr.bf16.mxu0 %v1414
  %1762 = vmatmul.mubr.bf16.gmra.mxu0 %v1188
  %v1763 = vpop.f32.mrf.mxu0
  %v1764 = vadd.f32 %v1217, %v1763
  %v1765 = vpop.f32.mrf.mxu0
  %v1766 = vadd.f32 %v1221, %v1765
  %v1767 = vpop.f32.mrf.mxu0
  %v1768 = vadd.f32 %v1217, %v1767
  %v1769 = vpop.f32.mrf.mxu0
  %v1770 = vadd.f32 %v1221, %v1769
  %1771 = vmatprep.mubr.bf16.mxu0 %v1417
  %1772 = vmatmul.mubr.bf16.gmra.mxu0 %v1190
  %v1773 = vpop.f32.mrf.mxu0
  %v1774 = vadd.f32 %v1217, %v1773
  %v1775 = vpop.f32.mrf.mxu0
  %v1776 = vadd.f32 %v1221, %v1775
  %v1777 = vpop.f32.mrf.mxu0
  %v1778 = vadd.f32 %v1217, %v1777
  %v1779 = vpop.f32.mrf.mxu0
  %v1780 = vadd.f32 %v1221, %v1779
  %1781 = vdwg.mxu0
  %v1782 = vmax.f32 %v1464, 0.0
  %v1783 = vmax.f32 %v1468, 0.0
  %v1784 = vmax.f32 %v1474, 0.0
  %v1785 = vmax.f32 %v1478, 0.0
  %v1786 = vmax.f32 %v1484, 0.0
  %v1787 = vmax.f32 %v1488, 0.0
  %v1788 = vmax.f32 %v1494, 0.0
  %v1789 = vmax.f32 %v1498, 0.0
  %v1790 = vmax.f32 %v1504, 0.0
  %v1791 = vmax.f32 %v1508, 0.0
  %v1792 = vmax.f32 %v1514, 0.0
  %v1793 = vmax.f32 %v1518, 0.0
  %v1794 = vmax.f32 %v1524, 0.0
  %v1795 = vmax.f32 %v1528, 0.0
  %v1796 = vmax.f32 %v1534, 0.0
  %v1797 = vmax.f32 %v1538, 0.0
  %v1798 = vmax.f32 %v1544, 0.0
  %v1799 = vmax.f32 %v1548, 0.0
  %v1800 = vmax.f32 %v1554, 0.0
  %v1801 = vmax.f32 %v1558, 0.0
  %v1802 = vmax.f32 %v1564, 0.0
  %v1803 = vmax.f32 %v1568, 0.0
  %v1804 = vmax.f32 %v1574, 0.0
  %v1805 = vmax.f32 %v1578, 0.0
  %v1806 = vmax.f32 %v1584, 0.0
  %v1807 = vmax.f32 %v1588, 0.0
  %v1808 = vmax.f32 %v1594, 0.0
  %v1809 = vmax.f32 %v1598, 0.0
  %v1810 = vmax.f32 %v1604, 0.0
  %v1811 = vmax.f32 %v1608, 0.0
  %v1812 = vmax.f32 %v1614, 0.0
  %v1813 = vmax.f32 %v1618, 0.0
  %v1814 = vmax.f32 %v1624, 0.0
  %v1815 = vmax.f32 %v1628, 0.0
  %v1816 = vmax.f32 %v1634, 0.0
  %v1817 = vmax.f32 %v1638, 0.0
  %v1818 = vmax.f32 %v1644, 0.0
  %v1819 = vmax.f32 %v1648, 0.0
  %v1820 = vmax.f32 %v1654, 0.0
  %v1821 = vmax.f32 %v1658, 0.0
  %v1822 = vmax.f32 %v1664, 0.0
  %v1823 = vmax.f32 %v1668, 0.0
  %v1824 = vmax.f32 %v1674, 0.0
  %v1825 = vmax.f32 %v1678, 0.0
  %v1826 = vmax.f32 %v1684, 0.0
  %v1827 = vmax.f32 %v1688, 0.0
  %v1828 = vmax.f32 %v1694, 0.0
  %v1829 = vmax.f32 %v1698, 0.0
  %v1830 = vmax.f32 %v1704, 0.0
  %v1831 = vmax.f32 %v1708, 0.0
  %v1832 = vmax.f32 %v1714, 0.0
  %v1833 = vmax.f32 %v1718, 0.0
  %v1834 = vmax.f32 %v1724, 0.0
  %v1835 = vmax.f32 %v1728, 0.0
  %v1836 = vmax.f32 %v1734, 0.0
  %v1837 = vmax.f32 %v1738, 0.0
  %v1838 = vmax.f32 %v1744, 0.0
  %v1839 = vmax.f32 %v1748, 0.0
  %v1840 = vmax.f32 %v1754, 0.0
  %v1841 = vmax.f32 %v1758, 0.0
  %v1842 = vmax.f32 %v1764, 0.0
  %v1843 = vmax.f32 %v1768, 0.0
  %v1844 = vmax.f32 %v1774, 0.0
  %v1845 = vmax.f32 %v1778, 0.0
  %vm1846 = vcmp.gt.f32.partialorder %v1466, 20.0
  %vm1847 = vcmp.gt.f32.partialorder %v1470, 20.0
  %vm1848 = vcmp.gt.f32.partialorder %v1476, 20.0
  %vm1849 = vcmp.gt.f32.partialorder %v1480, 20.0
  %vm1850 = vcmp.gt.f32.partialorder %v1486, 20.0
  %vm1851 = vcmp.gt.f32.partialorder %v1490, 20.0
  %vm1852 = vcmp.gt.f32.partialorder %v1496, 20.0
  %vm1853 = vcmp.gt.f32.partialorder %v1500, 20.0
  %vm1854 = vcmp.gt.f32.partialorder %v1506, 20.0
  %vm1855 = vcmp.gt.f32.partialorder %v1510, 20.0
  %vm1856 = vcmp.gt.f32.partialorder %v1516, 20.0
  %vm1857 = vcmp.gt.f32.partialorder %v1520, 20.0
  %vm1858 = vcmp.gt.f32.partialorder %v1526, 20.0
  %vm1859 = vcmp.gt.f32.partialorder %v1530, 20.0
  %vm1860 = vcmp.gt.f32.partialorder %v1536, 20.0
  %vm1861 = vcmp.gt.f32.partialorder %v1540, 20.0
  %vm1862 = vcmp.gt.f32.partialorder %v1546, 20.0
  %vm1863 = vcmp.gt.f32.partialorder %v1550, 20.0
  %vm1864 = vcmp.gt.f32.partialorder %v1556, 20.0
  %vm1865 = vcmp.gt.f32.partialorder %v1560, 20.0
  %vm1866 = vcmp.gt.f32.partialorder %v1566, 20.0
  %vm1867 = vcmp.gt.f32.partialorder %v1570, 20.0
  %vm1868 = vcmp.gt.f32.partialorder %v1576, 20.0
  %vm1869 = vcmp.gt.f32.partialorder %v1580, 20.0
  %vm1870 = vcmp.gt.f32.partialorder %v1586, 20.0
  %vm1871 = vcmp.gt.f32.partialorder %v1590, 20.0
  %vm1872 = vcmp.gt.f32.partialorder %v1596, 20.0
  %vm1873 = vcmp.gt.f32.partialorder %v1600, 20.0
  %vm1874 = vcmp.gt.f32.partialorder %v1606, 20.0
  %vm1875 = vcmp.gt.f32.partialorder %v1610, 20.0
  %vm1876 = vcmp.gt.f32.partialorder %v1616, 20.0
  %vm1877 = vcmp.gt.f32.partialorder %v1620, 20.0
  %vm1878 = vcmp.gt.f32.partialorder %v1626, 20.0
  %vm1879 = vcmp.gt.f32.partialorder %v1630, 20.0
  %vm1880 = vcmp.gt.f32.partialorder %v1636, 20.0
  %vm1881 = vcmp.gt.f32.partialorder %v1640, 20.0
  %vm1882 = vcmp.gt.f32.partialorder %v1646, 20.0
  %vm1883 = vcmp.gt.f32.partialorder %v1650, 20.0
  %vm1884 = vcmp.gt.f32.partialorder %v1656, 20.0
  %vm1885 = vcmp.gt.f32.partialorder %v1660, 20.0
  %vm1886 = vcmp.gt.f32.partialorder %v1666, 20.0
  %vm1887 = vcmp.gt.f32.partialorder %v1670, 20.0
  %vm1888 = vcmp.gt.f32.partialorder %v1676, 20.0
  %vm1889 = vcmp.gt.f32.partialorder %v1680, 20.0
  %vm1890 = vcmp.gt.f32.partialorder %v1686, 20.0
  %vm1891 = vcmp.gt.f32.partialorder %v1690, 20.0
  %vm1892 = vcmp.gt.f32.partialorder %v1696, 20.0
  %vm1893 = vcmp.gt.f32.partialorder %v1700, 20.0
  %vm1894 = vcmp.gt.f32.partialorder %v1706, 20.0
  %vm1895 = vcmp.gt.f32.partialorder %v1710, 20.0
  %vm1896 = vcmp.gt.f32.partialorder %v1716, 20.0
  %vm1897 = vcmp.gt.f32.partialorder %v1720, 20.0
  %vm1898 = vcmp.gt.f32.partialorder %v1726, 20.0
  %vm1899 = vcmp.gt.f32.partialorder %v1730, 20.0
  %vm1900 = vcmp.gt.f32.partialorder %v1736, 20.0
  %vm1901 = vcmp.gt.f32.partialorder %v1740, 20.0
  %vm1902 = vcmp.gt.f32.partialorder %v1746, 20.0
  %vm1903 = vcmp.gt.f32.partialorder %v1750, 20.0
  %vm1904 = vcmp.gt.f32.partialorder %v1756, 20.0
  %vm1905 = vcmp.gt.f32.partialorder %v1760, 20.0
  %vm1906 = vcmp.gt.f32.partialorder %v1766, 20.0
  %vm1907 = vcmp.gt.f32.partialorder %v1770, 20.0
  %vm1908 = vcmp.gt.f32.partialorder %v1776, 20.0
  %vm1909 = vcmp.gt.f32.partialorder %v1780, 20.0
  %v1910 = vmin.f32 %v1466, 20.0
  %v1911 = vmin.f32 %v1470, 20.0
  %v1912 = vmin.f32 %v1476, 20.0
  %v1913 = vmin.f32 %v1480, 20.0
  %v1914 = vmin.f32 %v1486, 20.0
  %v1915 = vmin.f32 %v1490, 20.0
  %v1916 = vmin.f32 %v1496, 20.0
  %v1917 = vmin.f32 %v1500, 20.0
  %v1918 = vmin.f32 %v1506, 20.0
  %v1919 = vmin.f32 %v1510, 20.0
  %v1920 = vmin.f32 %v1516, 20.0
  %v1921 = vmin.f32 %v1520, 20.0
  %v1922 = vmin.f32 %v1526, 20.0
  %v1923 = vmin.f32 %v1530, 20.0
  %v1924 = vmin.f32 %v1536, 20.0
  %v1925 = vmin.f32 %v1540, 20.0
  %v1926 = vmin.f32 %v1546, 20.0
  %v1927 = vmin.f32 %v1550, 20.0
  %v1928 = vmin.f32 %v1556, 20.0
  %v1929 = vmin.f32 %v1560, 20.0
  %v1930 = vmin.f32 %v1566, 20.0
  %v1931 = vmin.f32 %v1570, 20.0
  %v1932 = vmin.f32 %v1576, 20.0
  %v1933 = vmin.f32 %v1580, 20.0
  %v1934 = vmin.f32 %v1586, 20.0
  %v1935 = vmin.f32 %v1590, 20.0
  %v1936 = vmin.f32 %v1596, 20.0
  %v1937 = vmin.f32 %v1600, 20.0
  %v1938 = vmin.f32 %v1606, 20.0
  %v1939 = vmin.f32 %v1610, 20.0
  %v1940 = vmin.f32 %v1616, 20.0
  %v1941 = vmin.f32 %v1620, 20.0
  %v1942 = vmin.f32 %v1626, 20.0
  %v1943 = vmin.f32 %v1630, 20.0
  %v1944 = vmin.f32 %v1636, 20.0
  %v1945 = vmin.f32 %v1640, 20.0
  %v1946 = vmin.f32 %v1646, 20.0
  %v1947 = vmin.f32 %v1650, 20.0
  %v1948 = vmin.f32 %v1656, 20.0
  %v1949 = vmin.f32 %v1660, 20.0
  %v1950 = vmin.f32 %v1666, 20.0
  %v1951 = vmin.f32 %v1670, 20.0
  %v1952 = vmin.f32 %v1676, 20.0
  %v1953 = vmin.f32 %v1680, 20.0
  %v1954 = vmin.f32 %v1686, 20.0
  %v1955 = vmin.f32 %v1690, 20.0
  %v1956 = vmin.f32 %v1696, 20.0
  %v1957 = vmin.f32 %v1700, 20.0
  %v1958 = vmin.f32 %v1706, 20.0
  %v1959 = vmin.f32 %v1710, 20.0
  %v1960 = vmin.f32 %v1716, 20.0
  %v1961 = vmin.f32 %v1720, 20.0
  %v1962 = vmin.f32 %v1726, 20.0
  %v1963 = vmin.f32 %v1730, 20.0
  %v1964 = vmin.f32 %v1736, 20.0
  %v1965 = vmin.f32 %v1740, 20.0
  %v1966 = vmin.f32 %v1746, 20.0
  %v1967 = vmin.f32 %v1750, 20.0
  %v1968 = vmin.f32 %v1756, 20.0
  %v1969 = vmin.f32 %v1760, 20.0
  %v1970 = vmin.f32 %v1766, 20.0
  %v1971 = vmin.f32 %v1770, 20.0
  %v1972 = vmin.f32 %v1776, 20.0
  %v1973 = vmin.f32 %v1780, 20.0
  %v1974 = vmul.f32 %v1910, 1.442695
  %v1975 = vpow.pop %v1974
  %v1976 = vmul.f32 %v1911, 1.442695
  %v1977 = vpow.pop %v1976
  %v1978 = vmul.f32 %v1912, 1.442695
  %v1979 = vpow.pop %v1978
  %v1980 = vmul.f32 %v1913, 1.442695
  %v1981 = vpow.pop %v1980
  %v1982 = vmul.f32 %v1914, 1.442695
  %v1983 = vpow.pop %v1982
  %v1984 = vmul.f32 %v1915, 1.442695
  %v1985 = vpow.pop %v1984
  %v1986 = vmul.f32 %v1916, 1.442695
  %v1987 = vpow.pop %v1986
  %v1988 = vmul.f32 %v1917, 1.442695
  %v1989 = vpow.pop %v1988
  %v1990 = vmul.f32 %v1918, 1.442695
  %v1991 = vpow.pop %v1990
  %v1992 = vmul.f32 %v1919, 1.442695
  %v1993 = vpow.pop %v1992
  %v1994 = vmul.f32 %v1920, 1.442695
  %v1995 = vpow.pop %v1994
  %v1996 = vmul.f32 %v1921, 1.442695
  %v1997 = vpow.pop %v1996
  %v1998 = vmul.f32 %v1922, 1.442695
  %v1999 = vpow.pop %v1998
  %v2000 = vmul.f32 %v1923, 1.442695
  %v2001 = vpow.pop %v2000
  %v2002 = vmul.f32 %v1924, 1.442695
  %v2003 = vpow.pop %v2002
  %v2004 = vmul.f32 %v1925, 1.442695
  %v2005 = vpow.pop %v2004
  %v2006 = vmul.f32 %v1926, 1.442695
  %v2007 = vpow.pop %v2006
  %v2008 = vmul.f32 %v1927, 1.442695
  %v2009 = vpow.pop %v2008
  %v2010 = vmul.f32 %v1928, 1.442695
  %v2011 = vpow.pop %v2010
  %v2012 = vmul.f32 %v1929, 1.442695
  %v2013 = vpow.pop %v2012
  %v2014 = vmul.f32 %v1930, 1.442695
  %v2015 = vpow.pop %v2014
  %v2016 = vmul.f32 %v1931, 1.442695
  %v2017 = vpow.pop %v2016
  %v2018 = vmul.f32 %v1932, 1.442695
  %v2019 = vpow.pop %v2018
  %v2020 = vmul.f32 %v1933, 1.442695
  %v2021 = vpow.pop %v2020
  %v2022 = vmul.f32 %v1934, 1.442695
  %v2023 = vpow.pop %v2022
  %v2024 = vmul.f32 %v1935, 1.442695
  %v2025 = vpow.pop %v2024
  %v2026 = vmul.f32 %v1936, 1.442695
  %v2027 = vpow.pop %v2026
  %v2028 = vmul.f32 %v1937, 1.442695
  %v2029 = vpow.pop %v2028
  %v2030 = vmul.f32 %v1938, 1.442695
  %v2031 = vpow.pop %v2030
  %v2032 = vmul.f32 %v1939, 1.442695
  %v2033 = vpow.pop %v2032
  %v2034 = vmul.f32 %v1940, 1.442695
  %v2035 = vpow.pop %v2034
  %v2036 = vmul.f32 %v1941, 1.442695
  %v2037 = vpow.pop %v2036
  %v2038 = vmul.f32 %v1942, 1.442695
  %v2039 = vpow.pop %v2038
  %v2040 = vmul.f32 %v1943, 1.442695
  %v2041 = vpow.pop %v2040
  %v2042 = vmul.f32 %v1944, 1.442695
  %v2043 = vpow.pop %v2042
  %v2044 = vmul.f32 %v1945, 1.442695
  %v2045 = vpow.pop %v2044
  %v2046 = vmul.f32 %v1946, 1.442695
  %v2047 = vpow.pop %v2046
  %v2048 = vmul.f32 %v1947, 1.442695
  %v2049 = vpow.pop %v2048
  %v2050 = vmul.f32 %v1948, 1.442695
  %v2051 = vpow.pop %v2050
  %v2052 = vmul.f32 %v1949, 1.442695
  %v2053 = vpow.pop %v2052
  %v2054 = vmul.f32 %v1950, 1.442695
  %v2055 = vpow.pop %v2054
  %v2056 = vmul.f32 %v1951, 1.442695
  %v2057 = vpow.pop %v2056
  %v2058 = vmul.f32 %v1952, 1.442695
  %v2059 = vpow.pop %v2058
  %v2060 = vmul.f32 %v1953, 1.442695
  %v2061 = vpow.pop %v2060
  %v2062 = vmul.f32 %v1954, 1.442695
  %v2063 = vpow.pop %v2062
  %v2064 = vmul.f32 %v1955, 1.442695
  %v2065 = vpow.pop %v2064
  %v2066 = vmul.f32 %v1956, 1.442695
  %v2067 = vpow.pop %v2066
  %v2068 = vmul.f32 %v1957, 1.442695
  %v2069 = vpow.pop %v2068
  %v2070 = vmul.f32 %v1958, 1.442695
  %v2071 = vpow.pop %v2070
  %v2072 = vmul.f32 %v1959, 1.442695
  %v2073 = vpow.pop %v2072
  %v2074 = vmul.f32 %v1960, 1.442695
  %v2075 = vpow.pop %v2074
  %v2076 = vmul.f32 %v1961, 1.442695
  %v2077 = vpow.pop %v2076
  %v2078 = vmul.f32 %v1962, 1.442695
  %v2079 = vpow.pop %v2078
  %v2080 = vmul.f32 %v1963, 1.442695
  %v2081 = vpow.pop %v2080
  %v2082 = vmul.f32 %v1964, 1.442695
  %v2083 = vpow.pop %v2082
  %v2084 = vmul.f32 %v1965, 1.442695
  %v2085 = vpow.pop %v2084
  %v2086 = vmul.f32 %v1966, 1.442695
  %v2087 = vpow.pop %v2086
  %v2088 = vmul.f32 %v1967, 1.442695
  %v2089 = vpow.pop %v2088
  %v2090 = vmul.f32 %v1968, 1.442695
  %v2091 = vpow.pop %v2090
  %v2092 = vmul.f32 %v1969, 1.442695
  %v2093 = vpow.pop %v2092
  %v2094 = vmul.f32 %v1970, 1.442695
  %v2095 = vpow.pop %v2094
  %v2096 = vmul.f32 %v1971, 1.442695
  %v2097 = vpow.pop %v2096
  %v2098 = vmul.f32 %v1972, 1.442695
  %v2099 = vpow.pop %v2098
  %v2100 = vmul.f32 %v1973, 1.442695
  %v2101 = vpow.pop %v2100
  %v2102 = vadd.f32 %v1975, 1.0
  %v2103 = vlog2.pop %v2102
  %v2104 = vmul.f32 %v2103, 0.6931472
  %v2105 = vmul.f32 -0.5, %v1975
  %v2106 = vadd.f32 %v2105, 1.0
  %v2107 = vmul.f32 %v2106, %v1975
  %v2108 = vand.u32 2147483647, %v1975
  %vm2109 = vcmp.lt.f32.partialorder %v2108, 0.0004427343
  %v2110 = vsel %vm2109, %v2107, %v2104
  %v2111 = vadd.f32 %v1977, 1.0
  %v2112 = vlog2.pop %v2111
  %v2113 = vmul.f32 %v2112, 0.6931472
  %v2114 = vmul.f32 -0.5, %v1977
  %v2115 = vadd.f32 %v2114, 1.0
  %v2116 = vmul.f32 %v2115, %v1977
  %v2117 = vand.u32 2147483647, %v1977
  %vm2118 = vcmp.lt.f32.partialorder %v2117, 0.0004427343
  %v2119 = vsel %vm2118, %v2116, %v2113
  %v2120 = vadd.f32 %v1979, 1.0
  %v2121 = vlog2.pop %v2120
  %v2122 = vmul.f32 %v2121, 0.6931472
  %v2123 = vmul.f32 -0.5, %v1979
  %v2124 = vadd.f32 %v2123, 1.0
  %v2125 = vmul.f32 %v2124, %v1979
  %v2126 = vand.u32 2147483647, %v1979
  %vm2127 = vcmp.lt.f32.partialorder %v2126, 0.0004427343
  %v2128 = vsel %vm2127, %v2125, %v2122
  %v2129 = vadd.f32 %v1981, 1.0
  %v2130 = vlog2.pop %v2129
  %v2131 = vmul.f32 %v2130, 0.6931472
  %v2132 = vmul.f32 -0.5, %v1981
  %v2133 = vadd.f32 %v2132, 1.0
  %v2134 = vmul.f32 %v2133, %v1981
  %v2135 = vand.u32 2147483647, %v1981
  %vm2136 = vcmp.lt.f32.partialorder %v2135, 0.0004427343
  %v2137 = vsel %vm2136, %v2134, %v2131
  %v2138 = vadd.f32 %v1983, 1.0
  %v2139 = vlog2.pop %v2138
  %v2140 = vmul.f32 %v2139, 0.6931472
  %v2141 = vmul.f32 -0.5, %v1983
  %v2142 = vadd.f32 %v2141, 1.0
  %v2143 = vmul.f32 %v2142, %v1983
  %v2144 = vand.u32 2147483647, %v1983
  %vm2145 = vcmp.lt.f32.partialorder %v2144, 0.0004427343
  %v2146 = vsel %vm2145, %v2143, %v2140
  %v2147 = vadd.f32 %v1985, 1.0
  %v2148 = vlog2.pop %v2147
  %v2149 = vmul.f32 %v2148, 0.6931472
  %v2150 = vmul.f32 -0.5, %v1985
  %v2151 = vadd.f32 %v2150, 1.0
  %v2152 = vmul.f32 %v2151, %v1985
  %v2153 = vand.u32 2147483647, %v1985
  %vm2154 = vcmp.lt.f32.partialorder %v2153, 0.0004427343
  %v2155 = vsel %vm2154, %v2152, %v2149
  %v2156 = vadd.f32 %v1987, 1.0
  %v2157 = vlog2.pop %v2156
  %v2158 = vmul.f32 %v2157, 0.6931472
  %v2159 = vmul.f32 -0.5, %v1987
  %v2160 = vadd.f32 %v2159, 1.0
  %v2161 = vmul.f32 %v2160, %v1987
  %v2162 = vand.u32 2147483647, %v1987
  %vm2163 = vcmp.lt.f32.partialorder %v2162, 0.0004427343
  %v2164 = vsel %vm2163, %v2161, %v2158
  %v2165 = vadd.f32 %v1989, 1.0
  %v2166 = vlog2.pop %v2165
  %v2167 = vmul.f32 %v2166, 0.6931472
  %v2168 = vmul.f32 -0.5, %v1989
  %v2169 = vadd.f32 %v2168, 1.0
  %v2170 = vmul.f32 %v2169, %v1989
  %v2171 = vand.u32 2147483647, %v1989
  %vm2172 = vcmp.lt.f32.partialorder %v2171, 0.0004427343
  %v2173 = vsel %vm2172, %v2170, %v2167
  %v2174 = vadd.f32 %v1991, 1.0
  %v2175 = vlog2.pop %v2174
  %v2176 = vmul.f32 %v2175, 0.6931472
  %v2177 = vmul.f32 -0.5, %v1991
  %v2178 = vadd.f32 %v2177, 1.0
  %v2179 = vmul.f32 %v2178, %v1991
  %v2180 = vand.u32 2147483647, %v1991
  %vm2181 = vcmp.lt.f32.partialorder %v2180, 0.0004427343
  %v2182 = vsel %vm2181, %v2179, %v2176
  %v2183 = vadd.f32 %v1993, 1.0
  %v2184 = vlog2.pop %v2183
  %v2185 = vmul.f32 %v2184, 0.6931472
  %v2186 = vmul.f32 -0.5, %v1993
  %v2187 = vadd.f32 %v2186, 1.0
  %v2188 = vmul.f32 %v2187, %v1993
  %v2189 = vand.u32 2147483647, %v1993
  %vm2190 = vcmp.lt.f32.partialorder %v2189, 0.0004427343
  %v2191 = vsel %vm2190, %v2188, %v2185
  %v2192 = vadd.f32 %v1995, 1.0
  %v2193 = vlog2.pop %v2192
  %v2194 = vmul.f32 %v2193, 0.6931472
  %v2195 = vmul.f32 -0.5, %v1995
  %v2196 = vadd.f32 %v2195, 1.0
  %v2197 = vmul.f32 %v2196, %v1995
  %v2198 = vand.u32 2147483647, %v1995
  %vm2199 = vcmp.lt.f32.partialorder %v2198, 0.0004427343
  %v2200 = vsel %vm2199, %v2197, %v2194
  %v2201 = vadd.f32 %v1997, 1.0
  %v2202 = vlog2.pop %v2201
  %v2203 = vmul.f32 %v2202, 0.6931472
  %v2204 = vmul.f32 -0.5, %v1997
  %v2205 = vadd.f32 %v2204, 1.0
  %v2206 = vmul.f32 %v2205, %v1997
  %v2207 = vand.u32 2147483647, %v1997
  %vm2208 = vcmp.lt.f32.partialorder %v2207, 0.0004427343
  %v2209 = vsel %vm2208, %v2206, %v2203
  %v2210 = vadd.f32 %v1999, 1.0
  %v2211 = vlog2.pop %v2210
  %v2212 = vmul.f32 %v2211, 0.6931472
  %v2213 = vmul.f32 -0.5, %v1999
  %v2214 = vadd.f32 %v2213, 1.0
  %v2215 = vmul.f32 %v2214, %v1999
  %v2216 = vand.u32 2147483647, %v1999
  %vm2217 = vcmp.lt.f32.partialorder %v2216, 0.0004427343
  %v2218 = vsel %vm2217, %v2215, %v2212
  %v2219 = vadd.f32 %v2001, 1.0
  %v2220 = vlog2.pop %v2219
  %v2221 = vmul.f32 %v2220, 0.6931472
  %v2222 = vmul.f32 -0.5, %v2001
  %v2223 = vadd.f32 %v2222, 1.0
  %v2224 = vmul.f32 %v2223, %v2001
  %v2225 = vand.u32 2147483647, %v2001
  %vm2226 = vcmp.lt.f32.partialorder %v2225, 0.0004427343
  %v2227 = vsel %vm2226, %v2224, %v2221
  %v2228 = vadd.f32 %v2003, 1.0
  %v2229 = vlog2.pop %v2228
  %v2230 = vmul.f32 %v2229, 0.6931472
  %v2231 = vmul.f32 -0.5, %v2003
  %v2232 = vadd.f32 %v2231, 1.0
  %v2233 = vmul.f32 %v2232, %v2003
  %v2234 = vand.u32 2147483647, %v2003
  %vm2235 = vcmp.lt.f32.partialorder %v2234, 0.0004427343
  %v2236 = vsel %vm2235, %v2233, %v2230
  %v2237 = vadd.f32 %v2005, 1.0
  %v2238 = vlog2.pop %v2237
  %v2239 = vmul.f32 %v2238, 0.6931472
  %v2240 = vmul.f32 -0.5, %v2005
  %v2241 = vadd.f32 %v2240, 1.0
  %v2242 = vmul.f32 %v2241, %v2005
  %v2243 = vand.u32 2147483647, %v2005
  %vm2244 = vcmp.lt.f32.partialorder %v2243, 0.0004427343
  %v2245 = vsel %vm2244, %v2242, %v2239
  %v2246 = vadd.f32 %v2007, 1.0
  %v2247 = vlog2.pop %v2246
  %v2248 = vmul.f32 %v2247, 0.6931472
  %v2249 = vmul.f32 -0.5, %v2007
  %v2250 = vadd.f32 %v2249, 1.0
  %v2251 = vmul.f32 %v2250, %v2007
  %v2252 = vand.u32 2147483647, %v2007
  %vm2253 = vcmp.lt.f32.partialorder %v2252, 0.0004427343
  %v2254 = vsel %vm2253, %v2251, %v2248
  %v2255 = vadd.f32 %v2009, 1.0
  %v2256 = vlog2.pop %v2255
  %v2257 = vmul.f32 %v2256, 0.6931472
  %v2258 = vmul.f32 -0.5, %v2009
  %v2259 = vadd.f32 %v2258, 1.0
  %v2260 = vmul.f32 %v2259, %v2009
  %v2261 = vand.u32 2147483647, %v2009
  %vm2262 = vcmp.lt.f32.partialorder %v2261, 0.0004427343
  %v2263 = vsel %vm2262, %v2260, %v2257
  %v2264 = vadd.f32 %v2011, 1.0
  %v2265 = vlog2.pop %v2264
  %v2266 = vmul.f32 %v2265, 0.6931472
  %v2267 = vmul.f32 -0.5, %v2011
  %v2268 = vadd.f32 %v2267, 1.0
  %v2269 = vmul.f32 %v2268, %v2011
  %v2270 = vand.u32 2147483647, %v2011
  %vm2271 = vcmp.lt.f32.partialorder %v2270, 0.0004427343
  %v2272 = vsel %vm2271, %v2269, %v2266
  %v2273 = vadd.f32 %v2013, 1.0
  %v2274 = vlog2.pop %v2273
  %v2275 = vmul.f32 %v2274, 0.6931472
  %v2276 = vmul.f32 -0.5, %v2013
  %v2277 = vadd.f32 %v2276, 1.0
  %v2278 = vmul.f32 %v2277, %v2013
  %v2279 = vand.u32 2147483647, %v2013
  %vm2280 = vcmp.lt.f32.partialorder %v2279, 0.0004427343
  %v2281 = vsel %vm2280, %v2278, %v2275
  %v2282 = vadd.f32 %v2015, 1.0
  %v2283 = vlog2.pop %v2282
  %v2284 = vmul.f32 %v2283, 0.6931472
  %v2285 = vmul.f32 -0.5, %v2015
  %v2286 = vadd.f32 %v2285, 1.0
  %v2287 = vmul.f32 %v2286, %v2015
  %v2288 = vand.u32 2147483647, %v2015
  %vm2289 = vcmp.lt.f32.partialorder %v2288, 0.0004427343
  %v2290 = vsel %vm2289, %v2287, %v2284
  %v2291 = vadd.f32 %v2017, 1.0
  %v2292 = vlog2.pop %v2291
  %v2293 = vmul.f32 %v2292, 0.6931472
  %v2294 = vmul.f32 -0.5, %v2017
  %v2295 = vadd.f32 %v2294, 1.0
  %v2296 = vmul.f32 %v2295, %v2017
  %v2297 = vand.u32 2147483647, %v2017
  %vm2298 = vcmp.lt.f32.partialorder %v2297, 0.0004427343
  %v2299 = vsel %vm2298, %v2296, %v2293
  %v2300 = vadd.f32 %v2019, 1.0
  %v2301 = vlog2.pop %v2300
  %v2302 = vmul.f32 %v2301, 0.6931472
  %v2303 = vmul.f32 -0.5, %v2019
  %v2304 = vadd.f32 %v2303, 1.0
  %v2305 = vmul.f32 %v2304, %v2019
  %v2306 = vand.u32 2147483647, %v2019
  %vm2307 = vcmp.lt.f32.partialorder %v2306, 0.0004427343
  %v2308 = vsel %vm2307, %v2305, %v2302
  %v2309 = vadd.f32 %v2021, 1.0
  %v2310 = vlog2.pop %v2309
  %v2311 = vmul.f32 %v2310, 0.6931472
  %v2312 = vmul.f32 -0.5, %v2021
  %v2313 = vadd.f32 %v2312, 1.0
  %v2314 = vmul.f32 %v2313, %v2021
  %v2315 = vand.u32 2147483647, %v2021
  %vm2316 = vcmp.lt.f32.partialorder %v2315, 0.0004427343
  %v2317 = vsel %vm2316, %v2314, %v2311
  %v2318 = vadd.f32 %v2023, 1.0
  %v2319 = vlog2.pop %v2318
  %v2320 = vmul.f32 %v2319, 0.6931472
  %v2321 = vmul.f32 -0.5, %v2023
  %v2322 = vadd.f32 %v2321, 1.0
  %v2323 = vmul.f32 %v2322, %v2023
  %v2324 = vand.u32 2147483647, %v2023
  %vm2325 = vcmp.lt.f32.partialorder %v2324, 0.0004427343
  %v2326 = vsel %vm2325, %v2323, %v2320
  %v2327 = vadd.f32 %v2025, 1.0
  %v2328 = vlog2.pop %v2327
  %v2329 = vmul.f32 %v2328, 0.6931472
  %v2330 = vmul.f32 -0.5, %v2025
  %v2331 = vadd.f32 %v2330, 1.0
  %v2332 = vmul.f32 %v2331, %v2025
  %v2333 = vand.u32 2147483647, %v2025
  %vm2334 = vcmp.lt.f32.partialorder %v2333, 0.0004427343
  %v2335 = vsel %vm2334, %v2332, %v2329
  %v2336 = vadd.f32 %v2027, 1.0
  %v2337 = vlog2.pop %v2336
  %v2338 = vmul.f32 %v2337, 0.6931472
  %v2339 = vmul.f32 -0.5, %v2027
  %v2340 = vadd.f32 %v2339, 1.0
  %v2341 = vmul.f32 %v2340, %v2027
  %v2342 = vand.u32 2147483647, %v2027
  %vm2343 = vcmp.lt.f32.partialorder %v2342, 0.0004427343
  %v2344 = vsel %vm2343, %v2341, %v2338
  %v2345 = vadd.f32 %v2029, 1.0
  %v2346 = vlog2.pop %v2345
  %v2347 = vmul.f32 %v2346, 0.6931472
  %v2348 = vmul.f32 -0.5, %v2029
  %v2349 = vadd.f32 %v2348, 1.0
  %v2350 = vmul.f32 %v2349, %v2029
  %v2351 = vand.u32 2147483647, %v2029
  %vm2352 = vcmp.lt.f32.partialorder %v2351, 0.0004427343
  %v2353 = vsel %vm2352, %v2350, %v2347
  %v2354 = vadd.f32 %v2031, 1.0
  %v2355 = vlog2.pop %v2354
  %v2356 = vmul.f32 %v2355, 0.6931472
  %v2357 = vmul.f32 -0.5, %v2031
  %v2358 = vadd.f32 %v2357, 1.0
  %v2359 = vmul.f32 %v2358, %v2031
  %v2360 = vand.u32 2147483647, %v2031
  %vm2361 = vcmp.lt.f32.partialorder %v2360, 0.0004427343
  %v2362 = vsel %vm2361, %v2359, %v2356
  %v2363 = vadd.f32 %v2033, 1.0
  %v2364 = vlog2.pop %v2363
  %v2365 = vmul.f32 %v2364, 0.6931472
  %v2366 = vmul.f32 -0.5, %v2033
  %v2367 = vadd.f32 %v2366, 1.0
  %v2368 = vmul.f32 %v2367, %v2033
  %v2369 = vand.u32 2147483647, %v2033
  %vm2370 = vcmp.lt.f32.partialorder %v2369, 0.0004427343
  %v2371 = vsel %vm2370, %v2368, %v2365
  %v2372 = vadd.f32 %v2035, 1.0
  %v2373 = vlog2.pop %v2372
  %v2374 = vmul.f32 %v2373, 0.6931472
  %v2375 = vmul.f32 -0.5, %v2035
  %v2376 = vadd.f32 %v2375, 1.0
  %v2377 = vmul.f32 %v2376, %v2035
  %v2378 = vand.u32 2147483647, %v2035
  %vm2379 = vcmp.lt.f32.partialorder %v2378, 0.0004427343
  %v2380 = vsel %vm2379, %v2377, %v2374
  %v2381 = vadd.f32 %v2037, 1.0
  %v2382 = vlog2.pop %v2381
  %v2383 = vmul.f32 %v2382, 0.6931472
  %v2384 = vmul.f32 -0.5, %v2037
  %v2385 = vadd.f32 %v2384, 1.0
  %v2386 = vmul.f32 %v2385, %v2037
  %v2387 = vand.u32 2147483647, %v2037
  %vm2388 = vcmp.lt.f32.partialorder %v2387, 0.0004427343
  %v2389 = vsel %vm2388, %v2386, %v2383
  %v2390 = vadd.f32 %v2039, 1.0
  %v2391 = vlog2.pop %v2390
  %v2392 = vmul.f32 %v2391, 0.6931472
  %v2393 = vmul.f32 -0.5, %v2039
  %v2394 = vadd.f32 %v2393, 1.0
  %v2395 = vmul.f32 %v2394, %v2039
  %v2396 = vand.u32 2147483647, %v2039
  %vm2397 = vcmp.lt.f32.partialorder %v2396, 0.0004427343
  %v2398 = vsel %vm2397, %v2395, %v2392
  %v2399 = vadd.f32 %v2041, 1.0
  %v2400 = vlog2.pop %v2399
  %v2401 = vmul.f32 %v2400, 0.6931472
  %v2402 = vmul.f32 -0.5, %v2041
  %v2403 = vadd.f32 %v2402, 1.0
  %v2404 = vmul.f32 %v2403, %v2041
  %v2405 = vand.u32 2147483647, %v2041
  %vm2406 = vcmp.lt.f32.partialorder %v2405, 0.0004427343
  %v2407 = vsel %vm2406, %v2404, %v2401
  %v2408 = vadd.f32 %v2043, 1.0
  %v2409 = vlog2.pop %v2408
  %v2410 = vmul.f32 %v2409, 0.6931472
  %v2411 = vmul.f32 -0.5, %v2043
  %v2412 = vadd.f32 %v2411, 1.0
  %v2413 = vmul.f32 %v2412, %v2043
  %v2414 = vand.u32 2147483647, %v2043
  %vm2415 = vcmp.lt.f32.partialorder %v2414, 0.0004427343
  %v2416 = vsel %vm2415, %v2413, %v2410
  %v2417 = vadd.f32 %v2045, 1.0
  %v2418 = vlog2.pop %v2417
  %v2419 = vmul.f32 %v2418, 0.6931472
  %v2420 = vmul.f32 -0.5, %v2045
  %v2421 = vadd.f32 %v2420, 1.0
  %v2422 = vmul.f32 %v2421, %v2045
  %v2423 = vand.u32 2147483647, %v2045
  %vm2424 = vcmp.lt.f32.partialorder %v2423, 0.0004427343
  %v2425 = vsel %vm2424, %v2422, %v2419
  %v2426 = vadd.f32 %v2047, 1.0
  %v2427 = vlog2.pop %v2426
  %v2428 = vmul.f32 %v2427, 0.6931472
  %v2429 = vmul.f32 -0.5, %v2047
  %v2430 = vadd.f32 %v2429, 1.0
  %v2431 = vmul.f32 %v2430, %v2047
  %v2432 = vand.u32 2147483647, %v2047
  %vm2433 = vcmp.lt.f32.partialorder %v2432, 0.0004427343
  %v2434 = vsel %vm2433, %v2431, %v2428
  %v2435 = vadd.f32 %v2049, 1.0
  %v2436 = vlog2.pop %v2435
  %v2437 = vmul.f32 %v2436, 0.6931472
  %v2438 = vmul.f32 -0.5, %v2049
  %v2439 = vadd.f32 %v2438, 1.0
  %v2440 = vmul.f32 %v2439, %v2049
  %v2441 = vand.u32 2147483647, %v2049
  %vm2442 = vcmp.lt.f32.partialorder %v2441, 0.0004427343
  %v2443 = vsel %vm2442, %v2440, %v2437
  %v2444 = vadd.f32 %v2051, 1.0
  %v2445 = vlog2.pop %v2444
  %v2446 = vmul.f32 %v2445, 0.6931472
  %v2447 = vmul.f32 -0.5, %v2051
  %v2448 = vadd.f32 %v2447, 1.0
  %v2449 = vmul.f32 %v2448, %v2051
  %v2450 = vand.u32 2147483647, %v2051
  %vm2451 = vcmp.lt.f32.partialorder %v2450, 0.0004427343
  %v2452 = vsel %vm2451, %v2449, %v2446
  %v2453 = vadd.f32 %v2053, 1.0
  %v2454 = vlog2.pop %v2453
  %v2455 = vmul.f32 %v2454, 0.6931472
  %v2456 = vmul.f32 -0.5, %v2053
  %v2457 = vadd.f32 %v2456, 1.0
  %v2458 = vmul.f32 %v2457, %v2053
  %v2459 = vand.u32 2147483647, %v2053
  %vm2460 = vcmp.lt.f32.partialorder %v2459, 0.0004427343
  %v2461 = vsel %vm2460, %v2458, %v2455
  %v2462 = vadd.f32 %v2055, 1.0
  %v2463 = vlog2.pop %v2462
  %v2464 = vmul.f32 %v2463, 0.6931472
  %v2465 = vmul.f32 -0.5, %v2055
  %v2466 = vadd.f32 %v2465, 1.0
  %v2467 = vmul.f32 %v2466, %v2055
  %v2468 = vand.u32 2147483647, %v2055
  %vm2469 = vcmp.lt.f32.partialorder %v2468, 0.0004427343
  %v2470 = vsel %vm2469, %v2467, %v2464
  %v2471 = vadd.f32 %v2057, 1.0
  %v2472 = vlog2.pop %v2471
  %v2473 = vmul.f32 %v2472, 0.6931472
  %v2474 = vmul.f32 -0.5, %v2057
  %v2475 = vadd.f32 %v2474, 1.0
  %v2476 = vmul.f32 %v2475, %v2057
  %v2477 = vand.u32 2147483647, %v2057
  %vm2478 = vcmp.lt.f32.partialorder %v2477, 0.0004427343
  %v2479 = vsel %vm2478, %v2476, %v2473
  %v2480 = vadd.f32 %v2059, 1.0
  %v2481 = vlog2.pop %v2480
  %v2482 = vmul.f32 %v2481, 0.6931472
  %v2483 = vmul.f32 -0.5, %v2059
  %v2484 = vadd.f32 %v2483, 1.0
  %v2485 = vmul.f32 %v2484, %v2059
  %v2486 = vand.u32 2147483647, %v2059
  %vm2487 = vcmp.lt.f32.partialorder %v2486, 0.0004427343
  %v2488 = vsel %vm2487, %v2485, %v2482
  %v2489 = vadd.f32 %v2061, 1.0
  %v2490 = vlog2.pop %v2489
  %v2491 = vmul.f32 %v2490, 0.6931472
  %v2492 = vmul.f32 -0.5, %v2061
  %v2493 = vadd.f32 %v2492, 1.0
  %v2494 = vmul.f32 %v2493, %v2061
  %v2495 = vand.u32 2147483647, %v2061
  %vm2496 = vcmp.lt.f32.partialorder %v2495, 0.0004427343
  %v2497 = vsel %vm2496, %v2494, %v2491
  %v2498 = vadd.f32 %v2063, 1.0
  %v2499 = vlog2.pop %v2498
  %v2500 = vmul.f32 %v2499, 0.6931472
  %v2501 = vmul.f32 -0.5, %v2063
  %v2502 = vadd.f32 %v2501, 1.0
  %v2503 = vmul.f32 %v2502, %v2063
  %v2504 = vand.u32 2147483647, %v2063
  %vm2505 = vcmp.lt.f32.partialorder %v2504, 0.0004427343
  %v2506 = vsel %vm2505, %v2503, %v2500
  %v2507 = vadd.f32 %v2065, 1.0
  %v2508 = vlog2.pop %v2507
  %v2509 = vmul.f32 %v2508, 0.6931472
  %v2510 = vmul.f32 -0.5, %v2065
  %v2511 = vadd.f32 %v2510, 1.0
  %v2512 = vmul.f32 %v2511, %v2065
  %v2513 = vand.u32 2147483647, %v2065
  %vm2514 = vcmp.lt.f32.partialorder %v2513, 0.0004427343
  %v2515 = vsel %vm2514, %v2512, %v2509
  %v2516 = vadd.f32 %v2067, 1.0
  %v2517 = vlog2.pop %v2516
  %v2518 = vmul.f32 %v2517, 0.6931472
  %v2519 = vmul.f32 -0.5, %v2067
  %v2520 = vadd.f32 %v2519, 1.0
  %v2521 = vmul.f32 %v2520, %v2067
  %v2522 = vand.u32 2147483647, %v2067
  %vm2523 = vcmp.lt.f32.partialorder %v2522, 0.0004427343
  %v2524 = vsel %vm2523, %v2521, %v2518
  %v2525 = vadd.f32 %v2069, 1.0
  %v2526 = vlog2.pop %v2525
  %v2527 = vmul.f32 %v2526, 0.6931472
  %v2528 = vmul.f32 -0.5, %v2069
  %v2529 = vadd.f32 %v2528, 1.0
  %v2530 = vmul.f32 %v2529, %v2069
  %v2531 = vand.u32 2147483647, %v2069
  %vm2532 = vcmp.lt.f32.partialorder %v2531, 0.0004427343
  %v2533 = vsel %vm2532, %v2530, %v2527
  %v2534 = vadd.f32 %v2071, 1.0
  %v2535 = vlog2.pop %v2534
  %v2536 = vmul.f32 %v2535, 0.6931472
  %v2537 = vmul.f32 -0.5, %v2071
  %v2538 = vadd.f32 %v2537, 1.0
  %v2539 = vmul.f32 %v2538, %v2071
  %v2540 = vand.u32 2147483647, %v2071
  %vm2541 = vcmp.lt.f32.partialorder %v2540, 0.0004427343
  %v2542 = vsel %vm2541, %v2539, %v2536
  %v2543 = vadd.f32 %v2073, 1.0
  %v2544 = vlog2.pop %v2543
  %v2545 = vmul.f32 %v2544, 0.6931472
  %v2546 = vmul.f32 -0.5, %v2073
  %v2547 = vadd.f32 %v2546, 1.0
  %v2548 = vmul.f32 %v2547, %v2073
  %v2549 = vand.u32 2147483647, %v2073
  %vm2550 = vcmp.lt.f32.partialorder %v2549, 0.0004427343
  %v2551 = vsel %vm2550, %v2548, %v2545
  %v2552 = vadd.f32 %v2075, 1.0
  %v2553 = vlog2.pop %v2552
  %v2554 = vmul.f32 %v2553, 0.6931472
  %v2555 = vmul.f32 -0.5, %v2075
  %v2556 = vadd.f32 %v2555, 1.0
  %v2557 = vmul.f32 %v2556, %v2075
  %v2558 = vand.u32 2147483647, %v2075
  %vm2559 = vcmp.lt.f32.partialorder %v2558, 0.0004427343
  %v2560 = vsel %vm2559, %v2557, %v2554
  %v2561 = vadd.f32 %v2077, 1.0
  %v2562 = vlog2.pop %v2561
  %v2563 = vmul.f32 %v2562, 0.6931472
  %v2564 = vmul.f32 -0.5, %v2077
  %v2565 = vadd.f32 %v2564, 1.0
  %v2566 = vmul.f32 %v2565, %v2077
  %v2567 = vand.u32 2147483647, %v2077
  %vm2568 = vcmp.lt.f32.partialorder %v2567, 0.0004427343
  %v2569 = vsel %vm2568, %v2566, %v2563
  %v2570 = vadd.f32 %v2079, 1.0
  %v2571 = vlog2.pop %v2570
  %v2572 = vmul.f32 %v2571, 0.6931472
  %v2573 = vmul.f32 -0.5, %v2079
  %v2574 = vadd.f32 %v2573, 1.0
  %v2575 = vmul.f32 %v2574, %v2079
  %v2576 = vand.u32 2147483647, %v2079
  %vm2577 = vcmp.lt.f32.partialorder %v2576, 0.0004427343
  %v2578 = vsel %vm2577, %v2575, %v2572
  %v2579 = vadd.f32 %v2081, 1.0
  %v2580 = vlog2.pop %v2579
  %v2581 = vmul.f32 %v2580, 0.6931472
  %v2582 = vmul.f32 -0.5, %v2081
  %v2583 = vadd.f32 %v2582, 1.0
  %v2584 = vmul.f32 %v2583, %v2081
  %v2585 = vand.u32 2147483647, %v2081
  %vm2586 = vcmp.lt.f32.partialorder %v2585, 0.0004427343
  %v2587 = vsel %vm2586, %v2584, %v2581
  %v2588 = vadd.f32 %v2083, 1.0
  %v2589 = vlog2.pop %v2588
  %v2590 = vmul.f32 %v2589, 0.6931472
  %v2591 = vmul.f32 -0.5, %v2083
  %v2592 = vadd.f32 %v2591, 1.0
  %v2593 = vmul.f32 %v2592, %v2083
  %v2594 = vand.u32 2147483647, %v2083
  %vm2595 = vcmp.lt.f32.partialorder %v2594, 0.0004427343
  %v2596 = vsel %vm2595, %v2593, %v2590
  %v2597 = vadd.f32 %v2085, 1.0
  %v2598 = vlog2.pop %v2597
  %v2599 = vmul.f32 %v2598, 0.6931472
  %v2600 = vmul.f32 -0.5, %v2085
  %v2601 = vadd.f32 %v2600, 1.0
  %v2602 = vmul.f32 %v2601, %v2085
  %v2603 = vand.u32 2147483647, %v2085
  %vm2604 = vcmp.lt.f32.partialorder %v2603, 0.0004427343
  %v2605 = vsel %vm2604, %v2602, %v2599
  %v2606 = vadd.f32 %v2087, 1.0
  %v2607 = vlog2.pop %v2606
  %v2608 = vmul.f32 %v2607, 0.6931472
  %v2609 = vmul.f32 -0.5, %v2087
  %v2610 = vadd.f32 %v2609, 1.0
  %v2611 = vmul.f32 %v2610, %v2087
  %v2612 = vand.u32 2147483647, %v2087
  %vm2613 = vcmp.lt.f32.partialorder %v2612, 0.0004427343
  %v2614 = vsel %vm2613, %v2611, %v2608
  %v2615 = vadd.f32 %v2089, 1.0
  %v2616 = vlog2.pop %v2615
  %v2617 = vmul.f32 %v2616, 0.6931472
  %v2618 = vmul.f32 -0.5, %v2089
  %v2619 = vadd.f32 %v2618, 1.0
  %v2620 = vmul.f32 %v2619, %v2089
  %v2621 = vand.u32 2147483647, %v2089
  %vm2622 = vcmp.lt.f32.partialorder %v2621, 0.0004427343
  %v2623 = vsel %vm2622, %v2620, %v2617
  %v2624 = vadd.f32 %v2091, 1.0
  %v2625 = vlog2.pop %v2624
  %v2626 = vmul.f32 %v2625, 0.6931472
  %v2627 = vmul.f32 -0.5, %v2091
  %v2628 = vadd.f32 %v2627, 1.0
  %v2629 = vmul.f32 %v2628, %v2091
  %v2630 = vand.u32 2147483647, %v2091
  %vm2631 = vcmp.lt.f32.partialorder %v2630, 0.0004427343
  %v2632 = vsel %vm2631, %v2629, %v2626
  %v2633 = vadd.f32 %v2093, 1.0
  %v2634 = vlog2.pop %v2633
  %v2635 = vmul.f32 %v2634, 0.6931472
  %v2636 = vmul.f32 -0.5, %v2093
  %v2637 = vadd.f32 %v2636, 1.0
  %v2638 = vmul.f32 %v2637, %v2093
  %v2639 = vand.u32 2147483647, %v2093
  %vm2640 = vcmp.lt.f32.partialorder %v2639, 0.0004427343
  %v2641 = vsel %vm2640, %v2638, %v2635
  %v2642 = vadd.f32 %v2095, 1.0
  %v2643 = vlog2.pop %v2642
  %v2644 = vmul.f32 %v2643, 0.6931472
  %v2645 = vmul.f32 -0.5, %v2095
  %v2646 = vadd.f32 %v2645, 1.0
  %v2647 = vmul.f32 %v2646, %v2095
  %v2648 = vand.u32 2147483647, %v2095
  %vm2649 = vcmp.lt.f32.partialorder %v2648, 0.0004427343
  %v2650 = vsel %vm2649, %v2647, %v2644
  %v2651 = vadd.f32 %v2097, 1.0
  %v2652 = vlog2.pop %v2651
  %v2653 = vmul.f32 %v2652, 0.6931472
  %v2654 = vmul.f32 -0.5, %v2097
  %v2655 = vadd.f32 %v2654, 1.0
  %v2656 = vmul.f32 %v2655, %v2097
  %v2657 = vand.u32 2147483647, %v2097
  %vm2658 = vcmp.lt.f32.partialorder %v2657, 0.0004427343
  %v2659 = vsel %vm2658, %v2656, %v2653
  %v2660 = vadd.f32 %v2099, 1.0
  %v2661 = vlog2.pop %v2660
  %v2662 = vmul.f32 %v2661, 0.6931472
  %v2663 = vmul.f32 -0.5, %v2099
  %v2664 = vadd.f32 %v2663, 1.0
  %v2665 = vmul.f32 %v2664, %v2099
  %v2666 = vand.u32 2147483647, %v2099
  %vm2667 = vcmp.lt.f32.partialorder %v2666, 0.0004427343
  %v2668 = vsel %vm2667, %v2665, %v2662
  %v2669 = vadd.f32 %v2101, 1.0
  %v2670 = vlog2.pop %v2669
  %v2671 = vmul.f32 %v2670, 0.6931472
  %v2672 = vmul.f32 -0.5, %v2101
  %v2673 = vadd.f32 %v2672, 1.0
  %v2674 = vmul.f32 %v2673, %v2101
  %v2675 = vand.u32 2147483647, %v2101
  %vm2676 = vcmp.lt.f32.partialorder %v2675, 0.0004427343
  %v2677 = vsel %vm2676, %v2674, %v2671
  %v2678 = vsel %vm1846, %v1466, %v2110
  %v2679 = vsel %vm1847, %v1470, %v2119
  %v2680 = vsel %vm1848, %v1476, %v2128
  %v2681 = vsel %vm1849, %v1480, %v2137
  %v2682 = vsel %vm1850, %v1486, %v2146
  %v2683 = vsel %vm1851, %v1490, %v2155
  %v2684 = vsel %vm1852, %v1496, %v2164
  %v2685 = vsel %vm1853, %v1500, %v2173
  %v2686 = vsel %vm1854, %v1506, %v2182
  %v2687 = vsel %vm1855, %v1510, %v2191
  %v2688 = vsel %vm1856, %v1516, %v2200
  %v2689 = vsel %vm1857, %v1520, %v2209
  %v2690 = vsel %vm1858, %v1526, %v2218
  %v2691 = vsel %vm1859, %v1530, %v2227
  %v2692 = vsel %vm1860, %v1536, %v2236
  %v2693 = vsel %vm1861, %v1540, %v2245
  %v2694 = vsel %vm1862, %v1546, %v2254
  %v2695 = vsel %vm1863, %v1550, %v2263
  %v2696 = vsel %vm1864, %v1556, %v2272
  %v2697 = vsel %vm1865, %v1560, %v2281
  %v2698 = vsel %vm1866, %v1566, %v2290
  %v2699 = vsel %vm1867, %v1570, %v2299
  %v2700 = vsel %vm1868, %v1576, %v2308
  %v2701 = vsel %vm1869, %v1580, %v2317
  %v2702 = vsel %vm1870, %v1586, %v2326
  %v2703 = vsel %vm1871, %v1590, %v2335
  %v2704 = vsel %vm1872, %v1596, %v2344
  %v2705 = vsel %vm1873, %v1600, %v2353
  %v2706 = vsel %vm1874, %v1606, %v2362
  %v2707 = vsel %vm1875, %v1610, %v2371
  %v2708 = vsel %vm1876, %v1616, %v2380
  %v2709 = vsel %vm1877, %v1620, %v2389
  %v2710 = vsel %vm1878, %v1626, %v2398
  %v2711 = vsel %vm1879, %v1630, %v2407
  %v2712 = vsel %vm1880, %v1636, %v2416
  %v2713 = vsel %vm1881, %v1640, %v2425
  %v2714 = vsel %vm1882, %v1646, %v2434
  %v2715 = vsel %vm1883, %v1650, %v2443
  %v2716 = vsel %vm1884, %v1656, %v2452
  %v2717 = vsel %vm1885, %v1660, %v2461
  %v2718 = vsel %vm1886, %v1666, %v2470
  %v2719 = vsel %vm1887, %v1670, %v2479
  %v2720 = vsel %vm1888, %v1676, %v2488
  %v2721 = vsel %vm1889, %v1680, %v2497
  %v2722 = vsel %vm1890, %v1686, %v2506
  %v2723 = vsel %vm1891, %v1690, %v2515
  %v2724 = vsel %vm1892, %v1696, %v2524
  %v2725 = vsel %vm1893, %v1700, %v2533
  %v2726 = vsel %vm1894, %v1706, %v2542
  %v2727 = vsel %vm1895, %v1710, %v2551
  %v2728 = vsel %vm1896, %v1716, %v2560
  %v2729 = vsel %vm1897, %v1720, %v2569
  %v2730 = vsel %vm1898, %v1726, %v2578
  %v2731 = vsel %vm1899, %v1730, %v2587
  %v2732 = vsel %vm1900, %v1736, %v2596
  %v2733 = vsel %vm1901, %v1740, %v2605
  %v2734 = vsel %vm1902, %v1746, %v2614
  %v2735 = vsel %vm1903, %v1750, %v2623
  %v2736 = vsel %vm1904, %v1756, %v2632
  %v2737 = vsel %vm1905, %v1760, %v2641
  %v2738 = vsel %vm1906, %v1766, %v2650
  %v2739 = vsel %vm1907, %v1770, %v2659
  %v2740 = vsel %vm1908, %v1776, %v2668
  %v2741 = vsel %vm1909, %v1780, %v2677
  %v2742 = vpack.c.bf16 %v1783, %v1782
  %v2743 = vpack.c.bf16 %v1785, %v1784
  %v2744 = vpack.c.bf16 %v1787, %v1786
  %v2745 = vpack.c.bf16 %v1789, %v1788
  %v2746 = vpack.c.bf16 %v1791, %v1790
  %v2747 = vpack.c.bf16 %v1793, %v1792
  %v2748 = vpack.c.bf16 %v1795, %v1794
  %v2749 = vpack.c.bf16 %v1797, %v1796
  %v2750 = vpack.c.bf16 %v1799, %v1798
  %v2751 = vpack.c.bf16 %v1801, %v1800
  %v2752 = vpack.c.bf16 %v1803, %v1802
  %v2753 = vpack.c.bf16 %v1805, %v1804
  %v2754 = vpack.c.bf16 %v1807, %v1806
  %v2755 = vpack.c.bf16 %v1809, %v1808
  %v2756 = vpack.c.bf16 %v1811, %v1810
  %v2757 = vpack.c.bf16 %v1813, %v1812
  %v2758 = vpack.c.bf16 %v1815, %v1814
  %v2759 = vpack.c.bf16 %v1817, %v1816
  %v2760 = vpack.c.bf16 %v1819, %v1818
  %v2761 = vpack.c.bf16 %v1821, %v1820
  %v2762 = vpack.c.bf16 %v1823, %v1822
  %v2763 = vpack.c.bf16 %v1825, %v1824
  %v2764 = vpack.c.bf16 %v1827, %v1826
  %v2765 = vpack.c.bf16 %v1829, %v1828
  %v2766 = vpack.c.bf16 %v1831, %v1830
  %v2767 = vpack.c.bf16 %v1833, %v1832
  %v2768 = vpack.c.bf16 %v1835, %v1834
  %v2769 = vpack.c.bf16 %v1837, %v1836
  %v2770 = vpack.c.bf16 %v1839, %v1838
  %v2771 = vpack.c.bf16 %v1841, %v1840
  %v2772 = vpack.c.bf16 %v1843, %v1842
  %v2773 = vpack.c.bf16 %v1845, %v1844
  %v2774 = vld [vmem:[%s7] sm:$0xf]
  %v2775 = vld [vmem:[%s7 + $0x4] sm:$0xf]
  %v2776 = vld [vmem:[%s7 + $0x8] sm:$0xf]
  %v2777 = vld [vmem:[%s7 + $0xc] sm:$0xf]
  %v2778 = vld [vmem:[%s7 + $0x10] sm:$0xf]
  %v2779 = vld [vmem:[%s7 + $0x14] sm:$0xf]
  %v2780 = vld [vmem:[%s7 + $0x18] sm:$0xf]
  %v2781 = vld [vmem:[%s7 + $0x1c] sm:$0xf]
  %v2782 = vld [vmem:[%s7 + $0x20] sm:$0xf]
  %v2783 = vld [vmem:[%s7 + $0x24] sm:$0xf]
  %v2784 = vld [vmem:[%s7 + $0x28] sm:$0xf]
  %v2785 = vld [vmem:[%s7 + $0x2c] sm:$0xf]
  %v2786 = vld [vmem:[%s7 + $0x30] sm:$0xf]
  %v2787 = vld [vmem:[%s7 + $0x34] sm:$0xf]
  %v2788 = vld [vmem:[%s7 + $0x38] sm:$0xf]
  %v2789 = vld [vmem:[%s7 + $0x3c] sm:$0xf]
  %v2790 = vld [vmem:[%s8] sm:$0x1]
  %v2792 = vlaneseq
  %v2793 = vshrl.u32 %v2792, 7
  %v2794 = vsub.s32 0, %v2793
  %v2795 = vrot.slane %v2790, %v2794
  %v2813 = vunpack.c.l.b16 %v2774
  %v2814 = vunpack.c.l.b16 %v2775
  %v2815 = vunpack.c.l.b16 %v2776
  %v2816 = vunpack.c.l.b16 %v2777
  %v2817 = vunpack.c.l.b16 %v2778
  %v2818 = vunpack.c.l.b16 %v2779
  %v2819 = vunpack.c.l.b16 %v2780
  %v2820 = vunpack.c.l.b16 %v2781
  %v2821 = vunpack.c.l.b16 %v2782
  %v2822 = vunpack.c.l.b16 %v2783
  %v2823 = vunpack.c.l.b16 %v2784
  %v2824 = vunpack.c.l.b16 %v2785
  %v2825 = vunpack.c.l.b16 %v2786
  %v2826 = vunpack.c.l.b16 %v2787
  %v2827 = vunpack.c.l.b16 %v2788
  %v2828 = vunpack.c.l.b16 %v2789
  %v2829 = vpack.c.b16 %v2814, %v2813
  %v2830 = vpack.c.b16 %v2816, %v2815
  %v2831 = vpack.c.b16 %v2818, %v2817
  %v2832 = vpack.c.b16 %v2820, %v2819
  %v2833 = vpack.c.b16 %v2822, %v2821
  %v2834 = vpack.c.b16 %v2824, %v2823
  %v2835 = vpack.c.b16 %v2826, %v2825
  %v2836 = vpack.c.b16 %v2828, %v2827
  %2845 = vmatprep.subr.bf16.mxu0 0
  %2846 = vmatpush1.bf16.msra.mxu0 %v2836
  %2847 = vmatprep.subr.bf16.mxu0 0
  %2848 = vmatpush1.bf16.msra.mxu0 %v2835
  %2849 = vmatprep.subr.bf16.mxu0 0
  %2850 = vmatpush1.bf16.msra.mxu0 %v2834
  %2851 = vmatprep.subr.bf16.mxu0 0
  %2852 = vmatpush1.bf16.msra.mxu0 %v2833
  %2853 = vmatprep.subr.bf16.mxu0 0
  %2854 = vmatpush1.bf16.msra.mxu0 %v2832
  %2855 = vmatprep.subr.bf16.mxu0 0
  %2856 = vmatpush1.bf16.msra.mxu0 %v2831
  %2857 = vmatprep.subr.bf16.mxu0 0
  %2858 = vmatpush1.bf16.msra.mxu0 %v2830
  %2859 = vmatprep.subr.bf16.mxu0 0
  %2860 = vmatpush1.bf16.msra.mxu0 %v2829
  %2861 = vmatprep.subr.bf16.mxu0 0
  %2862 = vmatpush2.bf16.msra.mxu0 0
  %2863 = vmatprep.subr.bf16.mxu0 0
  %2864 = vmatpush2.bf16.msra.mxu0 0
  %2865 = vmatprep.subr.bf16.mxu0 0
  %2866 = vmatpush2.bf16.msra.mxu0 0
  %2867 = vmatprep.subr.bf16.mxu0 0
  %2868 = vmatpush2.bf16.msra.mxu0 0
  %2869 = vmatprep.subr.bf16.mxu0 0
  %2870 = vmatpush2.bf16.msra.mxu0 0
  %2871 = vmatprep.subr.bf16.mxu0 0
  %2872 = vmatpush2.bf16.msra.mxu0 0
  %2873 = vmatprep.subr.bf16.mxu0 0
  %2874 = vmatpush2.bf16.msra.mxu0 0
  %2875 = vmatprep.subr.bf16.mxu0 0
  %2876 = vmatpush2.bf16.msra.mxu0 0
  %2877 = vmatprep.mubr.bf16.mxu0 0
  %2878 = vmatmul.mubr.bf16.gmra.mxu0 %v2742
  %v2879 = vpop.f32.mrf.mxu0
  %v2880 = vadd.f32 %v2795, %v2879
  %v2881 = vpop.f32.mrf.mxu0
  %v2882 = vpop.f32.mrf.mxu0
  %v2883 = vadd.f32 %v2795, %v2882
  %v2884 = vpop.f32.mrf.mxu0
  %2885 = vmatprep.mubr.bf16.mxu0 0
  %2886 = vmatmul.mubr.bf16.gmra.mxu0 %v2743
  %v2887 = vpop.f32.mrf.mxu0
  %v2888 = vadd.f32 %v2795, %v2887
  %v2889 = vpop.f32.mrf.mxu0
  %v2890 = vpop.f32.mrf.mxu0
  %v2891 = vadd.f32 %v2795, %v2890
  %v2892 = vpop.f32.mrf.mxu0
  %2893 = vmatprep.mubr.bf16.mxu0 0
  %2894 = vmatmul.mubr.bf16.gmra.mxu0 %v2744
  %v2895 = vpop.f32.mrf.mxu0
  %v2896 = vadd.f32 %v2795, %v2895
  %v2897 = vpop.f32.mrf.mxu0
  %v2898 = vpop.f32.mrf.mxu0
  %v2899 = vadd.f32 %v2795, %v2898
  %v2900 = vpop.f32.mrf.mxu0
  %2901 = vmatprep.mubr.bf16.mxu0 0
  %2902 = vmatmul.mubr.bf16.gmra.mxu0 %v2745
  %v2903 = vpop.f32.mrf.mxu0
  %v2904 = vadd.f32 %v2795, %v2903
  %v2905 = vpop.f32.mrf.mxu0
  %v2906 = vpop.f32.mrf.mxu0
  %v2907 = vadd.f32 %v2795, %v2906
  %v2908 = vpop.f32.mrf.mxu0
  %2909 = vmatprep.mubr.bf16.mxu0 0
  %2910 = vmatmul.mubr.bf16.gmra.mxu0 %v2746
  %v2911 = vpop.f32.mrf.mxu0
  %v2912 = vadd.f32 %v2795, %v2911
  %v2913 = vpop.f32.mrf.mxu0
  %v2914 = vpop.f32.mrf.mxu0
  %v2915 = vadd.f32 %v2795, %v2914
  %v2916 = vpop.f32.mrf.mxu0
  %2917 = vmatprep.mubr.bf16.mxu0 0
  %2918 = vmatmul.mubr.bf16.gmra.mxu0 %v2747
  %v2919 = vpop.f32.mrf.mxu0
  %v2920 = vadd.f32 %v2795, %v2919
  %v2921 = vpop.f32.mrf.mxu0
  %v2922 = vpop.f32.mrf.mxu0
  %v2923 = vadd.f32 %v2795, %v2922
  %v2924 = vpop.f32.mrf.mxu0
  %2925 = vmatprep.mubr.bf16.mxu0 0
  %2926 = vmatmul.mubr.bf16.gmra.mxu0 %v2748
  %v2927 = vpop.f32.mrf.mxu0
  %v2928 = vadd.f32 %v2795, %v2927
  %v2929 = vpop.f32.mrf.mxu0
  %v2930 = vpop.f32.mrf.mxu0
  %v2931 = vadd.f32 %v2795, %v2930
  %v2932 = vpop.f32.mrf.mxu0
  %2933 = vmatprep.mubr.bf16.mxu0 0
  %2934 = vmatmul.mubr.bf16.gmra.mxu0 %v2749
  %v2935 = vpop.f32.mrf.mxu0
  %v2936 = vadd.f32 %v2795, %v2935
  %v2937 = vpop.f32.mrf.mxu0
  %v2938 = vpop.f32.mrf.mxu0
  %v2939 = vadd.f32 %v2795, %v2938
  %v2940 = vpop.f32.mrf.mxu0
  %2941 = vmatprep.mubr.bf16.mxu0 0
  %2942 = vmatmul.mubr.bf16.gmra.mxu0 %v2750
  %v2943 = vpop.f32.mrf.mxu0
  %v2944 = vadd.f32 %v2795, %v2943
  %v2945 = vpop.f32.mrf.mxu0
  %v2946 = vpop.f32.mrf.mxu0
  %v2947 = vadd.f32 %v2795, %v2946
  %v2948 = vpop.f32.mrf.mxu0
  %2949 = vmatprep.mubr.bf16.mxu0 0
  %2950 = vmatmul.mubr.bf16.gmra.mxu0 %v2751
  %v2951 = vpop.f32.mrf.mxu0
  %v2952 = vadd.f32 %v2795, %v2951
  %v2953 = vpop.f32.mrf.mxu0
  %v2954 = vpop.f32.mrf.mxu0
  %v2955 = vadd.f32 %v2795, %v2954
  %v2956 = vpop.f32.mrf.mxu0
  %2957 = vmatprep.mubr.bf16.mxu0 0
  %2958 = vmatmul.mubr.bf16.gmra.mxu0 %v2752
  %v2959 = vpop.f32.mrf.mxu0
  %v2960 = vadd.f32 %v2795, %v2959
  %v2961 = vpop.f32.mrf.mxu0
  %v2962 = vpop.f32.mrf.mxu0
  %v2963 = vadd.f32 %v2795, %v2962
  %v2964 = vpop.f32.mrf.mxu0
  %2965 = vmatprep.mubr.bf16.mxu0 0
  %2966 = vmatmul.mubr.bf16.gmra.mxu0 %v2753
  %v2967 = vpop.f32.mrf.mxu0
  %v2968 = vadd.f32 %v2795, %v2967
  %v2969 = vpop.f32.mrf.mxu0
  %v2970 = vpop.f32.mrf.mxu0
  %v2971 = vadd.f32 %v2795, %v2970
  %v2972 = vpop.f32.mrf.mxu0
  %2973 = vmatprep.mubr.bf16.mxu0 0
  %2974 = vmatmul.mubr.bf16.gmra.mxu0 %v2754
  %v2975 = vpop.f32.mrf.mxu0
  %v2976 = vadd.f32 %v2795, %v2975
  %v2977 = vpop.f32.mrf.mxu0
  %v2978 = vpop.f32.mrf.mxu0
  %v2979 = vadd.f32 %v2795, %v2978
  %v2980 = vpop.f32.mrf.mxu0
  %2981 = vmatprep.mubr.bf16.mxu0 0
  %2982 = vmatmul.mubr.bf16.gmra.mxu0 %v2755
  %v2983 = vpop.f32.mrf.mxu0
  %v2984 = vadd.f32 %v2795, %v2983
  %v2985 = vpop.f32.mrf.mxu0
  %v2986 = vpop.f32.mrf.mxu0
  %v2987 = vadd.f32 %v2795, %v2986
  %v2988 = vpop.f32.mrf.mxu0
  %2989 = vmatprep.mubr.bf16.mxu0 0
  %2990 = vmatmul.mubr.bf16.gmra.mxu0 %v2756
  %v2991 = vpop.f32.mrf.mxu0
  %v2992 = vadd.f32 %v2795, %v2991
  %v2993 = vpop.f32.mrf.mxu0
  %v2994 = vpop.f32.mrf.mxu0
  %v2995 = vadd.f32 %v2795, %v2994
  %v2996 = vpop.f32.mrf.mxu0
  %2997 = vmatprep.mubr.bf16.mxu0 0
  %2998 = vmatmul.mubr.bf16.gmra.mxu0 %v2757
  %v2999 = vpop.f32.mrf.mxu0
  %v3000 = vadd.f32 %v2795, %v2999
  %v3001 = vpop.f32.mrf.mxu0
  %v3002 = vpop.f32.mrf.mxu0
  %v3003 = vadd.f32 %v2795, %v3002
  %v3004 = vpop.f32.mrf.mxu0
  %3005 = vmatprep.mubr.bf16.mxu0 0
  %3006 = vmatmul.mubr.bf16.gmra.mxu0 %v2758
  %v3007 = vpop.f32.mrf.mxu0
  %v3008 = vadd.f32 %v2795, %v3007
  %v3009 = vpop.f32.mrf.mxu0
  %v3010 = vpop.f32.mrf.mxu0
  %v3011 = vadd.f32 %v2795, %v3010
  %v3012 = vpop.f32.mrf.mxu0
  %3013 = vmatprep.mubr.bf16.mxu0 0
  %3014 = vmatmul.mubr.bf16.gmra.mxu0 %v2759
  %v3015 = vpop.f32.mrf.mxu0
  %v3016 = vadd.f32 %v2795, %v3015
  %v3017 = vpop.f32.mrf.mxu0
  %v3018 = vpop.f32.mrf.mxu0
  %v3019 = vadd.f32 %v2795, %v3018
  %v3020 = vpop.f32.mrf.mxu0
  %3021 = vmatprep.mubr.bf16.mxu0 0
  %3022 = vmatmul.mubr.bf16.gmra.mxu0 %v2760
  %v3023 = vpop.f32.mrf.mxu0
  %v3024 = vadd.f32 %v2795, %v3023
  %v3025 = vpop.f32.mrf.mxu0
  %v3026 = vpop.f32.mrf.mxu0
  %v3027 = vadd.f32 %v2795, %v3026
  %v3028 = vpop.f32.mrf.mxu0
  %3029 = vmatprep.mubr.bf16.mxu0 0
  %3030 = vmatmul.mubr.bf16.gmra.mxu0 %v2761
  %v3031 = vpop.f32.mrf.mxu0
  %v3032 = vadd.f32 %v2795, %v3031
  %v3033 = vpop.f32.mrf.mxu0
  %v3034 = vpop.f32.mrf.mxu0
  %v3035 = vadd.f32 %v2795, %v3034
  %v3036 = vpop.f32.mrf.mxu0
  %3037 = vmatprep.mubr.bf16.mxu0 0
  %3038 = vmatmul.mubr.bf16.gmra.mxu0 %v2762
  %v3039 = vpop.f32.mrf.mxu0
  %v3040 = vadd.f32 %v2795, %v3039
  %v3041 = vpop.f32.mrf.mxu0
  %v3042 = vpop.f32.mrf.mxu0
  %v3043 = vadd.f32 %v2795, %v3042
  %v3044 = vpop.f32.mrf.mxu0
  %3045 = vmatprep.mubr.bf16.mxu0 0
  %3046 = vmatmul.mubr.bf16.gmra.mxu0 %v2763
  %v3047 = vpop.f32.mrf.mxu0
  %v3048 = vadd.f32 %v2795, %v3047
  %v3049 = vpop.f32.mrf.mxu0
  %v3050 = vpop.f32.mrf.mxu0
  %v3051 = vadd.f32 %v2795, %v3050
  %v3052 = vpop.f32.mrf.mxu0
  %3053 = vmatprep.mubr.bf16.mxu0 0
  %3054 = vmatmul.mubr.bf16.gmra.mxu0 %v2764
  %v3055 = vpop.f32.mrf.mxu0
  %v3056 = vadd.f32 %v2795, %v3055
  %v3057 = vpop.f32.mrf.mxu0
  %v3058 = vpop.f32.mrf.mxu0
  %v3059 = vadd.f32 %v2795, %v3058
  %v3060 = vpop.f32.mrf.mxu0
  %3061 = vmatprep.mubr.bf16.mxu0 0
  %3062 = vmatmul.mubr.bf16.gmra.mxu0 %v2765
  %v3063 = vpop.f32.mrf.mxu0
  %v3064 = vadd.f32 %v2795, %v3063
  %v3065 = vpop.f32.mrf.mxu0
  %v3066 = vpop.f32.mrf.mxu0
  %v3067 = vadd.f32 %v2795, %v3066
  %v3068 = vpop.f32.mrf.mxu0
  %3069 = vmatprep.mubr.bf16.mxu0 0
  %3070 = vmatmul.mubr.bf16.gmra.mxu0 %v2766
  %v3071 = vpop.f32.mrf.mxu0
  %v3072 = vadd.f32 %v2795, %v3071
  %v3073 = vpop.f32.mrf.mxu0
  %v3074 = vpop.f32.mrf.mxu0
  %v3075 = vadd.f32 %v2795, %v3074
  %v3076 = vpop.f32.mrf.mxu0
  %3077 = vmatprep.mubr.bf16.mxu0 0
  %3078 = vmatmul.mubr.bf16.gmra.mxu0 %v2767
  %v3079 = vpop.f32.mrf.mxu0
  %v3080 = vadd.f32 %v2795, %v3079
  %v3081 = vpop.f32.mrf.mxu0
  %v3082 = vpop.f32.mrf.mxu0
  %v3083 = vadd.f32 %v2795, %v3082
  %v3084 = vpop.f32.mrf.mxu0
  %3085 = vmatprep.mubr.bf16.mxu0 0
  %3086 = vmatmul.mubr.bf16.gmra.mxu0 %v2768
  %v3087 = vpop.f32.mrf.mxu0
  %v3088 = vadd.f32 %v2795, %v3087
  %v3089 = vpop.f32.mrf.mxu0
  %v3090 = vpop.f32.mrf.mxu0
  %v3091 = vadd.f32 %v2795, %v3090
  %v3092 = vpop.f32.mrf.mxu0
  %3093 = vmatprep.mubr.bf16.mxu0 0
  %3094 = vmatmul.mubr.bf16.gmra.mxu0 %v2769
  %v3095 = vpop.f32.mrf.mxu0
  %v3096 = vadd.f32 %v2795, %v3095
  %v3097 = vpop.f32.mrf.mxu0
  %v3098 = vpop.f32.mrf.mxu0
  %v3099 = vadd.f32 %v2795, %v3098
  %v3100 = vpop.f32.mrf.mxu0
  %3101 = vmatprep.mubr.bf16.mxu0 0
  %3102 = vmatmul.mubr.bf16.gmra.mxu0 %v2770
  %v3103 = vpop.f32.mrf.mxu0
  %v3104 = vadd.f32 %v2795, %v3103
  %v3105 = vpop.f32.mrf.mxu0
  %v3106 = vpop.f32.mrf.mxu0
  %v3107 = vadd.f32 %v2795, %v3106
  %v3108 = vpop.f32.mrf.mxu0
  %3109 = vmatprep.mubr.bf16.mxu0 0
  %3110 = vmatmul.mubr.bf16.gmra.mxu0 %v2771
  %v3111 = vpop.f32.mrf.mxu0
  %v3112 = vadd.f32 %v2795, %v3111
  %v3113 = vpop.f32.mrf.mxu0
  %v3114 = vpop.f32.mrf.mxu0
  %v3115 = vadd.f32 %v2795, %v3114
  %v3116 = vpop.f32.mrf.mxu0
  %3117 = vmatprep.mubr.bf16.mxu0 0
  %3118 = vmatmul.mubr.bf16.gmra.mxu0 %v2772
  %v3119 = vpop.f32.mrf.mxu0
  %v3120 = vadd.f32 %v2795, %v3119
  %v3121 = vpop.f32.mrf.mxu0
  %v3122 = vpop.f32.mrf.mxu0
  %v3123 = vadd.f32 %v2795, %v3122
  %v3124 = vpop.f32.mrf.mxu0
  %3125 = vmatprep.mubr.bf16.mxu0 0
  %3126 = vmatmul.mubr.bf16.gmra.mxu0 %v2773
  %v3127 = vpop.f32.mrf.mxu0
  %v3128 = vadd.f32 %v2795, %v3127
  %v3129 = vpop.f32.mrf.mxu0
  %v3130 = vpop.f32.mrf.mxu0
  %v3131 = vadd.f32 %v2795, %v3130
  %v3132 = vpop.f32.mrf.mxu0
  %3133 = vdwg.mxu0
  %v3134 = vsub.f32 0.0, %v2880
  %v3135 = vsub.f32 0.0, %v2883
  %v3136 = vsub.f32 0.0, %v2888
  %v3137 = vsub.f32 0.0, %v2891
  %v3138 = vsub.f32 0.0, %v2896
  %v3139 = vsub.f32 0.0, %v2899
  %v3140 = vsub.f32 0.0, %v2904
  %v3141 = vsub.f32 0.0, %v2907
  %v3142 = vsub.f32 0.0, %v2912
  %v3143 = vsub.f32 0.0, %v2915
  %v3144 = vsub.f32 0.0, %v2920
  %v3145 = vsub.f32 0.0, %v2923
  %v3146 = vsub.f32 0.0, %v2928
  %v3147 = vsub.f32 0.0, %v2931
  %v3148 = vsub.f32 0.0, %v2936
  %v3149 = vsub.f32 0.0, %v2939
  %v3150 = vsub.f32 0.0, %v2944
  %v3151 = vsub.f32 0.0, %v2947
  %v3152 = vsub.f32 0.0, %v2952
  %v3153 = vsub.f32 0.0, %v2955
  %v3154 = vsub.f32 0.0, %v2960
  %v3155 = vsub.f32 0.0, %v2963
  %v3156 = vsub.f32 0.0, %v2968
  %v3157 = vsub.f32 0.0, %v2971
  %v3158 = vsub.f32 0.0, %v2976
  %v3159 = vsub.f32 0.0, %v2979
  %v3160 = vsub.f32 0.0, %v2984
  %v3161 = vsub.f32 0.0, %v2987
  %v3162 = vsub.f32 0.0, %v2992
  %v3163 = vsub.f32 0.0, %v2995
  %v3164 = vsub.f32 0.0, %v3000
  %v3165 = vsub.f32 0.0, %v3003
  %v3166 = vsub.f32 0.0, %v3008
  %v3167 = vsub.f32 0.0, %v3011
  %v3168 = vsub.f32 0.0, %v3016
  %v3169 = vsub.f32 0.0, %v3019
  %v3170 = vsub.f32 0.0, %v3024
  %v3171 = vsub.f32 0.0, %v3027
  %v3172 = vsub.f32 0.0, %v3032
  %v3173 = vsub.f32 0.0, %v3035
  %v3174 = vsub.f32 0.0, %v3040
  %v3175 = vsub.f32 0.0, %v3043
  %v3176 = vsub.f32 0.0, %v3048
  %v3177 = vsub.f32 0.0, %v3051
  %v3178 = vsub.f32 0.0, %v3056
  %v3179 = vsub.f32 0.0, %v3059
  %v3180 = vsub.f32 0.0, %v3064
  %v3181 = vsub.f32 0.0, %v3067
  %v3182 = vsub.f32 0.0, %v3072
  %v3183 = vsub.f32 0.0, %v3075
  %v3184 = vsub.f32 0.0, %v3080
  %v3185 = vsub.f32 0.0, %v3083
  %v3186 = vsub.f32 0.0, %v3088
  %v3187 = vsub.f32 0.0, %v3091
  %v3188 = vsub.f32 0.0, %v3096
  %v3189 = vsub.f32 0.0, %v3099
  %v3190 = vsub.f32 0.0, %v3104
  %v3191 = vsub.f32 0.0, %v3107
  %v3192 = vsub.f32 0.0, %v3112
  %v3193 = vsub.f32 0.0, %v3115
  %v3194 = vsub.f32 0.0, %v3120
  %v3195 = vsub.f32 0.0, %v3123
  %v3196 = vsub.f32 0.0, %v3128
  %v3197 = vsub.f32 0.0, %v3131
  %v3198 = vmul.f32 %v3134, 1.442695
  %v3199 = vpow.pop %v3198
  %v3200 = vmul.f32 %v3135, 1.442695
  %v3201 = vpow.pop %v3200
  %v3202 = vmul.f32 %v3136, 1.442695
  %v3203 = vpow.pop %v3202
  %v3204 = vmul.f32 %v3137, 1.442695
  %v3205 = vpow.pop %v3204
  %v3206 = vmul.f32 %v3138, 1.442695
  %v3207 = vpow.pop %v3206
  %v3208 = vmul.f32 %v3139, 1.442695
  %v3209 = vpow.pop %v3208
  %v3210 = vmul.f32 %v3140, 1.442695
  %v3211 = vpow.pop %v3210
  %v3212 = vmul.f32 %v3141, 1.442695
  %v3213 = vpow.pop %v3212
  %v3214 = vmul.f32 %v3142, 1.442695
  %v3215 = vpow.pop %v3214
  %v3216 = vmul.f32 %v3143, 1.442695
  %v3217 = vpow.pop %v3216
  %v3218 = vmul.f32 %v3144, 1.442695
  %v3219 = vpow.pop %v3218
  %v3220 = vmul.f32 %v3145, 1.442695
  %v3221 = vpow.pop %v3220
  %v3222 = vmul.f32 %v3146, 1.442695
  %v3223 = vpow.pop %v3222
  %v3224 = vmul.f32 %v3147, 1.442695
  %v3225 = vpow.pop %v3224
  %v3226 = vmul.f32 %v3148, 1.442695
  %v3227 = vpow.pop %v3226
  %v3228 = vmul.f32 %v3149, 1.442695
  %v3229 = vpow.pop %v3228
  %v3230 = vmul.f32 %v3150, 1.442695
  %v3231 = vpow.pop %v3230
  %v3232 = vmul.f32 %v3151, 1.442695
  %v3233 = vpow.pop %v3232
  %v3234 = vmul.f32 %v3152, 1.442695
  %v3235 = vpow.pop %v3234
  %v3236 = vmul.f32 %v3153, 1.442695
  %v3237 = vpow.pop %v3236
  %v3238 = vmul.f32 %v3154, 1.442695
  %v3239 = vpow.pop %v3238
  %v3240 = vmul.f32 %v3155, 1.442695
  %v3241 = vpow.pop %v3240
  %v3242 = vmul.f32 %v3156, 1.442695
  %v3243 = vpow.pop %v3242
  %v3244 = vmul.f32 %v3157, 1.442695
  %v3245 = vpow.pop %v3244
  %v3246 = vmul.f32 %v3158, 1.442695
  %v3247 = vpow.pop %v3246
  %v3248 = vmul.f32 %v3159, 1.442695
  %v3249 = vpow.pop %v3248
  %v3250 = vmul.f32 %v3160, 1.442695
  %v3251 = vpow.pop %v3250
  %v3252 = vmul.f32 %v3161, 1.442695
  %v3253 = vpow.pop %v3252
  %v3254 = vmul.f32 %v3162, 1.442695
  %v3255 = vpow.pop %v3254
  %v3256 = vmul.f32 %v3163, 1.442695
  %v3257 = vpow.pop %v3256
  %v3258 = vmul.f32 %v3164, 1.442695
  %v3259 = vpow.pop %v3258
  %v3260 = vmul.f32 %v3165, 1.442695
  %v3261 = vpow.pop %v3260
  %v3262 = vmul.f32 %v3166, 1.442695
  %v3263 = vpow.pop %v3262
  %v3264 = vmul.f32 %v3167, 1.442695
  %v3265 = vpow.pop %v3264
  %v3266 = vmul.f32 %v3168, 1.442695
  %v3267 = vpow.pop %v3266
  %v3268 = vmul.f32 %v3169, 1.442695
  %v3269 = vpow.pop %v3268
  %v3270 = vmul.f32 %v3170, 1.442695
  %v3271 = vpow.pop %v3270
  %v3272 = vmul.f32 %v3171, 1.442695
  %v3273 = vpow.pop %v3272
  %v3274 = vmul.f32 %v3172, 1.442695
  %v3275 = vpow.pop %v3274
  %v3276 = vmul.f32 %v3173, 1.442695
  %v3277 = vpow.pop %v3276
  %v3278 = vmul.f32 %v3174, 1.442695
  %v3279 = vpow.pop %v3278
  %v3280 = vmul.f32 %v3175, 1.442695
  %v3281 = vpow.pop %v3280
  %v3282 = vmul.f32 %v3176, 1.442695
  %v3283 = vpow.pop %v3282
  %v3284 = vmul.f32 %v3177, 1.442695
  %v3285 = vpow.pop %v3284
  %v3286 = vmul.f32 %v3178, 1.442695
  %v3287 = vpow.pop %v3286
  %v3288 = vmul.f32 %v3179, 1.442695
  %v3289 = vpow.pop %v3288
  %v3290 = vmul.f32 %v3180, 1.442695
  %v3291 = vpow.pop %v3290
  %v3292 = vmul.f32 %v3181, 1.442695
  %v3293 = vpow.pop %v3292
  %v3294 = vmul.f32 %v3182, 1.442695
  %v3295 = vpow.pop %v3294
  %v3296 = vmul.f32 %v3183, 1.442695
  %v3297 = vpow.pop %v3296
  %v3298 = vmul.f32 %v3184, 1.442695
  %v3299 = vpow.pop %v3298
  %v3300 = vmul.f32 %v3185, 1.442695
  %v3301 = vpow.pop %v3300
  %v3302 = vmul.f32 %v3186, 1.442695
  %v3303 = vpow.pop %v3302
  %v3304 = vmul.f32 %v3187, 1.442695
  %v3305 = vpow.pop %v3304
  %v3306 = vmul.f32 %v3188, 1.442695
  %v3307 = vpow.pop %v3306
  %v3308 = vmul.f32 %v3189, 1.442695
  %v3309 = vpow.pop %v3308
  %v3310 = vmul.f32 %v3190, 1.442695
  %v3311 = vpow.pop %v3310
  %v3312 = vmul.f32 %v3191, 1.442695
  %v3313 = vpow.pop %v3312
  %v3314 = vmul.f32 %v3192, 1.442695
  %v3315 = vpow.pop %v3314
  %v3316 = vmul.f32 %v3193, 1.442695
  %v3317 = vpow.pop %v3316
  %v3318 = vmul.f32 %v3194, 1.442695
  %v3319 = vpow.pop %v3318
  %v3320 = vmul.f32 %v3195, 1.442695
  %v3321 = vpow.pop %v3320
  %v3322 = vmul.f32 %v3196, 1.442695
  %v3323 = vpow.pop %v3322
  %v3324 = vmul.f32 %v3197, 1.442695
  %v3325 = vpow.pop %v3324
  %v3326 = vadd.f32 %v3199, 1.0
  %v3327 = vadd.f32 %v3201, 1.0
  %v3328 = vadd.f32 %v3203, 1.0
  %v3329 = vadd.f32 %v3205, 1.0
  %v3330 = vadd.f32 %v3207, 1.0
  %v3331 = vadd.f32 %v3209, 1.0
  %v3332 = vadd.f32 %v3211, 1.0
  %v3333 = vadd.f32 %v3213, 1.0
  %v3334 = vadd.f32 %v3215, 1.0
  %v3335 = vadd.f32 %v3217, 1.0
  %v3336 = vadd.f32 %v3219, 1.0
  %v3337 = vadd.f32 %v3221, 1.0
  %v3338 = vadd.f32 %v3223, 1.0
  %v3339 = vadd.f32 %v3225, 1.0
  %v3340 = vadd.f32 %v3227, 1.0
  %v3341 = vadd.f32 %v3229, 1.0
  %v3342 = vadd.f32 %v3231, 1.0
  %v3343 = vadd.f32 %v3233, 1.0
  %v3344 = vadd.f32 %v3235, 1.0
  %v3345 = vadd.f32 %v3237, 1.0
  %v3346 = vadd.f32 %v3239, 1.0
  %v3347 = vadd.f32 %v3241, 1.0
  %v3348 = vadd.f32 %v3243, 1.0
  %v3349 = vadd.f32 %v3245, 1.0
  %v3350 = vadd.f32 %v3247, 1.0
  %v3351 = vadd.f32 %v3249, 1.0
  %v3352 = vadd.f32 %v3251, 1.0
  %v3353 = vadd.f32 %v3253, 1.0
  %v3354 = vadd.f32 %v3255, 1.0
  %v3355 = vadd.f32 %v3257, 1.0
  %v3356 = vadd.f32 %v3259, 1.0
  %v3357 = vadd.f32 %v3261, 1.0
  %v3358 = vadd.f32 %v3263, 1.0
  %v3359 = vadd.f32 %v3265, 1.0
  %v3360 = vadd.f32 %v3267, 1.0
  %v3361 = vadd.f32 %v3269, 1.0
  %v3362 = vadd.f32 %v3271, 1.0
  %v3363 = vadd.f32 %v3273, 1.0
  %v3364 = vadd.f32 %v3275, 1.0
  %v3365 = vadd.f32 %v3277, 1.0
  %v3366 = vadd.f32 %v3279, 1.0
  %v3367 = vadd.f32 %v3281, 1.0
  %v3368 = vadd.f32 %v3283, 1.0
  %v3369 = vadd.f32 %v3285, 1.0
  %v3370 = vadd.f32 %v3287, 1.0
  %v3371 = vadd.f32 %v3289, 1.0
  %v3372 = vadd.f32 %v3291, 1.0
  %v3373 = vadd.f32 %v3293, 1.0
  %v3374 = vadd.f32 %v3295, 1.0
  %v3375 = vadd.f32 %v3297, 1.0
  %v3376 = vadd.f32 %v3299, 1.0
  %v3377 = vadd.f32 %v3301, 1.0
  %v3378 = vadd.f32 %v3303, 1.0
  %v3379 = vadd.f32 %v3305, 1.0
  %v3380 = vadd.f32 %v3307, 1.0
  %v3381 = vadd.f32 %v3309, 1.0
  %v3382 = vadd.f32 %v3311, 1.0
  %v3383 = vadd.f32 %v3313, 1.0
  %v3384 = vadd.f32 %v3315, 1.0
  %v3385 = vadd.f32 %v3317, 1.0
  %v3386 = vadd.f32 %v3319, 1.0
  %v3387 = vadd.f32 %v3321, 1.0
  %v3388 = vadd.f32 %v3323, 1.0
  %v3389 = vadd.f32 %v3325, 1.0
  %v3390 = vrcp.pop %v3326
  %v3391 = vmul.f32 1.0, %v3390
  %v3392 = vrcp.pop %v3327
  %v3393 = vmul.f32 1.0, %v3392
  %v3394 = vrcp.pop %v3328
  %v3395 = vmul.f32 1.0, %v3394
  %v3396 = vrcp.pop %v3329
  %v3397 = vmul.f32 1.0, %v3396
  %v3398 = vrcp.pop %v3330
  %v3399 = vmul.f32 1.0, %v3398
  %v3400 = vrcp.pop %v3331
  %v3401 = vmul.f32 1.0, %v3400
  %v3402 = vrcp.pop %v3332
  %v3403 = vmul.f32 1.0, %v3402
  %v3404 = vrcp.pop %v3333
  %v3405 = vmul.f32 1.0, %v3404
  %v3406 = vrcp.pop %v3334
  %v3407 = vmul.f32 1.0, %v3406
  %v3408 = vrcp.pop %v3335
  %v3409 = vmul.f32 1.0, %v3408
  %v3410 = vrcp.pop %v3336
  %v3411 = vmul.f32 1.0, %v3410
  %v3412 = vrcp.pop %v3337
  %v3413 = vmul.f32 1.0, %v3412
  %v3414 = vrcp.pop %v3338
  %v3415 = vmul.f32 1.0, %v3414
  %v3416 = vrcp.pop %v3339
  %v3417 = vmul.f32 1.0, %v3416
  %v3418 = vrcp.pop %v3340
  %v3419 = vmul.f32 1.0, %v3418
  %v3420 = vrcp.pop %v3341
  %v3421 = vmul.f32 1.0, %v3420
  %v3422 = vrcp.pop %v3342
  %v3423 = vmul.f32 1.0, %v3422
  %v3424 = vrcp.pop %v3343
  %v3425 = vmul.f32 1.0, %v3424
  %v3426 = vrcp.pop %v3344
  %v3427 = vmul.f32 1.0, %v3426
  %v3428 = vrcp.pop %v3345
  %v3429 = vmul.f32 1.0, %v3428
  %v3430 = vrcp.pop %v3346
  %v3431 = vmul.f32 1.0, %v3430
  %v3432 = vrcp.pop %v3347
  %v3433 = vmul.f32 1.0, %v3432
  %v3434 = vrcp.pop %v3348
  %v3435 = vmul.f32 1.0, %v3434
  %v3436 = vrcp.pop %v3349
  %v3437 = vmul.f32 1.0, %v3436
  %v3438 = vrcp.pop %v3350
  %v3439 = vmul.f32 1.0, %v3438
  %v3440 = vrcp.pop %v3351
  %v3441 = vmul.f32 1.0, %v3440
  %v3442 = vrcp.pop %v3352
  %v3443 = vmul.f32 1.0, %v3442
  %v3444 = vrcp.pop %v3353
  %v3445 = vmul.f32 1.0, %v3444
  %v3446 = vrcp.pop %v3354
  %v3447 = vmul.f32 1.0, %v3446
  %v3448 = vrcp.pop %v3355
  %v3449 = vmul.f32 1.0, %v3448
  %v3450 = vrcp.pop %v3356
  %v3451 = vmul.f32 1.0, %v3450
  %v3452 = vrcp.pop %v3357
  %v3453 = vmul.f32 1.0, %v3452
  %v3454 = vrcp.pop %v3358
  %v3455 = vmul.f32 1.0, %v3454
  %v3456 = vrcp.pop %v3359
  %v3457 = vmul.f32 1.0, %v3456
  %v3458 = vrcp.pop %v3360
  %v3459 = vmul.f32 1.0, %v3458
  %v3460 = vrcp.pop %v3361
  %v3461 = vmul.f32 1.0, %v3460
  %v3462 = vrcp.pop %v3362
  %v3463 = vmul.f32 1.0, %v3462
  %v3464 = vrcp.pop %v3363
  %v3465 = vmul.f32 1.0, %v3464
  %v3466 = vrcp.pop %v3364
  %v3467 = vmul.f32 1.0, %v3466
  %v3468 = vrcp.pop %v3365
  %v3469 = vmul.f32 1.0, %v3468
  %v3470 = vrcp.pop %v3366
  %v3471 = vmul.f32 1.0, %v3470
  %v3472 = vrcp.pop %v3367
  %v3473 = vmul.f32 1.0, %v3472
  %v3474 = vrcp.pop %v3368
  %v3475 = vmul.f32 1.0, %v3474
  %v3476 = vrcp.pop %v3369
  %v3477 = vmul.f32 1.0, %v3476
  %v3478 = vrcp.pop %v3370
  %v3479 = vmul.f32 1.0, %v3478
  %v3480 = vrcp.pop %v3371
  %v3481 = vmul.f32 1.0, %v3480
  %v3482 = vrcp.pop %v3372
  %v3483 = vmul.f32 1.0, %v3482
  %v3484 = vrcp.pop %v3373
  %v3485 = vmul.f32 1.0, %v3484
  %v3486 = vrcp.pop %v3374
  %v3487 = vmul.f32 1.0, %v3486
  %v3488 = vrcp.pop %v3375
  %v3489 = vmul.f32 1.0, %v3488
  %v3490 = vrcp.pop %v3376
  %v3491 = vmul.f32 1.0, %v3490
  %v3492 = vrcp.pop %v3377
  %v3493 = vmul.f32 1.0, %v3492
  %v3494 = vrcp.pop %v3378
  %v3495 = vmul.f32 1.0, %v3494
  %v3496 = vrcp.pop %v3379
  %v3497 = vmul.f32 1.0, %v3496
  %v3498 = vrcp.pop %v3380
  %v3499 = vmul.f32 1.0, %v3498
  %v3500 = vrcp.pop %v3381
  %v3501 = vmul.f32 1.0, %v3500
  %v3502 = vrcp.pop %v3382
  %v3503 = vmul.f32 1.0, %v3502
  %v3504 = vrcp.pop %v3383
  %v3505 = vmul.f32 1.0, %v3504
  %v3506 = vrcp.pop %v3384
  %v3507 = vmul.f32 1.0, %v3506
  %v3508 = vrcp.pop %v3385
  %v3509 = vmul.f32 1.0, %v3508
  %v3510 = vrcp.pop %v3386
  %v3511 = vmul.f32 1.0, %v3510
  %v3512 = vrcp.pop %v3387
  %v3513 = vmul.f32 1.0, %v3512
  %v3514 = vrcp.pop %v3388
  %v3515 = vmul.f32 1.0, %v3514
  %v3516 = vrcp.pop %v3389
  %v3517 = vmul.f32 1.0, %v3516
  %v3518 = vmul.f32 %v2678, 0.2857143
  %v3519 = vmul.f32 %v2679, 0.2857143
  %v3520 = vmul.f32 %v2680, 0.2857143
  %v3521 = vmul.f32 %v2681, 0.2857143
  %v3522 = vmul.f32 %v2682, 0.2857143
  %v3523 = vmul.f32 %v2683, 0.2857143
  %v3524 = vmul.f32 %v2684, 0.2857143
  %v3525 = vmul.f32 %v2685, 0.2857143
  %v3526 = vsub.f32 0.0, %v3518
  %v3527 = vsub.f32 0.0, %v3519
  %v3528 = vsub.f32 0.0, %v3520
  %v3529 = vsub.f32 0.0, %v3521
  %v3530 = vsub.f32 0.0, %v3522
  %v3531 = vsub.f32 0.0, %v3523
  %v3532 = vsub.f32 0.0, %v3524
  %v3533 = vsub.f32 0.0, %v3525
  %v3534 = vmul.f32 %v3526, 1.442695
  %v3535 = vpow.pop %v3534
  %v3536 = vmul.f32 %v3527, 1.442695
  %v3537 = vpow.pop %v3536
  %v3538 = vmul.f32 %v3528, 1.442695
  %v3539 = vpow.pop %v3538
  %v3540 = vmul.f32 %v3529, 1.442695
  %v3541 = vpow.pop %v3540
  %v3542 = vmul.f32 %v3530, 1.442695
  %v3543 = vpow.pop %v3542
  %v3544 = vmul.f32 %v3531, 1.442695
  %v3545 = vpow.pop %v3544
  %v3546 = vmul.f32 %v3532, 1.442695
  %v3547 = vpow.pop %v3546
  %v3548 = vmul.f32 %v3533, 1.442695
  %v3549 = vpow.pop %v3548
  %v3550 = vsub.f32 1.0, %v3535
  %v3551 = vsub.f32 1.0, %v3537
  %v3552 = vsub.f32 1.0, %v3539
  %v3553 = vsub.f32 1.0, %v3541
  %v3554 = vsub.f32 1.0, %v3543
  %v3555 = vsub.f32 1.0, %v3545
  %v3556 = vsub.f32 1.0, %v3547
  %v3557 = vsub.f32 1.0, %v3549
  %3559 = vset.pattern.permute.xlu0 0
  %3560 = vperm.xlu0 %3559, %v3550
  %v3561 = vpop.permute.xlu0 %3560
  %3564 = vset.pattern.permute.xlu0 0
  %3565 = vperm.xlu0 %3564, %v3551
  %v3566 = vpop.permute.xlu0 %3565
  %3569 = vset.pattern.permute.xlu0 0
  %3570 = vperm.xlu0 %3569, %v3552
  %v3571 = vpop.permute.xlu0 %3570
  %3574 = vset.pattern.permute.xlu0 0
  %3575 = vperm.xlu0 %3574, %v3553
  %v3576 = vpop.permute.xlu0 %3575
  %3579 = vset.pattern.permute.xlu0 0
  %3580 = vperm.xlu0 %3579, %v3554
  %v3581 = vpop.permute.xlu0 %3580
  %3584 = vset.pattern.permute.xlu0 0
  %3585 = vperm.xlu0 %3584, %v3555
  %v3586 = vpop.permute.xlu0 %3585
  %3589 = vset.pattern.permute.xlu0 0
  %3590 = vperm.xlu0 %3589, %v3556
  %v3591 = vpop.permute.xlu0 %3590
  %3594 = vset.pattern.permute.xlu0 0
  %3595 = vperm.xlu0 %3594, %v3557
  %v3596 = vpop.permute.xlu0 %3595
  %v3598 = vmul.f32 %v3561, %v3391
  %v3599 = vmul.f32 %v3566, %v3393
  %v3600 = vmul.f32 %v3571, %v3395
  %v3601 = vmul.f32 %v3576, %v3397
  %v3602 = vmul.f32 %v3581, %v3399
  %v3603 = vmul.f32 %v3586, %v3401
  %v3604 = vmul.f32 %v3591, %v3403
  %v3605 = vmul.f32 %v3596, %v3405
  %v3606 = vadd.f32 %v3598, 0.0
  %v3607 = vadd.f32 %v3599, 0.0
  %v3608 = vadd.f32 %v3600, 0.0
  %v3609 = vadd.f32 %v3601, 0.0
  %v3610 = vadd.f32 %v3602, 0.0
  %v3611 = vadd.f32 %v3603, 0.0
  %v3612 = vadd.f32 %v3604, 0.0
  %v3613 = vadd.f32 %v3605, 0.0
  %v3614 = vadd.f32 %v3550, 0.0
  %v3615 = vadd.f32 %v3551, 0.0
  %v3616 = vadd.f32 %v3552, 0.0
  %v3617 = vadd.f32 %v3553, 0.0
  %v3618 = vadd.f32 %v3554, 0.0
  %v3619 = vadd.f32 %v3555, 0.0
  %v3620 = vadd.f32 %v3556, 0.0
  %v3621 = vadd.f32 %v3557, 0.0
  %v3622 = vadd.f32 %v3518, 0.0
  %v3623 = vadd.f32 %v3519, 0.0
  %v3624 = vadd.f32 %v3520, 0.0
  %v3625 = vadd.f32 %v3521, 0.0
  %v3626 = vadd.f32 %v3522, 0.0
  %v3627 = vadd.f32 %v3523, 0.0
  %v3628 = vadd.f32 %v3524, 0.0
  %v3629 = vadd.f32 %v3525, 0.0
  %v3630 = vmul.f32 %v2686, 0.2857143
  %v3631 = vmul.f32 %v2687, 0.2857143
  %v3632 = vmul.f32 %v2688, 0.2857143
  %v3633 = vmul.f32 %v2689, 0.2857143
  %v3634 = vmul.f32 %v2690, 0.2857143
  %v3635 = vmul.f32 %v2691, 0.2857143
  %v3636 = vmul.f32 %v2692, 0.2857143
  %v3637 = vmul.f32 %v2693, 0.2857143
  %v3638 = vsub.f32 0.0, %v3622
  %v3639 = vsub.f32 0.0, %v3623
  %v3640 = vsub.f32 0.0, %v3624
  %v3641 = vsub.f32 0.0, %v3625
  %v3642 = vsub.f32 0.0, %v3626
  %v3643 = vsub.f32 0.0, %v3627
  %v3644 = vsub.f32 0.0, %v3628
  %v3645 = vsub.f32 0.0, %v3629
  %v3646 = vmul.f32 %v3638, 1.442695
  %v3647 = vpow.pop %v3646
  %v3648 = vmul.f32 %v3639, 1.442695
  %v3649 = vpow.pop %v3648
  %v3650 = vmul.f32 %v3640, 1.442695
  %v3651 = vpow.pop %v3650
  %v3652 = vmul.f32 %v3641, 1.442695
  %v3653 = vpow.pop %v3652
  %v3654 = vmul.f32 %v3642, 1.442695
  %v3655 = vpow.pop %v3654
  %v3656 = vmul.f32 %v3643, 1.442695
  %v3657 = vpow.pop %v3656
  %v3658 = vmul.f32 %v3644, 1.442695
  %v3659 = vpow.pop %v3658
  %v3660 = vmul.f32 %v3645, 1.442695
  %v3661 = vpow.pop %v3660
  %v3662 = vsub.f32 0.0, %v3630
  %v3663 = vsub.f32 0.0, %v3631
  %v3664 = vsub.f32 0.0, %v3632
  %v3665 = vsub.f32 0.0, %v3633
  %v3666 = vsub.f32 0.0, %v3634
  %v3667 = vsub.f32 0.0, %v3635
  %v3668 = vsub.f32 0.0, %v3636
  %v3669 = vsub.f32 0.0, %v3637
  %v3670 = vmul.f32 %v3662, 1.442695
  %v3671 = vpow.pop %v3670
  %v3672 = vmul.f32 %v3663, 1.442695
  %v3673 = vpow.pop %v3672
  %v3674 = vmul.f32 %v3664, 1.442695
  %v3675 = vpow.pop %v3674
  %v3676 = vmul.f32 %v3665, 1.442695
  %v3677 = vpow.pop %v3676
  %v3678 = vmul.f32 %v3666, 1.442695
  %v3679 = vpow.pop %v3678
  %v3680 = vmul.f32 %v3667, 1.442695
  %v3681 = vpow.pop %v3680
  %v3682 = vmul.f32 %v3668, 1.442695
  %v3683 = vpow.pop %v3682
  %v3684 = vmul.f32 %v3669, 1.442695
  %v3685 = vpow.pop %v3684
  %v3686 = vsub.f32 1.0, %v3671
  %v3687 = vsub.f32 1.0, %v3673
  %v3688 = vsub.f32 1.0, %v3675
  %v3689 = vsub.f32 1.0, %v3677
  %v3690 = vsub.f32 1.0, %v3679
  %v3691 = vsub.f32 1.0, %v3681
  %v3692 = vsub.f32 1.0, %v3683
  %v3693 = vsub.f32 1.0, %v3685
  %v3694 = vmul.f32 %v3647, %v3686
  %v3695 = vmul.f32 %v3649, %v3687
  %v3696 = vmul.f32 %v3651, %v3688
  %v3697 = vmul.f32 %v3653, %v3689
  %v3698 = vmul.f32 %v3655, %v3690
  %v3699 = vmul.f32 %v3657, %v3691
  %v3700 = vmul.f32 %v3659, %v3692
  %v3701 = vmul.f32 %v3661, %v3693
  %3703 = vset.pattern.permute.xlu0 0
  %3704 = vperm.xlu0 %3703, %v3694
  %v3705 = vpop.permute.xlu0 %3704
  %3708 = vset.pattern.permute.xlu0 0
  %3709 = vperm.xlu0 %3708, %v3695
  %v3710 = vpop.permute.xlu0 %3709
  %3713 = vset.pattern.permute.xlu0 0
  %3714 = vperm.xlu0 %3713, %v3696
  %v3715 = vpop.permute.xlu0 %3714
  %3718 = vset.pattern.permute.xlu0 0
  %3719 = vperm.xlu0 %3718, %v3697
  %v3720 = vpop.permute.xlu0 %3719
  %3723 = vset.pattern.permute.xlu0 0
  %3724 = vperm.xlu0 %3723, %v3698
  %v3725 = vpop.permute.xlu0 %3724
  %3728 = vset.pattern.permute.xlu0 0
  %3729 = vperm.xlu0 %3728, %v3699
  %v3730 = vpop.permute.xlu0 %3729
  %3733 = vset.pattern.permute.xlu0 0
  %3734 = vperm.xlu0 %3733, %v3700
  %v3735 = vpop.permute.xlu0 %3734
  %3738 = vset.pattern.permute.xlu0 0
  %3739 = vperm.xlu0 %3738, %v3701
  %v3740 = vpop.permute.xlu0 %3739
  %v3742 = vmul.f32 %v3705, %v3407
  %v3743 = vmul.f32 %v3710, %v3409
  %v3744 = vmul.f32 %v3715, %v3411
  %v3745 = vmul.f32 %v3720, %v3413
  %v3746 = vmul.f32 %v3725, %v3415
  %v3747 = vmul.f32 %v3730, %v3417
  %v3748 = vmul.f32 %v3735, %v3419
  %v3749 = vmul.f32 %v3740, %v3421
  %v3750 = vadd.f32 %v3606, %v3742
  %v3751 = vadd.f32 %v3607, %v3743
  %v3752 = vadd.f32 %v3608, %v3744
  %v3753 = vadd.f32 %v3609, %v3745
  %v3754 = vadd.f32 %v3610, %v3746
  %v3755 = vadd.f32 %v3611, %v3747
  %v3756 = vadd.f32 %v3612, %v3748
  %v3757 = vadd.f32 %v3613, %v3749
  %v3758 = vmul.f32 %v3694, 1.2857143
  %v3759 = vmul.f32 %v3695, 1.2857143
  %v3760 = vmul.f32 %v3696, 1.2857143
  %v3761 = vmul.f32 %v3697, 1.2857143
  %v3762 = vmul.f32 %v3698, 1.2857143
  %v3763 = vmul.f32 %v3699, 1.2857143
  %v3764 = vmul.f32 %v3700, 1.2857143
  %v3765 = vmul.f32 %v3701, 1.2857143
  %v3766 = vadd.f32 %v3614, %v3758
  %v3767 = vadd.f32 %v3615, %v3759
  %v3768 = vadd.f32 %v3616, %v3760
  %v3769 = vadd.f32 %v3617, %v3761
  %v3770 = vadd.f32 %v3618, %v3762
  %v3771 = vadd.f32 %v3619, %v3763
  %v3772 = vadd.f32 %v3620, %v3764
  %v3773 = vadd.f32 %v3621, %v3765
  %v3774 = vadd.f32 %v3622, %v3630
  %v3775 = vadd.f32 %v3623, %v3631
  %v3776 = vadd.f32 %v3624, %v3632
  %v3777 = vadd.f32 %v3625, %v3633
  %v3778 = vadd.f32 %v3626, %v3634
  %v3779 = vadd.f32 %v3627, %v3635
  %v3780 = vadd.f32 %v3628, %v3636
  %v3781 = vadd.f32 %v3629, %v3637
  %v3782 = vmul.f32 %v2694, 0.2857143
  %v3783 = vmul.f32 %v2695, 0.2857143
  %v3784 = vmul.f32 %v2696, 0.2857143
  %v3785 = vmul.f32 %v2697, 0.2857143
  %v3786 = vmul.f32 %v2698, 0.2857143
  %v3787 = vmul.f32 %v2699, 0.2857143
  %v3788 = vmul.f32 %v2700, 0.2857143
  %v3789 = vmul.f32 %v2701, 0.2857143
  %v3790 = vsub.f32 0.0, %v3774
  %v3791 = vsub.f32 0.0, %v3775
  %v3792 = vsub.f32 0.0, %v3776
  %v3793 = vsub.f32 0.0, %v3777
  %v3794 = vsub.f32 0.0, %v3778
  %v3795 = vsub.f32 0.0, %v3779
  %v3796 = vsub.f32 0.0, %v3780
  %v3797 = vsub.f32 0.0, %v3781
  %v3798 = vmul.f32 %v3790, 1.442695
  %v3799 = vpow.pop %v3798
  %v3800 = vmul.f32 %v3791, 1.442695
  %v3801 = vpow.pop %v3800
  %v3802 = vmul.f32 %v3792, 1.442695
  %v3803 = vpow.pop %v3802
  %v3804 = vmul.f32 %v3793, 1.442695
  %v3805 = vpow.pop %v3804
  %v3806 = vmul.f32 %v3794, 1.442695
  %v3807 = vpow.pop %v3806
  %v3808 = vmul.f32 %v3795, 1.442695
  %v3809 = vpow.pop %v3808
  %v3810 = vmul.f32 %v3796, 1.442695
  %v3811 = vpow.pop %v3810
  %v3812 = vmul.f32 %v3797, 1.442695
  %v3813 = vpow.pop %v3812
  %v3814 = vsub.f32 0.0, %v3782
  %v3815 = vsub.f32 0.0, %v3783
  %v3816 = vsub.f32 0.0, %v3784
  %v3817 = vsub.f32 0.0, %v3785
  %v3818 = vsub.f32 0.0, %v3786
  %v3819 = vsub.f32 0.0, %v3787
  %v3820 = vsub.f32 0.0, %v3788
  %v3821 = vsub.f32 0.0, %v3789
  %v3822 = vmul.f32 %v3814, 1.442695
  %v3823 = vpow.pop %v3822
  %v3824 = vmul.f32 %v3815, 1.442695
  %v3825 = vpow.pop %v3824
  %v3826 = vmul.f32 %v3816, 1.442695
  %v3827 = vpow.pop %v3826
  %v3828 = vmul.f32 %v3817, 1.442695
  %v3829 = vpow.pop %v3828
  %v3830 = vmul.f32 %v3818, 1.442695
  %v3831 = vpow.pop %v3830
  %v3832 = vmul.f32 %v3819, 1.442695
  %v3833 = vpow.pop %v3832
  %v3834 = vmul.f32 %v3820, 1.442695
  %v3835 = vpow.pop %v3834
  %v3836 = vmul.f32 %v3821, 1.442695
  %v3837 = vpow.pop %v3836
  %v3838 = vsub.f32 1.0, %v3823
  %v3839 = vsub.f32 1.0, %v3825
  %v3840 = vsub.f32 1.0, %v3827
  %v3841 = vsub.f32 1.0, %v3829
  %v3842 = vsub.f32 1.0, %v3831
  %v3843 = vsub.f32 1.0, %v3833
  %v3844 = vsub.f32 1.0, %v3835
  %v3845 = vsub.f32 1.0, %v3837
  %v3846 = vmul.f32 %v3799, %v3838
  %v3847 = vmul.f32 %v3801, %v3839
  %v3848 = vmul.f32 %v3803, %v3840
  %v3849 = vmul.f32 %v3805, %v3841
  %v3850 = vmul.f32 %v3807, %v3842
  %v3851 = vmul.f32 %v3809, %v3843
  %v3852 = vmul.f32 %v3811, %v3844
  %v3853 = vmul.f32 %v3813, %v3845
  %3855 = vset.pattern.permute.xlu0 0
  %3856 = vperm.xlu0 %3855, %v3846
  %v3857 = vpop.permute.xlu0 %3856
  %3860 = vset.pattern.permute.xlu0 0
  %3861 = vperm.xlu0 %3860, %v3847
  %v3862 = vpop.permute.xlu0 %3861
  %3865 = vset.pattern.permute.xlu0 0
  %3866 = vperm.xlu0 %3865, %v3848
  %v3867 = vpop.permute.xlu0 %3866
  %3870 = vset.pattern.permute.xlu0 0
  %3871 = vperm.xlu0 %3870, %v3849
  %v3872 = vpop.permute.xlu0 %3871
  %3875 = vset.pattern.permute.xlu0 0
  %3876 = vperm.xlu0 %3875, %v3850
  %v3877 = vpop.permute.xlu0 %3876
  %3880 = vset.pattern.permute.xlu0 0
  %3881 = vperm.xlu0 %3880, %v3851
  %v3882 = vpop.permute.xlu0 %3881
  %3885 = vset.pattern.permute.xlu0 0
  %3886 = vperm.xlu0 %3885, %v3852
  %v3887 = vpop.permute.xlu0 %3886
  %3890 = vset.pattern.permute.xlu0 0
  %3891 = vperm.xlu0 %3890, %v3853
  %v3892 = vpop.permute.xlu0 %3891
  %v3894 = vmul.f32 %v3857, %v3423
  %v3895 = vmul.f32 %v3862, %v3425
  %v3896 = vmul.f32 %v3867, %v3427
  %v3897 = vmul.f32 %v3872, %v3429
  %v3898 = vmul.f32 %v3877, %v3431
  %v3899 = vmul.f32 %v3882, %v3433
  %v3900 = vmul.f32 %v3887, %v3435
  %v3901 = vmul.f32 %v3892, %v3437
  %v3902 = vadd.f32 %v3750, %v3894
  %v3903 = vadd.f32 %v3751, %v3895
  %v3904 = vadd.f32 %v3752, %v3896
  %v3905 = vadd.f32 %v3753, %v3897
  %v3906 = vadd.f32 %v3754, %v3898
  %v3907 = vadd.f32 %v3755, %v3899
  %v3908 = vadd.f32 %v3756, %v3900
  %v3909 = vadd.f32 %v3757, %v3901
  %v3910 = vmul.f32 %v3846, 1.5714285
  %v3911 = vmul.f32 %v3847, 1.5714285
  %v3912 = vmul.f32 %v3848, 1.5714285
  %v3913 = vmul.f32 %v3849, 1.5714285
  %v3914 = vmul.f32 %v3850, 1.5714285
  %v3915 = vmul.f32 %v3851, 1.5714285
  %v3916 = vmul.f32 %v3852, 1.5714285
  %v3917 = vmul.f32 %v3853, 1.5714285
  %v3918 = vadd.f32 %v3766, %v3910
  %v3919 = vadd.f32 %v3767, %v3911
  %v3920 = vadd.f32 %v3768, %v3912
  %v3921 = vadd.f32 %v3769, %v3913
  %v3922 = vadd.f32 %v3770, %v3914
  %v3923 = vadd.f32 %v3771, %v3915
  %v3924 = vadd.f32 %v3772, %v3916
  %v3925 = vadd.f32 %v3773, %v3917
  %v3926 = vadd.f32 %v3774, %v3782
  %v3927 = vadd.f32 %v3775, %v3783
  %v3928 = vadd.f32 %v3776, %v3784
  %v3929 = vadd.f32 %v3777, %v3785
  %v3930 = vadd.f32 %v3778, %v3786
  %v3931 = vadd.f32 %v3779, %v3787
  %v3932 = vadd.f32 %v3780, %v3788
  %v3933 = vadd.f32 %v3781, %v3789
  %v3934 = vmul.f32 %v2702, 0.2857143
  %v3935 = vmul.f32 %v2703, 0.2857143
  %v3936 = vmul.f32 %v2704, 0.2857143
  %v3937 = vmul.f32 %v2705, 0.2857143
  %v3938 = vmul.f32 %v2706, 0.2857143
  %v3939 = vmul.f32 %v2707, 0.2857143
  %v3940 = vmul.f32 %v2708, 0.2857143
  %v3941 = vmul.f32 %v2709, 0.2857143
  %v3942 = vsub.f32 0.0, %v3926
  %v3943 = vsub.f32 0.0, %v3927
  %v3944 = vsub.f32 0.0, %v3928
  %v3945 = vsub.f32 0.0, %v3929
  %v3946 = vsub.f32 0.0, %v3930
  %v3947 = vsub.f32 0.0, %v3931
  %v3948 = vsub.f32 0.0, %v3932
  %v3949 = vsub.f32 0.0, %v3933
  %v3950 = vmul.f32 %v3942, 1.442695
  %v3951 = vpow.pop %v3950
  %v3952 = vmul.f32 %v3943, 1.442695
  %v3953 = vpow.pop %v3952
  %v3954 = vmul.f32 %v3944, 1.442695
  %v3955 = vpow.pop %v3954
  %v3956 = vmul.f32 %v3945, 1.442695
  %v3957 = vpow.pop %v3956
  %v3958 = vmul.f32 %v3946, 1.442695
  %v3959 = vpow.pop %v3958
  %v3960 = vmul.f32 %v3947, 1.442695
  %v3961 = vpow.pop %v3960
  %v3962 = vmul.f32 %v3948, 1.442695
  %v3963 = vpow.pop %v3962
  %v3964 = vmul.f32 %v3949, 1.442695
  %v3965 = vpow.pop %v3964
  %v3966 = vsub.f32 0.0, %v3934
  %v3967 = vsub.f32 0.0, %v3935
  %v3968 = vsub.f32 0.0, %v3936
  %v3969 = vsub.f32 0.0, %v3937
  %v3970 = vsub.f32 0.0, %v3938
  %v3971 = vsub.f32 0.0, %v3939
  %v3972 = vsub.f32 0.0, %v3940
  %v3973 = vsub.f32 0.0, %v3941
  %v3974 = vmul.f32 %v3966, 1.442695
  %v3975 = vpow.pop %v3974
  %v3976 = vmul.f32 %v3967, 1.442695
  %v3977 = vpow.pop %v3976
  %v3978 = vmul.f32 %v3968, 1.442695
  %v3979 = vpow.pop %v3978
  %v3980 = vmul.f32 %v3969, 1.442695
  %v3981 = vpow.pop %v3980
  %v3982 = vmul.f32 %v3970, 1.442695
  %v3983 = vpow.pop %v3982
  %v3984 = vmul.f32 %v3971, 1.442695
  %v3985 = vpow.pop %v3984
  %v3986 = vmul.f32 %v3972, 1.442695
  %v3987 = vpow.pop %v3986
  %v3988 = vmul.f32 %v3973, 1.442695
  %v3989 = vpow.pop %v3988
  %v3990 = vsub.f32 1.0, %v3975
  %v3991 = vsub.f32 1.0, %v3977
  %v3992 = vsub.f32 1.0, %v3979
  %v3993 = vsub.f32 1.0, %v3981
  %v3994 = vsub.f32 1.0, %v3983
  %v3995 = vsub.f32 1.0, %v3985
  %v3996 = vsub.f32 1.0, %v3987
  %v3997 = vsub.f32 1.0, %v3989
  %v3998 = vmul.f32 %v3951, %v3990
  %v3999 = vmul.f32 %v3953, %v3991
  %v4000 = vmul.f32 %v3955, %v3992
  %v4001 = vmul.f32 %v3957, %v3993
  %v4002 = vmul.f32 %v3959, %v3994
  %v4003 = vmul.f32 %v3961, %v3995
  %v4004 = vmul.f32 %v3963, %v3996
  %v4005 = vmul.f32 %v3965, %v3997
  %4007 = vset.pattern.permute.xlu0 0
  %4008 = vperm.xlu0 %4007, %v3998
  %v4009 = vpop.permute.xlu0 %4008
  %4012 = vset.pattern.permute.xlu0 0
  %4013 = vperm.xlu0 %4012, %v3999
  %v4014 = vpop.permute.xlu0 %4013
  %4017 = vset.pattern.permute.xlu0 0
  %4018 = vperm.xlu0 %4017, %v4000
  %v4019 = vpop.permute.xlu0 %4018
  %4022 = vset.pattern.permute.xlu0 0
  %4023 = vperm.xlu0 %4022, %v4001
  %v4024 = vpop.permute.xlu0 %4023
  %4027 = vset.pattern.permute.xlu0 0
  %4028 = vperm.xlu0 %4027, %v4002
  %v4029 = vpop.permute.xlu0 %4028
  %4032 = vset.pattern.permute.xlu0 0
  %4033 = vperm.xlu0 %4032, %v4003
  %v4034 = vpop.permute.xlu0 %4033
  %4037 = vset.pattern.permute.xlu0 0
  %4038 = vperm.xlu0 %4037, %v4004
  %v4039 = vpop.permute.xlu0 %4038
  %4042 = vset.pattern.permute.xlu0 0
  %4043 = vperm.xlu0 %4042, %v4005
  %v4044 = vpop.permute.xlu0 %4043
  %v4046 = vmul.f32 %v4009, %v3439
  %v4047 = vmul.f32 %v4014, %v3441
  %v4048 = vmul.f32 %v4019, %v3443
  %v4049 = vmul.f32 %v4024, %v3445
  %v4050 = vmul.f32 %v4029, %v3447
  %v4051 = vmul.f32 %v4034, %v3449
  %v4052 = vmul.f32 %v4039, %v3451
  %v4053 = vmul.f32 %v4044, %v3453
  %v4054 = vadd.f32 %v3902, %v4046
  %v4055 = vadd.f32 %v3903, %v4047
  %v4056 = vadd.f32 %v3904, %v4048
  %v4057 = vadd.f32 %v3905, %v4049
  %v4058 = vadd.f32 %v3906, %v4050
  %v4059 = vadd.f32 %v3907, %v4051
  %v4060 = vadd.f32 %v3908, %v4052
  %v4061 = vadd.f32 %v3909, %v4053
  %v4062 = vmul.f32 %v3998, 1.8571428
  %v4063 = vmul.f32 %v3999, 1.8571428
  %v4064 = vmul.f32 %v4000, 1.8571428
  %v4065 = vmul.f32 %v4001, 1.8571428
  %v4066 = vmul.f32 %v4002, 1.8571428
  %v4067 = vmul.f32 %v4003, 1.8571428
  %v4068 = vmul.f32 %v4004, 1.8571428
  %v4069 = vmul.f32 %v4005, 1.8571428
  %v4070 = vadd.f32 %v3918, %v4062
  %v4071 = vadd.f32 %v3919, %v4063
  %v4072 = vadd.f32 %v3920, %v4064
  %v4073 = vadd.f32 %v3921, %v4065
  %v4074 = vadd.f32 %v3922, %v4066
  %v4075 = vadd.f32 %v3923, %v4067
  %v4076 = vadd.f32 %v3924, %v4068
  %v4077 = vadd.f32 %v3925, %v4069
  %v4078 = vadd.f32 %v3926, %v3934
  %v4079 = vadd.f32 %v3927, %v3935
  %v4080 = vadd.f32 %v3928, %v3936
  %v4081 = vadd.f32 %v3929, %v3937
  %v4082 = vadd.f32 %v3930, %v3938
  %v4083 = vadd.f32 %v3931, %v3939
  %v4084 = vadd.f32 %v3932, %v3940
  %v4085 = vadd.f32 %v3933, %v3941
  %v4086 = vmul.f32 %v2710, 0.2857143
  %v4087 = vmul.f32 %v2711, 0.2857143
  %v4088 = vmul.f32 %v2712, 0.2857143
  %v4089 = vmul.f32 %v2713, 0.2857143
  %v4090 = vmul.f32 %v2714, 0.2857143
  %v4091 = vmul.f32 %v2715, 0.2857143
  %v4092 = vmul.f32 %v2716, 0.2857143
  %v4093 = vmul.f32 %v2717, 0.2857143
  %v4094 = vsub.f32 0.0, %v4078
  %v4095 = vsub.f32 0.0, %v4079
  %v4096 = vsub.f32 0.0, %v4080
  %v4097 = vsub.f32 0.0, %v4081
  %v4098 = vsub.f32 0.0, %v4082
  %v4099 = vsub.f32 0.0, %v4083
  %v4100 = vsub.f32 0.0, %v4084
  %v4101 = vsub.f32 0.0, %v4085
  %v4102 = vmul.f32 %v4094, 1.442695
  %v4103 = vpow.pop %v4102
  %v4104 = vmul.f32 %v4095, 1.442695
  %v4105 = vpow.pop %v4104
  %v4106 = vmul.f32 %v4096, 1.442695
  %v4107 = vpow.pop %v4106
  %v4108 = vmul.f32 %v4097, 1.442695
  %v4109 = vpow.pop %v4108
  %v4110 = vmul.f32 %v4098, 1.442695
  %v4111 = vpow.pop %v4110
  %v4112 = vmul.f32 %v4099, 1.442695
  %v4113 = vpow.pop %v4112
  %v4114 = vmul.f32 %v4100, 1.442695
  %v4115 = vpow.pop %v4114
  %v4116 = vmul.f32 %v4101, 1.442695
  %v4117 = vpow.pop %v4116
  %v4118 = vsub.f32 0.0, %v4086
  %v4119 = vsub.f32 0.0, %v4087
  %v4120 = vsub.f32 0.0, %v4088
  %v4121 = vsub.f32 0.0, %v4089
  %v4122 = vsub.f32 0.0, %v4090
  %v4123 = vsub.f32 0.0, %v4091
  %v4124 = vsub.f32 0.0, %v4092
  %v4125 = vsub.f32 0.0, %v4093
  %v4126 = vmul.f32 %v4118, 1.442695
  %v4127 = vpow.pop %v4126
  %v4128 = vmul.f32 %v4119, 1.442695
  %v4129 = vpow.pop %v4128
  %v4130 = vmul.f32 %v4120, 1.442695
  %v4131 = vpow.pop %v4130
  %v4132 = vmul.f32 %v4121, 1.442695
  %v4133 = vpow.pop %v4132
  %v4134 = vmul.f32 %v4122, 1.442695
  %v4135 = vpow.pop %v4134
  %v4136 = vmul.f32 %v4123, 1.442695
  %v4137 = vpow.pop %v4136
  %v4138 = vmul.f32 %v4124, 1.442695
  %v4139 = vpow.pop %v4138
  %v4140 = vmul.f32 %v4125, 1.442695
  %v4141 = vpow.pop %v4140
  %v4142 = vsub.f32 1.0, %v4127
  %v4143 = vsub.f32 1.0, %v4129
  %v4144 = vsub.f32 1.0, %v4131
  %v4145 = vsub.f32 1.0, %v4133
  %v4146 = vsub.f32 1.0, %v4135
  %v4147 = vsub.f32 1.0, %v4137
  %v4148 = vsub.f32 1.0, %v4139
  %v4149 = vsub.f32 1.0, %v4141
  %v4150 = vmul.f32 %v4103, %v4142
  %v4151 = vmul.f32 %v4105, %v4143
  %v4152 = vmul.f32 %v4107, %v4144
  %v4153 = vmul.f32 %v4109, %v4145
  %v4154 = vmul.f32 %v4111, %v4146
  %v4155 = vmul.f32 %v4113, %v4147
  %v4156 = vmul.f32 %v4115, %v4148
  %v4157 = vmul.f32 %v4117, %v4149
  %4159 = vset.pattern.permute.xlu0 0
  %4160 = vperm.xlu0 %4159, %v4150
  %v4161 = vpop.permute.xlu0 %4160
  %4164 = vset.pattern.permute.xlu0 0
  %4165 = vperm.xlu0 %4164, %v4151
  %v4166 = vpop.permute.xlu0 %4165
  %4169 = vset.pattern.permute.xlu0 0
  %4170 = vperm.xlu0 %4169, %v4152
  %v4171 = vpop.permute.xlu0 %4170
  %4174 = vset.pattern.permute.xlu0 0
  %4175 = vperm.xlu0 %4174, %v4153
  %v4176 = vpop.permute.xlu0 %4175
  %4179 = vset.pattern.permute.xlu0 0
  %4180 = vperm.xlu0 %4179, %v4154
  %v4181 = vpop.permute.xlu0 %4180
  %4184 = vset.pattern.permute.xlu0 0
  %4185 = vperm.xlu0 %4184, %v4155
  %v4186 = vpop.permute.xlu0 %4185
  %4189 = vset.pattern.permute.xlu0 0
  %4190 = vperm.xlu0 %4189, %v4156
  %v4191 = vpop.permute.xlu0 %4190
  %4194 = vset.pattern.permute.xlu0 0
  %4195 = vperm.xlu0 %4194, %v4157
  %v4196 = vpop.permute.xlu0 %4195
  %v4198 = vmul.f32 %v4161, %v3455
  %v4199 = vmul.f32 %v4166, %v3457
  %v4200 = vmul.f32 %v4171, %v3459
  %v4201 = vmul.f32 %v4176, %v3461
  %v4202 = vmul.f32 %v4181, %v3463
  %v4203 = vmul.f32 %v4186, %v3465
  %v4204 = vmul.f32 %v4191, %v3467
  %v4205 = vmul.f32 %v4196, %v3469
  %v4206 = vadd.f32 %v4054, %v4198
  %v4207 = vadd.f32 %v4055, %v4199
  %v4208 = vadd.f32 %v4056, %v4200
  %v4209 = vadd.f32 %v4057, %v4201
  %v4210 = vadd.f32 %v4058, %v4202
  %v4211 = vadd.f32 %v4059, %v4203
  %v4212 = vadd.f32 %v4060, %v4204
  %v4213 = vadd.f32 %v4061, %v4205
  %v4214 = vmul.f32 %v4150, 2.142857
  %v4215 = vmul.f32 %v4151, 2.142857
  %v4216 = vmul.f32 %v4152, 2.142857
  %v4217 = vmul.f32 %v4153, 2.142857
  %v4218 = vmul.f32 %v4154, 2.142857
  %v4219 = vmul.f32 %v4155, 2.142857
  %v4220 = vmul.f32 %v4156, 2.142857
  %v4221 = vmul.f32 %v4157, 2.142857
  %v4222 = vadd.f32 %v4070, %v4214
  %v4223 = vadd.f32 %v4071, %v4215
  %v4224 = vadd.f32 %v4072, %v4216
  %v4225 = vadd.f32 %v4073, %v4217
  %v4226 = vadd.f32 %v4074, %v4218
  %v4227 = vadd.f32 %v4075, %v4219
  %v4228 = vadd.f32 %v4076, %v4220
  %v4229 = vadd.f32 %v4077, %v4221
  %v4230 = vadd.f32 %v4078, %v4086
  %v4231 = vadd.f32 %v4079, %v4087
  %v4232 = vadd.f32 %v4080, %v4088
  %v4233 = vadd.f32 %v4081, %v4089
  %v4234 = vadd.f32 %v4082, %v4090
  %v4235 = vadd.f32 %v4083, %v4091
  %v4236 = vadd.f32 %v4084, %v4092
  %v4237 = vadd.f32 %v4085, %v4093
  %v4238 = vmul.f32 %v2718, 0.2857143
  %v4239 = vmul.f32 %v2719, 0.2857143
  %v4240 = vmul.f32 %v2720, 0.2857143
  %v4241 = vmul.f32 %v2721, 0.2857143
  %v4242 = vmul.f32 %v2722, 0.2857143
  %v4243 = vmul.f32 %v2723, 0.2857143
  %v4244 = vmul.f32 %v2724, 0.2857143
  %v4245 = vmul.f32 %v2725, 0.2857143
  %v4246 = vsub.f32 0.0, %v4230
  %v4247 = vsub.f32 0.0, %v4231
  %v4248 = vsub.f32 0.0, %v4232
  %v4249 = vsub.f32 0.0, %v4233
  %v4250 = vsub.f32 0.0, %v4234
  %v4251 = vsub.f32 0.0, %v4235
  %v4252 = vsub.f32 0.0, %v4236
  %v4253 = vsub.f32 0.0, %v4237
  %v4254 = vmul.f32 %v4246, 1.442695
  %v4255 = vpow.pop %v4254
  %v4256 = vmul.f32 %v4247, 1.442695
  %v4257 = vpow.pop %v4256
  %v4258 = vmul.f32 %v4248, 1.442695
  %v4259 = vpow.pop %v4258
  %v4260 = vmul.f32 %v4249, 1.442695
  %v4261 = vpow.pop %v4260
  %v4262 = vmul.f32 %v4250, 1.442695
  %v4263 = vpow.pop %v4262
  %v4264 = vmul.f32 %v4251, 1.442695
  %v4265 = vpow.pop %v4264
  %v4266 = vmul.f32 %v4252, 1.442695
  %v4267 = vpow.pop %v4266
  %v4268 = vmul.f32 %v4253, 1.442695
  %v4269 = vpow.pop %v4268
  %v4270 = vsub.f32 0.0, %v4238
  %v4271 = vsub.f32 0.0, %v4239
  %v4272 = vsub.f32 0.0, %v4240
  %v4273 = vsub.f32 0.0, %v4241
  %v4274 = vsub.f32 0.0, %v4242
  %v4275 = vsub.f32 0.0, %v4243
  %v4276 = vsub.f32 0.0, %v4244
  %v4277 = vsub.f32 0.0, %v4245
  %v4278 = vmul.f32 %v4270, 1.442695
  %v4279 = vpow.pop %v4278
  %v4280 = vmul.f32 %v4271, 1.442695
  %v4281 = vpow.pop %v4280
  %v4282 = vmul.f32 %v4272, 1.442695
  %v4283 = vpow.pop %v4282
  %v4284 = vmul.f32 %v4273, 1.442695
  %v4285 = vpow.pop %v4284
  %v4286 = vmul.f32 %v4274, 1.442695
  %v4287 = vpow.pop %v4286
  %v4288 = vmul.f32 %v4275, 1.442695
  %v4289 = vpow.pop %v4288
  %v4290 = vmul.f32 %v4276, 1.442695
  %v4291 = vpow.pop %v4290
  %v4292 = vmul.f32 %v4277, 1.442695
  %v4293 = vpow.pop %v4292
  %v4294 = vsub.f32 1.0, %v4279
  %v4295 = vsub.f32 1.0, %v4281
  %v4296 = vsub.f32 1.0, %v4283
  %v4297 = vsub.f32 1.0, %v4285
  %v4298 = vsub.f32 1.0, %v4287
  %v4299 = vsub.f32 1.0, %v4289
  %v4300 = vsub.f32 1.0, %v4291
  %v4301 = vsub.f32 1.0, %v4293
  %v4302 = vmul.f32 %v4255, %v4294
  %v4303 = vmul.f32 %v4257, %v4295
  %v4304 = vmul.f32 %v4259, %v4296
  %v4305 = vmul.f32 %v4261, %v4297
  %v4306 = vmul.f32 %v4263, %v4298
  %v4307 = vmul.f32 %v4265, %v4299
  %v4308 = vmul.f32 %v4267, %v4300
  %v4309 = vmul.f32 %v4269, %v4301
  %4311 = vset.pattern.permute.xlu0 0
  %4312 = vperm.xlu0 %4311, %v4302
  %v4313 = vpop.permute.xlu0 %4312
  %4316 = vset.pattern.permute.xlu0 0
  %4317 = vperm.xlu0 %4316, %v4303
  %v4318 = vpop.permute.xlu0 %4317
  %4321 = vset.pattern.permute.xlu0 0
  %4322 = vperm.xlu0 %4321, %v4304
  %v4323 = vpop.permute.xlu0 %4322
  %4326 = vset.pattern.permute.xlu0 0
  %4327 = vperm.xlu0 %4326, %v4305
  %v4328 = vpop.permute.xlu0 %4327
  %4331 = vset.pattern.permute.xlu0 0
  %4332 = vperm.xlu0 %4331, %v4306
  %v4333 = vpop.permute.xlu0 %4332
  %4336 = vset.pattern.permute.xlu0 0
  %4337 = vperm.xlu0 %4336, %v4307
  %v4338 = vpop.permute.xlu0 %4337
  %4341 = vset.pattern.permute.xlu0 0
  %4342 = vperm.xlu0 %4341, %v4308
  %v4343 = vpop.permute.xlu0 %4342
  %4346 = vset.pattern.permute.xlu0 0
  %4347 = vperm.xlu0 %4346, %v4309
  %v4348 = vpop.permute.xlu0 %4347
  %v4350 = vmul.f32 %v4313, %v3471
  %v4351 = vmul.f32 %v4318, %v3473
  %v4352 = vmul.f32 %v4323, %v3475
  %v4353 = vmul.f32 %v4328, %v3477
  %v4354 = vmul.f32 %v4333, %v3479
  %v4355 = vmul.f32 %v4338, %v3481
  %v4356 = vmul.f32 %v4343, %v3483
  %v4357 = vmul.f32 %v4348, %v3485
  %v4358 = vadd.f32 %v4206, %v4350
  %v4359 = vadd.f32 %v4207, %v4351
  %v4360 = vadd.f32 %v4208, %v4352
  %v4361 = vadd.f32 %v4209, %v4353
  %v4362 = vadd.f32 %v4210, %v4354
  %v4363 = vadd.f32 %v4211, %v4355
  %v4364 = vadd.f32 %v4212, %v4356
  %v4365 = vadd.f32 %v4213, %v4357
  %v4366 = vmul.f32 %v4302, 2.4285715
  %v4367 = vmul.f32 %v4303, 2.4285715
  %v4368 = vmul.f32 %v4304, 2.4285715
  %v4369 = vmul.f32 %v4305, 2.4285715
  %v4370 = vmul.f32 %v4306, 2.4285715
  %v4371 = vmul.f32 %v4307, 2.4285715
  %v4372 = vmul.f32 %v4308, 2.4285715
  %v4373 = vmul.f32 %v4309, 2.4285715
  %v4374 = vadd.f32 %v4222, %v4366
  %v4375 = vadd.f32 %v4223, %v4367
  %v4376 = vadd.f32 %v4224, %v4368
  %v4377 = vadd.f32 %v4225, %v4369
  %v4378 = vadd.f32 %v4226, %v4370
  %v4379 = vadd.f32 %v4227, %v4371
  %v4380 = vadd.f32 %v4228, %v4372
  %v4381 = vadd.f32 %v4229, %v4373
  %v4382 = vadd.f32 %v4230, %v4238
  %v4383 = vadd.f32 %v4231, %v4239
  %v4384 = vadd.f32 %v4232, %v4240
  %v4385 = vadd.f32 %v4233, %v4241
  %v4386 = vadd.f32 %v4234, %v4242
  %v4387 = vadd.f32 %v4235, %v4243
  %v4388 = vadd.f32 %v4236, %v4244
  %v4389 = vadd.f32 %v4237, %v4245
  %v4390 = vmul.f32 %v2726, 0.2857143
  %v4391 = vmul.f32 %v2727, 0.2857143
  %v4392 = vmul.f32 %v2728, 0.2857143
  %v4393 = vmul.f32 %v2729, 0.2857143
  %v4394 = vmul.f32 %v2730, 0.2857143
  %v4395 = vmul.f32 %v2731, 0.2857143
  %v4396 = vmul.f32 %v2732, 0.2857143
  %v4397 = vmul.f32 %v2733, 0.2857143
  %v4398 = vsub.f32 0.0, %v4382
  %v4399 = vsub.f32 0.0, %v4383
  %v4400 = vsub.f32 0.0, %v4384
  %v4401 = vsub.f32 0.0, %v4385
  %v4402 = vsub.f32 0.0, %v4386
  %v4403 = vsub.f32 0.0, %v4387
  %v4404 = vsub.f32 0.0, %v4388
  %v4405 = vsub.f32 0.0, %v4389
  %v4406 = vmul.f32 %v4398, 1.442695
  %v4407 = vpow.pop %v4406
  %v4408 = vmul.f32 %v4399, 1.442695
  %v4409 = vpow.pop %v4408
  %v4410 = vmul.f32 %v4400, 1.442695
  %v4411 = vpow.pop %v4410
  %v4412 = vmul.f32 %v4401, 1.442695
  %v4413 = vpow.pop %v4412
  %v4414 = vmul.f32 %v4402, 1.442695
  %v4415 = vpow.pop %v4414
  %v4416 = vmul.f32 %v4403, 1.442695
  %v4417 = vpow.pop %v4416
  %v4418 = vmul.f32 %v4404, 1.442695
  %v4419 = vpow.pop %v4418
  %v4420 = vmul.f32 %v4405, 1.442695
  %v4421 = vpow.pop %v4420
  %v4422 = vsub.f32 0.0, %v4390
  %v4423 = vsub.f32 0.0, %v4391
  %v4424 = vsub.f32 0.0, %v4392
  %v4425 = vsub.f32 0.0, %v4393
  %v4426 = vsub.f32 0.0, %v4394
  %v4427 = vsub.f32 0.0, %v4395
  %v4428 = vsub.f32 0.0, %v4396
  %v4429 = vsub.f32 0.0, %v4397
  %v4430 = vmul.f32 %v4422, 1.442695
  %v4431 = vpow.pop %v4430
  %v4432 = vmul.f32 %v4423, 1.442695
  %v4433 = vpow.pop %v4432
  %v4434 = vmul.f32 %v4424, 1.442695
  %v4435 = vpow.pop %v4434
  %v4436 = vmul.f32 %v4425, 1.442695
  %v4437 = vpow.pop %v4436
  %v4438 = vmul.f32 %v4426, 1.442695
  %v4439 = vpow.pop %v4438
  %v4440 = vmul.f32 %v4427, 1.442695
  %v4441 = vpow.pop %v4440
  %v4442 = vmul.f32 %v4428, 1.442695
  %v4443 = vpow.pop %v4442
  %v4444 = vmul.f32 %v4429, 1.442695
  %v4445 = vpow.pop %v4444
  %v4446 = vsub.f32 1.0, %v4431
  %v4447 = vsub.f32 1.0, %v4433
  %v4448 = vsub.f32 1.0, %v4435
  %v4449 = vsub.f32 1.0, %v4437
  %v4450 = vsub.f32 1.0, %v4439
  %v4451 = vsub.f32 1.0, %v4441
  %v4452 = vsub.f32 1.0, %v4443
  %v4453 = vsub.f32 1.0, %v4445
  %v4454 = vmul.f32 %v4407, %v4446
  %v4455 = vmul.f32 %v4409, %v4447
  %v4456 = vmul.f32 %v4411, %v4448
  %v4457 = vmul.f32 %v4413, %v4449
  %v4458 = vmul.f32 %v4415, %v4450
  %v4459 = vmul.f32 %v4417, %v4451
  %v4460 = vmul.f32 %v4419, %v4452
  %v4461 = vmul.f32 %v4421, %v4453
  %4463 = vset.pattern.permute.xlu0 0
  %4464 = vperm.xlu0 %4463, %v4454
  %v4465 = vpop.permute.xlu0 %4464
  %4468 = vset.pattern.permute.xlu0 0
  %4469 = vperm.xlu0 %4468, %v4455
  %v4470 = vpop.permute.xlu0 %4469
  %4473 = vset.pattern.permute.xlu0 0
  %4474 = vperm.xlu0 %4473, %v4456
  %v4475 = vpop.permute.xlu0 %4474
  %4478 = vset.pattern.permute.xlu0 0
  %4479 = vperm.xlu0 %4478, %v4457
  %v4480 = vpop.permute.xlu0 %4479
  %4483 = vset.pattern.permute.xlu0 0
  %4484 = vperm.xlu0 %4483, %v4458
  %v4485 = vpop.permute.xlu0 %4484
  %4488 = vset.pattern.permute.xlu0 0
  %4489 = vperm.xlu0 %4488, %v4459
  %v4490 = vpop.permute.xlu0 %4489
  %4493 = vset.pattern.permute.xlu0 0
  %4494 = vperm.xlu0 %4493, %v4460
  %v4495 = vpop.permute.xlu0 %4494
  %4498 = vset.pattern.permute.xlu0 0
  %4499 = vperm.xlu0 %4498, %v4461
  %v4500 = vpop.permute.xlu0 %4499
  %v4502 = vmul.f32 %v4465, %v3487
  %v4503 = vmul.f32 %v4470, %v3489
  %v4504 = vmul.f32 %v4475, %v3491
  %v4505 = vmul.f32 %v4480, %v3493
  %v4506 = vmul.f32 %v4485, %v3495
  %v4507 = vmul.f32 %v4490, %v3497
  %v4508 = vmul.f32 %v4495, %v3499
  %v4509 = vmul.f32 %v4500, %v3501
  %v4510 = vadd.f32 %v4358, %v4502
  %v4511 = vadd.f32 %v4359, %v4503
  %v4512 = vadd.f32 %v4360, %v4504
  %v4513 = vadd.f32 %v4361, %v4505
  %v4514 = vadd.f32 %v4362, %v4506
  %v4515 = vadd.f32 %v4363, %v4507
  %v4516 = vadd.f32 %v4364, %v4508
  %v4517 = vadd.f32 %v4365, %v4509
  %v4518 = vmul.f32 %v4454, 2.7142856
  %v4519 = vmul.f32 %v4455, 2.7142856
  %v4520 = vmul.f32 %v4456, 2.7142856
  %v4521 = vmul.f32 %v4457, 2.7142856
  %v4522 = vmul.f32 %v4458, 2.7142856
  %v4523 = vmul.f32 %v4459, 2.7142856
  %v4524 = vmul.f32 %v4460, 2.7142856
  %v4525 = vmul.f32 %v4461, 2.7142856
  %v4526 = vadd.f32 %v4374, %v4518
  %v4527 = vadd.f32 %v4375, %v4519
  %v4528 = vadd.f32 %v4376, %v4520
  %v4529 = vadd.f32 %v4377, %v4521
  %v4530 = vadd.f32 %v4378, %v4522
  %v4531 = vadd.f32 %v4379, %v4523
  %v4532 = vadd.f32 %v4380, %v4524
  %v4533 = vadd.f32 %v4381, %v4525
  %v4534 = vadd.f32 %v4382, %v4390
  %v4535 = vadd.f32 %v4383, %v4391
  %v4536 = vadd.f32 %v4384, %v4392
  %v4537 = vadd.f32 %v4385, %v4393
  %v4538 = vadd.f32 %v4386, %v4394
  %v4539 = vadd.f32 %v4387, %v4395
  %v4540 = vadd.f32 %v4388, %v4396
  %v4541 = vadd.f32 %v4389, %v4397
  %v4542 = vmul.f32 %v2734, 0.2857143
  %v4543 = vmul.f32 %v2735, 0.2857143
  %v4544 = vmul.f32 %v2736, 0.2857143
  %v4545 = vmul.f32 %v2737, 0.2857143
  %v4546 = vmul.f32 %v2738, 0.2857143
  %v4547 = vmul.f32 %v2739, 0.2857143
  %v4548 = vmul.f32 %v2740, 0.2857143
  %v4549 = vmul.f32 %v2741, 0.2857143
  %v4550 = vsub.f32 0.0, %v4534
  %v4551 = vsub.f32 0.0, %v4535
  %v4552 = vsub.f32 0.0, %v4536
  %v4553 = vsub.f32 0.0, %v4537
  %v4554 = vsub.f32 0.0, %v4538
  %v4555 = vsub.f32 0.0, %v4539
  %v4556 = vsub.f32 0.0, %v4540
  %v4557 = vsub.f32 0.0, %v4541
  %v4558 = vmul.f32 %v4550, 1.442695
  %v4559 = vpow.pop %v4558
  %v4560 = vmul.f32 %v4551, 1.442695
  %v4561 = vpow.pop %v4560
  %v4562 = vmul.f32 %v4552, 1.442695
  %v4563 = vpow.pop %v4562
  %v4564 = vmul.f32 %v4553, 1.442695
  %v4565 = vpow.pop %v4564
  %v4566 = vmul.f32 %v4554, 1.442695
  %v4567 = vpow.pop %v4566
  %v4568 = vmul.f32 %v4555, 1.442695
  %v4569 = vpow.pop %v4568
  %v4570 = vmul.f32 %v4556, 1.442695
  %v4571 = vpow.pop %v4570
  %v4572 = vmul.f32 %v4557, 1.442695
  %v4573 = vpow.pop %v4572
  %v4574 = vsub.f32 0.0, %v4542
  %v4575 = vsub.f32 0.0, %v4543
  %v4576 = vsub.f32 0.0, %v4544
  %v4577 = vsub.f32 0.0, %v4545
  %v4578 = vsub.f32 0.0, %v4546
  %v4579 = vsub.f32 0.0, %v4547
  %v4580 = vsub.f32 0.0, %v4548
  %v4581 = vsub.f32 0.0, %v4549
  %v4582 = vmul.f32 %v4574, 1.442695
  %v4583 = vpow.pop %v4582
  %v4584 = vmul.f32 %v4575, 1.442695
  %v4585 = vpow.pop %v4584
  %v4586 = vmul.f32 %v4576, 1.442695
  %v4587 = vpow.pop %v4586
  %v4588 = vmul.f32 %v4577, 1.442695
  %v4589 = vpow.pop %v4588
  %v4590 = vmul.f32 %v4578, 1.442695
  %v4591 = vpow.pop %v4590
  %v4592 = vmul.f32 %v4579, 1.442695
  %v4593 = vpow.pop %v4592
  %v4594 = vmul.f32 %v4580, 1.442695
  %v4595 = vpow.pop %v4594
  %v4596 = vmul.f32 %v4581, 1.442695
  %v4597 = vpow.pop %v4596
  %v4598 = vsub.f32 1.0, %v4583
  %v4599 = vsub.f32 1.0, %v4585
  %v4600 = vsub.f32 1.0, %v4587
  %v4601 = vsub.f32 1.0, %v4589
  %v4602 = vsub.f32 1.0, %v4591
  %v4603 = vsub.f32 1.0, %v4593
  %v4604 = vsub.f32 1.0, %v4595
  %v4605 = vsub.f32 1.0, %v4597
  %v4606 = vmul.f32 %v4559, %v4598
  %v4607 = vmul.f32 %v4561, %v4599
  %v4608 = vmul.f32 %v4563, %v4600
  %v4609 = vmul.f32 %v4565, %v4601
  %v4610 = vmul.f32 %v4567, %v4602
  %v4611 = vmul.f32 %v4569, %v4603
  %v4612 = vmul.f32 %v4571, %v4604
  %v4613 = vmul.f32 %v4573, %v4605
  %4615 = vset.pattern.permute.xlu0 0
  %4616 = vperm.xlu0 %4615, %v4606
  %v4617 = vpop.permute.xlu0 %4616
  %4620 = vset.pattern.permute.xlu0 0
  %4621 = vperm.xlu0 %4620, %v4607
  %v4622 = vpop.permute.xlu0 %4621
  %4625 = vset.pattern.permute.xlu0 0
  %4626 = vperm.xlu0 %4625, %v4608
  %v4627 = vpop.permute.xlu0 %4626
  %4630 = vset.pattern.permute.xlu0 0
  %4631 = vperm.xlu0 %4630, %v4609
  %v4632 = vpop.permute.xlu0 %4631
  %4635 = vset.pattern.permute.xlu0 0
  %4636 = vperm.xlu0 %4635, %v4610
  %v4637 = vpop.permute.xlu0 %4636
  %4640 = vset.pattern.permute.xlu0 0
  %4641 = vperm.xlu0 %4640, %v4611
  %v4642 = vpop.permute.xlu0 %4641
  %4645 = vset.pattern.permute.xlu0 0
  %4646 = vperm.xlu0 %4645, %v4612
  %v4647 = vpop.permute.xlu0 %4646
  %4650 = vset.pattern.permute.xlu0 0
  %4651 = vperm.xlu0 %4650, %v4613
  %v4652 = vpop.permute.xlu0 %4651
  %v4654 = vmul.f32 %v4617, %v3503
  %v4655 = vmul.f32 %v4622, %v3505
  %v4656 = vmul.f32 %v4627, %v3507
  %v4657 = vmul.f32 %v4632, %v3509
  %v4658 = vmul.f32 %v4637, %v3511
  %v4659 = vmul.f32 %v4642, %v3513
  %v4660 = vmul.f32 %v4647, %v3515
  %v4661 = vmul.f32 %v4652, %v3517
  %v4662 = vadd.f32 %v4510, %v4654
  %v4663 = vadd.f32 %v4511, %v4655
  %v4664 = vadd.f32 %v4512, %v4656
  %v4665 = vadd.f32 %v4513, %v4657
  %v4666 = vadd.f32 %v4514, %v4658
  %v4667 = vadd.f32 %v4515, %v4659
  %v4668 = vadd.f32 %v4516, %v4660
  %v4669 = vadd.f32 %v4517, %v4661
  %v4670 = vmul.f32 %v4606, 3.0
  %v4671 = vmul.f32 %v4607, 3.0
  %v4672 = vmul.f32 %v4608, 3.0
  %v4673 = vmul.f32 %v4609, 3.0
  %v4674 = vmul.f32 %v4610, 3.0
  %v4675 = vmul.f32 %v4611, 3.0
  %v4676 = vmul.f32 %v4612, 3.0
  %v4677 = vmul.f32 %v4613, 3.0
  %v4678 = vadd.f32 %v4526, %v4670
  %v4679 = vadd.f32 %v4527, %v4671
  %v4680 = vadd.f32 %v4528, %v4672
  %v4681 = vadd.f32 %v4529, %v4673
  %v4682 = vadd.f32 %v4530, %v4674
  %v4683 = vadd.f32 %v4531, %v4675
  %v4684 = vadd.f32 %v4532, %v4676
  %v4685 = vadd.f32 %v4533, %v4677
  %4694 = vrot.lane.b32.xlu0 %v4678, 3
  %v4695 = vpop.permute.xlu0 %4694
  %4696 = vrot.lane.b32.xlu0 %v4679, 3
  %v4697 = vpop.permute.xlu0 %4696
  %4698 = vrot.lane.b32.xlu0 %v4680, 3
  %v4699 = vpop.permute.xlu0 %4698
  %4700 = vrot.lane.b32.xlu0 %v4681, 3
  %v4701 = vpop.permute.xlu0 %4700
  %4702 = vrot.lane.b32.xlu0 %v4682, 3
  %v4703 = vpop.permute.xlu0 %4702
  %4704 = vrot.lane.b32.xlu0 %v4683, 3
  %v4705 = vpop.permute.xlu0 %4704
  %4706 = vrot.lane.b32.xlu0 %v4684, 3
  %v4707 = vpop.permute.xlu0 %4706
  %4708 = vrot.lane.b32.xlu0 %v4685, 3
  %v4709 = vpop.permute.xlu0 %4708
  %vm4718 = vcmask 23552
  %v4719 = vsel %vm4718, %v4662, %v4695
  %v4720 = vsel %vm4718, %v4663, %v4697
  %v4721 = vsel %vm4718, %v4664, %v4699
  %v4722 = vsel %vm4718, %v4665, %v4701
  %v4723 = vsel %vm4718, %v4666, %v4703
  %v4724 = vsel %vm4718, %v4667, %v4705
  %v4725 = vsel %vm4718, %v4668, %v4707
  %v4726 = vsel %vm4718, %v4669, %v4709
  %vm4727 = vcmask 31744
  %4728 = vst.msk [vmem:[%s9] sm:$0xff] %vm4727, %v4719
  %4729 = vst.msk [vmem:[%s9 + $0x8] sm:$0xff] %vm4727, %v4720
  %4730 = vst.msk [vmem:[%s9 + $0x10] sm:$0xff] %vm4727, %v4721
  %4731 = vst.msk [vmem:[%s9 + $0x18] sm:$0xff] %vm4727, %v4722
  %4732 = vst.msk [vmem:[%s9 + $0x20] sm:$0xff] %vm4727, %v4723
  %4733 = vst.msk [vmem:[%s9 + $0x28] sm:$0xff] %vm4727, %v4724
  %4734 = vst.msk [vmem:[%s9 + $0x30] sm:$0xff] %vm4727, %v4725
  %4735 = vst.msk [vmem:[%s9 + $0x38] sm:$0xff] %vm4727, %v4726
  // Predicated region
  $region38: #{render.1} parent=0 // pred_check
    _
  $region39: #{render.1} parent=0 // pred_check_branch
    %4737 = sbr.rel (0) target = $region41
  $region40: #{render.1} parent=0 // pred_region
    _
  $region41: #{render.1} parent=0 // pred_fallthru
    _
  // Predicated region
  $region42: #{render.1} parent=0 // pred_check
    _
  $region43: #{render.1} parent=0 // pred_check_branch
    %4739 = sbr.rel (0) target = $region45
  $region44: #{render.1} parent=0 // pred_region
    _
  $region45: #{render.1} parent=0 // pred_fallthru
    _

</llo_original>
